<compile_context>
chip_gen: v7x
topology: tpu7x:2x2x1
jax: 0.10.0
libtpu: 0.0.40
codegen_flags: <defaults>
</compile_context>

<pallas_src>
import jax
import jax.numpy as jnp
from jax.experimental import pallas as pl
from jax.experimental.pallas import tpu as pltpu

HIDDEN = 100          # logical feature width (as in the PyTorch module)
HPAD = 128            # lane/sublane-padded feature width used inside the kernel
N_MID_LAYERS = 4      # hidden2 .. hidden5
BN_EPS = 1e-5
PC_COLS = 16          # packed per-feature param columns (12 used, padded to 16)


# ----------------------------- Pallas kernel ------------------------------ #

def sine_mlp_kernel(x_ref, wmid_ref, pc_ref, wo_ref, o_ref, a_ref, b_ref):
    # x_ref:    (1, N)          lane-dense input (batch on lanes)
    # wmid_ref: (4, HPAD, HPAD) hidden2..5 weights, PyTorch (out, in) layout
    # pc_ref:   (HPAD, PC_COLS) packed per-feature params (see pack_params)
    # wo_ref:   (8, HPAD)       output weights in row 0, rows 1..7 zero
    # o_ref:    (1, N)          lane-dense output
    # a_ref/b_ref: (HPAD, N)    ping-pong activation scratch (f32)
    n = x_ref.shape[1]
    inv_n = 1.0 / n

    def bn_relu_inplace(h_ref, gamma, beta):
        # Training-mode BatchNorm1d (biased variance, eps=1e-5) + ReLU, fused
        # and applied in place.  Centered two-pass variance for accuracy.
        h = h_ref[...]                                          # (HPAD, N)
        mean = jnp.sum(h, axis=1, keepdims=True) * inv_n        # (HPAD, 1)
        hc = h - mean
        var = jnp.sum(hc * hc, axis=1, keepdims=True) * inv_n   # (HPAD, 1)
        scale = gamma * jax.lax.rsqrt(var + BN_EPS)             # EUP rsqrt
        h_ref[...] = jnp.maximum(hc * scale + beta, 0.0)        # single store

    # Layer 1: Linear(1, H) in transposed layout == outer product (VPU only).
    # Bias dropped: BN's mean subtraction cancels it exactly.
    a_ref[...] = pc_ref[:, 0:1] * x_ref[...]                    # (HPAD, N)
    bn_relu_inplace(a_ref, pc_ref[:, 1:2], pc_ref[:, 6:7])

    # Layers 2..5: Linear(H, H) on the MXU + fused BN + ReLU (biases dropped).
    src, dst = a_ref, b_ref
    for i in range(N_MID_LAYERS):                               # static unroll
        dst[...] = jnp.dot(wmid_ref[i], src[...],
                           preferred_element_type=jnp.float32)
        bn_relu_inplace(dst, pc_ref[:, 2 + i:3 + i], pc_ref[:, 7 + i:8 + i])
        src, dst = dst, src

    # Output Linear(H, 1) on the MXU: (8, HPAD) @ (HPAD, N); only row 0 real.
    out8 = jnp.dot(wo_ref[...], src[...], preferred_element_type=jnp.float32)
    o_ref[...] = out8[0:1, :] + pc_ref[0:1, 11:12]


# ------------------------------- wrapper ----------------------------------- #

def sine_approximator(x, wmid, pcols, wo_row):
    """x: (N, 1) float32 -> (N, 1) float32, matching SineApproximator.forward
    in training mode (BatchNorm uses batch statistics)."""
    n = x.shape[0]
    x_lane = x.reshape(1, n)                       # lane-dense kernel input

    # Honest VMEM accounting: 2 ping-pong activations + ~3 live temporaries,
    # sublane-padded (1,N) I/O tiles (8 sublanes each), fixed params, margin.
    n_lanes = max(((n + 127) // 128) * 128, 128)
    act_bytes = HPAD * n_lanes * 4
    io_bytes = 2 * 8 * n_lanes * 4
    fixed_bytes = (4 * HPAD * HPAD + HPAD * HPAD + 8 * HPAD) * 4
    need = 5 * act_bytes + io_bytes + fixed_bytes + (2 << 20)

    try:
        vmem_cap = int(pltpu.get_tpu_info().vmem_capacity_bytes)
    except Exception:
        vmem_cap = 128 << 20                       # conservative fallback
    # ~48 MiB on 64-MiB v7x parts, ~96 MiB on 128-MiB v5e/v6e parts.
    vmem_limit = int(max(16 << 20, min(need, (vmem_cap * 3) // 4)))

    vmem = pl.BlockSpec(memory_space=pltpu.MemorySpace.VMEM)
    out = pl.pallas_call(
        sine_mlp_kernel,
        out_shape=jax.ShapeDtypeStruct((1, n), jnp.float32),
        in_specs=[vmem, vmem, vmem, vmem],
        out_specs=vmem,
        scratch_shapes=[pltpu.VMEM((HPAD, n), jnp.float32),
                        pltpu.VMEM((HPAD, n), jnp.float32)],
        compiler_params=pltpu.CompilerParams(vmem_limit_bytes=vmem_limit),
    )(x_lane, wmid, pcols, wo_row)
    return out.reshape(n, 1)


# --------------------------- params (PyTorch-like) -------------------------- #

def init_params(key):
    """Raw parameters in PyTorch layout/defaults:
    Linear: weight (out, in) ~ U(-1/sqrt(fan_in), 1/sqrt(fan_in)), bias same;
    BatchNorm1d: gamma=1, beta=0 (fresh module, training mode)."""
    ks = jax.random.split(key, 6)

    def lin(k, fan_in, fan_out):
        bound = float(fan_in) ** -0.5
        kw, kb = jax.random.split(k)
        w = jax.random.uniform(kw, (fan_out, fan_in), jnp.float32, -bound, bound)
        b = jax.random.uniform(kb, (fan_out,), jnp.float32, -bound, bound)
        return w, b

    linears = [lin(ks[0], 1, HIDDEN)]                        # hidden
    for i in range(N_MID_LAYERS):                            # hidden2..hidden5
        linears.append(lin(ks[1 + i], HIDDEN, HIDDEN))
    linears.append(lin(ks[5], HIDDEN, 1))                    # output
    bns = [(jnp.ones((HIDDEN,), jnp.float32),
            jnp.zeros((HIDDEN,), jnp.float32)) for _ in range(5)]
    return linears, bns


def pack_params(linears, bns):
    """Pad to HPAD features and pack into three kernel inputs:
       wmid   (4, HPAD, HPAD): hidden2..5 weights, (out,in) layout, zero-padded
       pcols  (HPAD, PC_COLS): col 0 = w1; cols 1..5 = gamma1..5;
                               cols 6..10 = beta1..5; col 11 = output bias
       wo_row (8, HPAD):       output weights in row 0, elsewhere zero.
    Pre-BN biases b1..b5 are NOT shipped: training-mode BN cancels them."""
    pad = HPAD - HIDDEN

    def col(v):                                   # (HIDDEN,) -> (HPAD,)
        return jnp.pad(v, (0, pad))

    w1, _ = linears[0]                            # (HIDDEN, 1)
    wo, bo = linears[5]                           # (1, HIDDEN), (1,)

    cols = [col(w1[:, 0])]
    cols += [col(bns[i][0]) for i in range(5)]    # gammas (BN1..BN5)
    cols += [col(bns[i][1]) for i in range(5)]    # betas  (BN1..BN5)
    cols.append(jnp.full((HPAD,), bo[0], jnp.float32))     # output bias
    pcols = jnp.stack(cols, axis=1)                         # (HPAD, 12)
    pcols = jnp.pad(pcols, ((0, 0), (0, PC_COLS - pcols.shape[1])))

    wmid = jnp.stack([jnp.pad(linears[1 + i][0], ((0, pad), (0, pad)))
                      for i in range(N_MID_LAYERS)])        # (4, HPAD, HPAD)

    wo_row = jnp.zeros((8, HPAD), jnp.float32).at[0, :HIDDEN].set(wo[0, :])
    return wmid, pcols, wo_row


# ------------------------------ reference ---------------------------------- #

def reference_forward(x, linears, bns):
    """Plain-JAX forward with exact PyTorch training-mode semantics.
    HIGHEST precision so the TPU reference matmuls are f32-accurate (XLA's
    DEFAULT bf16-pass matmul was the source of the previous mismatch)."""
    hp = jax.lax.Precision.HIGHEST
    h = x
    for i in range(5):
        w, b = linears[i]
        h = jnp.dot(h, w.T, precision=hp) + b
        g, be = bns[i]
        mean = jnp.mean(h, axis=0, keepdims=True)
        var = jnp.mean(jnp.square(h - mean), axis=0, keepdims=True)
        h = jnp.maximum((h - mean) * jax.lax.rsqrt(var + BN_EPS) * g + be, 0.0)
    w, b = linears[5]
    return jnp.dot(h, w.T, precision=hp) + b


if __name__ == "__main__":
    key = jax.random.PRNGKey(0)
    kx, kp = jax.random.split(key)

    batch = 8
    x = jax.random.uniform(kx, (batch, 1), jnp.float32, -jnp.pi, jnp.pi)

    linears, bns = init_params(kp)
    wmid, pcols, wo_row = pack_params(linears, bns)

    out = sine_approximator(x, wmid, pcols, wo_row)
    out = jax.block_until_ready(out)

    ref = reference_forward(x, linears, bns)
    assert out.shape == (batch, 1)
    max_err = float(jnp.max(jnp.abs(out - ref)))
    assert jnp.allclose(out, ref, atol=2e-3, rtol=2e-3), max_err

    print("KERNEL_OK")
</pallas_src>

<mosaic_0001>
module attributes {stable_mosaic.version = 11 : i64} {
  func.func @sine_mlp_kernel(%arg0: memref<1x8xf32, #tpu.memory_space<vmem>>, %arg1: memref<4x128x128xf32, #tpu.memory_space<vmem>>, %arg2: memref<128x16xf32, #tpu.memory_space<vmem>>, %arg3: memref<8x128xf32, #tpu.memory_space<vmem>>, %arg4: memref<1x8xf32, #tpu.memory_space<vmem>>, %arg5: memref<128x8xf32, #tpu.memory_space<vmem>>, %arg6: memref<128x8xf32, #tpu.memory_space<vmem>>) attributes {dimension_semantics = [], scalar_prefetch = 0 : i64, scratch_operands = 2 : i64, tpu.core_type = #tpu.core_type<tc>} {
    %c0 = arith.constant 0 : index
    %c0_0 = arith.constant 0 : index
    %0 = vector.load %arg2[%c0, %c0_0] : memref<128x16xf32, #tpu.memory_space<vmem>>, vector<128x1xf32>
    %c0_1 = arith.constant 0 : index
    %c0_2 = arith.constant 0 : index
    %1 = vector.load %arg0[%c0_1, %c0_2] : memref<1x8xf32, #tpu.memory_space<vmem>>, vector<1x8xf32>
    %2 = vector.broadcast %0 : vector<128x1xf32> to vector<128x8xf32>
    %3 = vector.broadcast %1 : vector<1x8xf32> to vector<128x8xf32>
    %4 = arith.mulf %2, %3 : vector<128x8xf32>
    %c0_3 = arith.constant 0 : index
    %c0_4 = arith.constant 0 : index
    %5 = vector.load %arg5[%c0_3, %c0_4] : memref<128x8xf32, #tpu.memory_space<vmem>>, vector<128x8xf32>
    tpu.vector_store %arg5[%c0_3, %c0_4], %4 {strides = array<i32>} : memref<128x8xf32, #tpu.memory_space<vmem>>, vector<128x8xf32>,
    %c0_5 = arith.constant 0 : index
    %c1 = arith.constant 1 : index
    %6 = vector.load %arg2[%c0_5, %c1] : memref<128x16xf32, #tpu.memory_space<vmem>>, vector<128x1xf32>
    %c0_6 = arith.constant 0 : index
    %c6 = arith.constant 6 : index
    %7 = vector.load %arg2[%c0_6, %c6] : memref<128x16xf32, #tpu.memory_space<vmem>>, vector<128x1xf32>
    %c0_7 = arith.constant 0 : index
    %c0_8 = arith.constant 0 : index
    %8 = vector.load %arg5[%c0_7, %c0_8] : memref<128x8xf32, #tpu.memory_space<vmem>>, vector<128x8xf32>
    %cst = arith.constant dense<0.000000e+00> : vector<128xf32>
    %9 = vector.multi_reduction <add>, %8, %cst [1] : vector<128x8xf32> to vector<128xf32>
    %10 = vector.shape_cast %9 : vector<128xf32> to vector<128x1xf32>
    %cst_9 = arith.constant 1.250000e-01 : f32
    %11 = vector.broadcast %cst_9 : f32 to vector<128x1xf32>
    %12 = arith.mulf %10, %11 : vector<128x1xf32>
    %13 = vector.broadcast %12 : vector<128x1xf32> to vector<128x8xf32>
    %14 = arith.subf %8, %13 : vector<128x8xf32>
    %15 = arith.mulf %14, %14 : vector<128x8xf32>
    %cst_10 = arith.constant dense<0.000000e+00> : vector<128xf32>
    %16 = vector.multi_reduction <add>, %15, %cst_10 [1] : vector<128x8xf32> to vector<128xf32>
    %17 = vector.shape_cast %16 : vector<128xf32> to vector<128x1xf32>
    %cst_11 = arith.constant 1.250000e-01 : f32
    %18 = vector.broadcast %cst_11 : f32 to vector<128x1xf32>
    %19 = arith.mulf %17, %18 : vector<128x1xf32>
    %cst_12 = arith.constant 9.99999974E-6 : f32
    %20 = vector.broadcast %cst_12 : f32 to vector<128x1xf32>
    %21 = arith.addf %19, %20 : vector<128x1xf32>
    %22 = math.rsqrt %21 : vector<128x1xf32>
    %23 = arith.mulf %6, %22 : vector<128x1xf32>
    %24 = vector.broadcast %23 : vector<128x1xf32> to vector<128x8xf32>
    %25 = arith.mulf %14, %24 : vector<128x8xf32>
    %26 = vector.broadcast %7 : vector<128x1xf32> to vector<128x8xf32>
    %27 = arith.addf %25, %26 : vector<128x8xf32>
    %cst_13 = arith.constant 0.000000e+00 : f32
    %28 = vector.broadcast %cst_13 : f32 to vector<128x8xf32>
    %29 = arith.maximumf %27, %28 : vector<128x8xf32>
    %c0_14 = arith.constant 0 : index
    %c0_15 = arith.constant 0 : index
    %30 = vector.load %arg5[%c0_14, %c0_15] : memref<128x8xf32, #tpu.memory_space<vmem>>, vector<128x8xf32>
    tpu.vector_store %arg5[%c0_14, %c0_15], %29 {strides = array<i32>} : memref<128x8xf32, #tpu.memory_space<vmem>>, vector<128x8xf32>,
    %c0_16 = arith.constant 0 : index
    %c0_17 = arith.constant 0 : index
    %c0_18 = arith.constant 0 : index
    %31 = vector.load %arg1[%c0_16, %c0_17, %c0_18] : memref<4x128x128xf32, #tpu.memory_space<vmem>>, vector<1x128x128xf32>
    %32 = vector.shape_cast %31 : vector<1x128x128xf32> to vector<128x128xf32>
    %c0_19 = arith.constant 0 : index
    %c0_20 = arith.constant 0 : index
    %33 = vector.load %arg5[%c0_19, %c0_20] : memref<128x8xf32, #tpu.memory_space<vmem>>, vector<128x8xf32>
    %cst_21 = arith.constant dense<0.000000e+00> : vector<128x8xf32>
    %34 = tpu.matmul %32, %33, %cst_21 {dimension_numbers = #tpu.dot_dimension_numbers<[1], [0], [0], [1], [0, 0, 1, 1], [], []>} : vector<128x128xf32>, vector<128x8xf32>, vector<128x8xf32> -> vector<128x8xf32>
    %c0_22 = arith.constant 0 : index
    %c0_23 = arith.constant 0 : index
    %35 = vector.load %arg6[%c0_22, %c0_23] : memref<128x8xf32, #tpu.memory_space<vmem>>, vector<128x8xf32>
    tpu.vector_store %arg6[%c0_22, %c0_23], %34 {strides = array<i32>} : memref<128x8xf32, #tpu.memory_space<vmem>>, vector<128x8xf32>,
    %c0_24 = arith.constant 0 : index
    %c2 = arith.constant 2 : index
    %36 = vector.load %arg2[%c0_24, %c2] : memref<128x16xf32, #tpu.memory_space<vmem>>, vector<128x1xf32>
    %c0_25 = arith.constant 0 : index
    %c7 = arith.constant 7 : index
    %37 = vector.load %arg2[%c0_25, %c7] : memref<128x16xf32, #tpu.memory_space<vmem>>, vector<128x1xf32>
    %c0_26 = arith.constant 0 : index
    %c0_27 = arith.constant 0 : index
    %38 = vector.load %arg6[%c0_26, %c0_27] : memref<128x8xf32, #tpu.memory_space<vmem>>, vector<128x8xf32>
    %cst_28 = arith.constant dense<0.000000e+00> : vector<128xf32>
    %39 = vector.multi_reduction <add>, %38, %cst_28 [1] : vector<128x8xf32> to vector<128xf32>
    %40 = vector.shape_cast %39 : vector<128xf32> to vector<128x1xf32>
    %cst_29 = arith.constant 1.250000e-01 : f32
    %41 = vector.broadcast %cst_29 : f32 to vector<128x1xf32>
    %42 = arith.mulf %40, %41 : vector<128x1xf32>
    %43 = vector.broadcast %42 : vector<128x1xf32> to vector<128x8xf32>
    %44 = arith.subf %38, %43 : vector<128x8xf32>
    %45 = arith.mulf %44, %44 : vector<128x8xf32>
    %cst_30 = arith.constant dense<0.000000e+00> : vector<128xf32>
    %46 = vector.multi_reduction <add>, %45, %cst_30 [1] : vector<128x8xf32> to vector<128xf32>
    %47 = vector.shape_cast %46 : vector<128xf32> to vector<128x1xf32>
    %cst_31 = arith.constant 1.250000e-01 : f32
    %48 = vector.broadcast %cst_31 : f32 to vector<128x1xf32>
    %49 = arith.mulf %47, %48 : vector<128x1xf32>
    %cst_32 = arith.constant 9.99999974E-6 : f32
    %50 = vector.broadcast %cst_32 : f32 to vector<128x1xf32>
    %51 = arith.addf %49, %50 : vector<128x1xf32>
    %52 = math.rsqrt %51 : vector<128x1xf32>
    %53 = arith.mulf %36, %52 : vector<128x1xf32>
    %54 = vector.broadcast %53 : vector<128x1xf32> to vector<128x8xf32>
    %55 = arith.mulf %44, %54 : vector<128x8xf32>
    %56 = vector.broadcast %37 : vector<128x1xf32> to vector<128x8xf32>
    %57 = arith.addf %55, %56 : vector<128x8xf32>
    %cst_33 = arith.constant 0.000000e+00 : f32
    %58 = vector.broadcast %cst_33 : f32 to vector<128x8xf32>
    %59 = arith.maximumf %57, %58 : vector<128x8xf32>
    %c0_34 = arith.constant 0 : index
    %c0_35 = arith.constant 0 : index
    %60 = vector.load %arg6[%c0_34, %c0_35] : memref<128x8xf32, #tpu.memory_space<vmem>>, vector<128x8xf32>
    tpu.vector_store %arg6[%c0_34, %c0_35], %59 {strides = array<i32>} : memref<128x8xf32, #tpu.memory_space<vmem>>, vector<128x8xf32>,
    %c1_36 = arith.constant 1 : index
    %c0_37 = arith.constant 0 : index
    %c0_38 = arith.constant 0 : index
    %61 = vector.load %arg1[%c1_36, %c0_37, %c0_38] : memref<4x128x128xf32, #tpu.memory_space<vmem>>, vector<1x128x128xf32>
    %62 = vector.shape_cast %61 : vector<1x128x128xf32> to vector<128x128xf32>
    %c0_39 = arith.constant 0 : index
    %c0_40 = arith.constant 0 : index
    %63 = vector.load %arg6[%c0_39, %c0_40] : memref<128x8xf32, #tpu.memory_space<vmem>>, vector<128x8xf32>
    %cst_41 = arith.constant dense<0.000000e+00> : vector<128x8xf32>
    %64 = tpu.matmul %62, %63, %cst_41 {dimension_numbers = #tpu.dot_dimension_numbers<[1], [0], [0], [1], [0, 0, 1, 1], [], []>} : vector<128x128xf32>, vector<128x8xf32>, vector<128x8xf32> -> vector<128x8xf32>
    %c0_42 = arith.constant 0 : index
    %c0_43 = arith.constant 0 : index
    %65 = vector.load %arg5[%c0_42, %c0_43] : memref<128x8xf32, #tpu.memory_space<vmem>>, vector<128x8xf32>
    tpu.vector_store %arg5[%c0_42, %c0_43], %64 {strides = array<i32>} : memref<128x8xf32, #tpu.memory_space<vmem>>, vector<128x8xf32>,
    %c0_44 = arith.constant 0 : index
    %c3 = arith.constant 3 : index
    %66 = vector.load %arg2[%c0_44, %c3] : memref<128x16xf32, #tpu.memory_space<vmem>>, vector<128x1xf32>
    %c0_45 = arith.constant 0 : index
    %c8 = arith.constant 8 : index
    %67 = vector.load %arg2[%c0_45, %c8] : memref<128x16xf32, #tpu.memory_space<vmem>>, vector<128x1xf32>
    %c0_46 = arith.constant 0 : index
    %c0_47 = arith.constant 0 : index
    %68 = vector.load %arg5[%c0_46, %c0_47] : memref<128x8xf32, #tpu.memory_space<vmem>>, vector<128x8xf32>
    %cst_48 = arith.constant dense<0.000000e+00> : vector<128xf32>
    %69 = vector.multi_reduction <add>, %68, %cst_48 [1] : vector<128x8xf32> to vector<128xf32>
    %70 = vector.shape_cast %69 : vector<128xf32> to vector<128x1xf32>
    %cst_49 = arith.constant 1.250000e-01 : f32
    %71 = vector.broadcast %cst_49 : f32 to vector<128x1xf32>
    %72 = arith.mulf %70, %71 : vector<128x1xf32>
    %73 = vector.broadcast %72 : vector<128x1xf32> to vector<128x8xf32>
    %74 = arith.subf %68, %73 : vector<128x8xf32>
    %75 = arith.mulf %74, %74 : vector<128x8xf32>
    %cst_50 = arith.constant dense<0.000000e+00> : vector<128xf32>
    %76 = vector.multi_reduction <add>, %75, %cst_50 [1] : vector<128x8xf32> to vector<128xf32>
    %77 = vector.shape_cast %76 : vector<128xf32> to vector<128x1xf32>
    %cst_51 = arith.constant 1.250000e-01 : f32
    %78 = vector.broadcast %cst_51 : f32 to vector<128x1xf32>
    %79 = arith.mulf %77, %78 : vector<128x1xf32>
    %cst_52 = arith.constant 9.99999974E-6 : f32
    %80 = vector.broadcast %cst_52 : f32 to vector<128x1xf32>
    %81 = arith.addf %79, %80 : vector<128x1xf32>
    %82 = math.rsqrt %81 : vector<128x1xf32>
    %83 = arith.mulf %66, %82 : vector<128x1xf32>
    %84 = vector.broadcast %83 : vector<128x1xf32> to vector<128x8xf32>
    %85 = arith.mulf %74, %84 : vector<128x8xf32>
    %86 = vector.broadcast %67 : vector<128x1xf32> to vector<128x8xf32>
    %87 = arith.addf %85, %86 : vector<128x8xf32>
    %cst_53 = arith.constant 0.000000e+00 : f32
    %88 = vector.broadcast %cst_53 : f32 to vector<128x8xf32>
    %89 = arith.maximumf %87, %88 : vector<128x8xf32>
    %c0_54 = arith.constant 0 : index
    %c0_55 = arith.constant 0 : index
    %90 = vector.load %arg5[%c0_54, %c0_55] : memref<128x8xf32, #tpu.memory_space<vmem>>, vector<128x8xf32>
    tpu.vector_store %arg5[%c0_54, %c0_55], %89 {strides = array<i32>} : memref<128x8xf32, #tpu.memory_space<vmem>>, vector<128x8xf32>,
    %c2_56 = arith.constant 2 : index
    %c0_57 = arith.constant 0 : index
    %c0_58 = arith.constant 0 : index
    %91 = vector.load %arg1[%c2_56, %c0_57, %c0_58] : memref<4x128x128xf32, #tpu.memory_space<vmem>>, vector<1x128x128xf32>
    %92 = vector.shape_cast %91 : vector<1x128x128xf32> to vector<128x128xf32>
    %c0_59 = arith.constant 0 : index
    %c0_60 = arith.constant 0 : index
    %93 = vector.load %arg5[%c0_59, %c0_60] : memref<128x8xf32, #tpu.memory_space<vmem>>, vector<128x8xf32>
    %cst_61 = arith.constant dense<0.000000e+00> : vector<128x8xf32>
    %94 = tpu.matmul %92, %93, %cst_61 {dimension_numbers = #tpu.dot_dimension_numbers<[1], [0], [0], [1], [0, 0, 1, 1], [], []>} : vector<128x128xf32>, vector<128x8xf32>, vector<128x8xf32> -> vector<128x8xf32>
    %c0_62 = arith.constant 0 : index
    %c0_63 = arith.constant 0 : index
    %95 = vector.load %arg6[%c0_62, %c0_63] : memref<128x8xf32, #tpu.memory_space<vmem>>, vector<128x8xf32>
    tpu.vector_store %arg6[%c0_62, %c0_63], %94 {strides = array<i32>} : memref<128x8xf32, #tpu.memory_space<vmem>>, vector<128x8xf32>,
    %c0_64 = arith.constant 0 : index
    %c4 = arith.constant 4 : index
    %96 = vector.load %arg2[%c0_64, %c4] : memref<128x16xf32, #tpu.memory_space<vmem>>, vector<128x1xf32>
    %c0_65 = arith.constant 0 : index
    %c9 = arith.constant 9 : index
    %97 = vector.load %arg2[%c0_65, %c9] : memref<128x16xf32, #tpu.memory_space<vmem>>, vector<128x1xf32>
    %c0_66 = arith.constant 0 : index
    %c0_67 = arith.constant 0 : index
    %98 = vector.load %arg6[%c0_66, %c0_67] : memref<128x8xf32, #tpu.memory_space<vmem>>, vector<128x8xf32>
    %cst_68 = arith.constant dense<0.000000e+00> : vector<128xf32>
    %99 = vector.multi_reduction <add>, %98, %cst_68 [1] : vector<128x8xf32> to vector<128xf32>
    %100 = vector.shape_cast %99 : vector<128xf32> to vector<128x1xf32>
    %cst_69 = arith.constant 1.250000e-01 : f32
    %101 = vector.broadcast %cst_69 : f32 to vector<128x1xf32>
    %102 = arith.mulf %100, %101 : vector<128x1xf32>
    %103 = vector.broadcast %102 : vector<128x1xf32> to vector<128x8xf32>
    %104 = arith.subf %98, %103 : vector<128x8xf32>
    %105 = arith.mulf %104, %104 : vector<128x8xf32>
    %cst_70 = arith.constant dense<0.000000e+00> : vector<128xf32>
    %106 = vector.multi_reduction <add>, %105, %cst_70 [1] : vector<128x8xf32> to vector<128xf32>
    %107 = vector.shape_cast %106 : vector<128xf32> to vector<128x1xf32>
    %cst_71 = arith.constant 1.250000e-01 : f32
    %108 = vector.broadcast %cst_71 : f32 to vector<128x1xf32>
    %109 = arith.mulf %107, %108 : vector<128x1xf32>
    %cst_72 = arith.constant 9.99999974E-6 : f32
    %110 = vector.broadcast %cst_72 : f32 to vector<128x1xf32>
    %111 = arith.addf %109, %110 : vector<128x1xf32>
    %112 = math.rsqrt %111 : vector<128x1xf32>
    %113 = arith.mulf %96, %112 : vector<128x1xf32>
    %114 = vector.broadcast %113 : vector<128x1xf32> to vector<128x8xf32>
    %115 = arith.mulf %104, %114 : vector<128x8xf32>
    %116 = vector.broadcast %97 : vector<128x1xf32> to vector<128x8xf32>
    %117 = arith.addf %115, %116 : vector<128x8xf32>
    %cst_73 = arith.constant 0.000000e+00 : f32
    %118 = vector.broadcast %cst_73 : f32 to vector<128x8xf32>
    %119 = arith.maximumf %117, %118 : vector<128x8xf32>
    %c0_74 = arith.constant 0 : index
    %c0_75 = arith.constant 0 : index
    %120 = vector.load %arg6[%c0_74, %c0_75] : memref<128x8xf32, #tpu.memory_space<vmem>>, vector<128x8xf32>
    tpu.vector_store %arg6[%c0_74, %c0_75], %119 {strides = array<i32>} : memref<128x8xf32, #tpu.memory_space<vmem>>, vector<128x8xf32>,
    %c3_76 = arith.constant 3 : index
    %c0_77 = arith.constant 0 : index
    %c0_78 = arith.constant 0 : index
    %121 = vector.load %arg1[%c3_76, %c0_77, %c0_78] : memref<4x128x128xf32, #tpu.memory_space<vmem>>, vector<1x128x128xf32>
    %122 = vector.shape_cast %121 : vector<1x128x128xf32> to vector<128x128xf32>
    %c0_79 = arith.constant 0 : index
    %c0_80 = arith.constant 0 : index
    %123 = vector.load %arg6[%c0_79, %c0_80] : memref<128x8xf32, #tpu.memory_space<vmem>>, vector<128x8xf32>
    %cst_81 = arith.constant dense<0.000000e+00> : vector<128x8xf32>
    %124 = tpu.matmul %122, %123, %cst_81 {dimension_numbers = #tpu.dot_dimension_numbers<[1], [0], [0], [1], [0, 0, 1, 1], [], []>} : vector<128x128xf32>, vector<128x8xf32>, vector<128x8xf32> -> vector<128x8xf32>
    %c0_82 = arith.constant 0 : index
    %c0_83 = arith.constant 0 : index
    %125 = vector.load %arg5[%c0_82, %c0_83] : memref<128x8xf32, #tpu.memory_space<vmem>>, vector<128x8xf32>
    tpu.vector_store %arg5[%c0_82, %c0_83], %124 {strides = array<i32>} : memref<128x8xf32, #tpu.memory_space<vmem>>, vector<128x8xf32>,
    %c0_84 = arith.constant 0 : index
    %c5 = arith.constant 5 : index
    %126 = vector.load %arg2[%c0_84, %c5] : memref<128x16xf32, #tpu.memory_space<vmem>>, vector<128x1xf32>
    %c0_85 = arith.constant 0 : index
    %c10 = arith.constant 10 : index
    %127 = vector.load %arg2[%c0_85, %c10] : memref<128x16xf32, #tpu.memory_space<vmem>>, vector<128x1xf32>
    %c0_86 = arith.constant 0 : index
    %c0_87 = arith.constant 0 : index
    %128 = vector.load %arg5[%c0_86, %c0_87] : memref<128x8xf32, #tpu.memory_space<vmem>>, vector<128x8xf32>
    %cst_88 = arith.constant dense<0.000000e+00> : vector<128xf32>
    %129 = vector.multi_reduction <add>, %128, %cst_88 [1] : vector<128x8xf32> to vector<128xf32>
    %130 = vector.shape_cast %129 : vector<128xf32> to vector<128x1xf32>
    %cst_89 = arith.constant 1.250000e-01 : f32
    %131 = vector.broadcast %cst_89 : f32 to vector<128x1xf32>
    %132 = arith.mulf %130, %131 : vector<128x1xf32>
    %133 = vector.broadcast %132 : vector<128x1xf32> to vector<128x8xf32>
    %134 = arith.subf %128, %133 : vector<128x8xf32>
    %135 = arith.mulf %134, %134 : vector<128x8xf32>
    %cst_90 = arith.constant dense<0.000000e+00> : vector<128xf32>
    %136 = vector.multi_reduction <add>, %135, %cst_90 [1] : vector<128x8xf32> to vector<128xf32>
    %137 = vector.shape_cast %136 : vector<128xf32> to vector<128x1xf32>
    %cst_91 = arith.constant 1.250000e-01 : f32
    %138 = vector.broadcast %cst_91 : f32 to vector<128x1xf32>
    %139 = arith.mulf %137, %138 : vector<128x1xf32>
    %cst_92 = arith.constant 9.99999974E-6 : f32
    %140 = vector.broadcast %cst_92 : f32 to vector<128x1xf32>
    %141 = arith.addf %139, %140 : vector<128x1xf32>
    %142 = math.rsqrt %141 : vector<128x1xf32>
    %143 = arith.mulf %126, %142 : vector<128x1xf32>
    %144 = vector.broadcast %143 : vector<128x1xf32> to vector<128x8xf32>
    %145 = arith.mulf %134, %144 : vector<128x8xf32>
    %146 = vector.broadcast %127 : vector<128x1xf32> to vector<128x8xf32>
    %147 = arith.addf %145, %146 : vector<128x8xf32>
    %cst_93 = arith.constant 0.000000e+00 : f32
    %148 = vector.broadcast %cst_93 : f32 to vector<128x8xf32>
    %149 = arith.maximumf %147, %148 : vector<128x8xf32>
    %c0_94 = arith.constant 0 : index
    %c0_95 = arith.constant 0 : index
    %150 = vector.load %arg5[%c0_94, %c0_95] : memref<128x8xf32, #tpu.memory_space<vmem>>, vector<128x8xf32>
    tpu.vector_store %arg5[%c0_94, %c0_95], %149 {strides = array<i32>} : memref<128x8xf32, #tpu.memory_space<vmem>>, vector<128x8xf32>,
    %c0_96 = arith.constant 0 : index
    %c0_97 = arith.constant 0 : index
    %151 = vector.load %arg3[%c0_96, %c0_97] : memref<8x128xf32, #tpu.memory_space<vmem>>, vector<8x128xf32>
    %c0_98 = arith.constant 0 : index
    %c0_99 = arith.constant 0 : index
    %152 = vector.load %arg5[%c0_98, %c0_99] : memref<128x8xf32, #tpu.memory_space<vmem>>, vector<128x8xf32>
    %cst_100 = arith.constant dense<0.000000e+00> : vector<8x8xf32>
    %153 = tpu.matmul %151, %152, %cst_100 {dimension_numbers = #tpu.dot_dimension_numbers<[1], [0], [0], [1], [0, 0, 1, 1], [], []>} : vector<8x128xf32>, vector<128x8xf32>, vector<8x8xf32> -> vector<8x8xf32>
    %154 = vector.extract_strided_slice %153 {offsets = [0, 0], sizes = [1, 8], strides = [1, 1]} : vector<8x8xf32> to vector<1x8xf32>
    %c0_101 = arith.constant 0 : index
    %c11 = arith.constant 11 : index
    %155 = vector.load %arg2[%c0_101, %c11] : memref<128x16xf32, #tpu.memory_space<vmem>>, vector<1x1xf32>
    %156 = vector.broadcast %155 : vector<1x1xf32> to vector<1x8xf32>
    %157 = arith.addf %154, %156 : vector<1x8xf32>
    %c0_102 = arith.constant 0 : index
    %c0_103 = arith.constant 0 : index
    %158 = vector.load %arg4[%c0_102, %c0_103] : memref<1x8xf32, #tpu.memory_space<vmem>>, vector<1x8xf32>
    tpu.vector_store %arg4[%c0_102, %c0_103], %157 {strides = array<i32>} : memref<1x8xf32, #tpu.memory_space<vmem>>, vector<1x8xf32>,
    return
  }
}

</mosaic_0001>

<llo_original>
// kernel: tpu_custom_call.1
$region0: #{tpu_custom_call.1}
  #allocation0 [shape = 'u32[]', space=smem, size = 0x4, offset = 0x4, fixed_abs, tag = 'smem constant byte address 0x4 - core index']
  #allocation1 [shape = 'u32[144,128]{1,0:T(1,128)}', space=vmem, size = 0x12000, scoped, tag = 'internal scratch']
  #allocation2 [shape = 'f32[128,8]{1,0:T(8,128)}', space=vmem, size = 0x10000, scoped, tag = 'scratch operand']
  #allocation3 [shape = 'f32[128,8]{1,0:T(8,128)}', space=vmem, size = 0x10000, scoped, tag = 'scratch operand']
  %s0 = inlined_call_operand.vmem [shape: f32[1,8], index: 0, kind: input, shape index: {}]
  %s1 = inlined_call_operand.hbm [shape: f32[4,128,128], index: 1, kind: input, shape index: {}]
  %s2 = inlined_call_operand.vmem [shape: f32[128,16], index: 2, kind: input, shape index: {}]
  %s3 = inlined_call_operand.vmem [shape: f32[8,128], index: 3, kind: input, shape index: {}]
  %s4 = inlined_call_operand.hbm [shape: f32[1,8], index: 4, kind: output, shape index: {}]
  %s5 = sld [smem:[#allocation0]]
  $region30: #{tpu_custom_call.1} parent=0
    _
  %s7 = ssub.s32 1, %s5
  %s8 = scalar_select 0, %s7, %s5
  $region1: #{tpu_custom_call.1} parent=0
    #allocation4 [shape = 'u8[262144]{0}', space=vmem, size = 0x40000, scoped, tag = 'input window, operand 1, single buffered']
    #allocation5 [shape = 's32[1]{0}', space=sflag, size = 0x4, scoped, tag = 'scoped memory for tpu_custom_call.1']
    #allocation6 [shape = 's32[1]{0}', space=sflag, size = 0x4, scoped, tag = 'scoped memory for tpu_custom_call.1']
    #allocation7 [shape = 'u8[512]{0}', space=vmem, size = 0x400, scoped, tag = 'output window, operand 0, single buffered']
    %9 = vsyncpa [#allocation5], 0
    %10 = vsyncpa [#allocation6], 0
    // Predicated region
    $region2: #{tpu_custom_call.1} parent=1 // pred_check
      _
    $region3: #{tpu_custom_call.1} parent=1 // pred_check_branch
      %12 = sbr.rel (0) target = $region5
    $region4: #{tpu_custom_call.1} parent=1 // pred_region
      _
    $region5: #{tpu_custom_call.1} parent=1 // pred_fallthru
      _
    // Predicated region
    $region6: #{tpu_custom_call.1} parent=1 // pred_check
      _
    $region7: #{tpu_custom_call.1} parent=1 // pred_check_branch
      %14 = sbr.rel (0) target = $region9
    $region8: #{tpu_custom_call.1} parent=1 // pred_region
      %s16 = ssub.s32 8192, 8192
      %17 = vsyncadd [#allocation5], %s16
      %s18 = sshll.u32 [#allocation4], 4
      %s19 = int_to_ptr.vmem [resolvable:$true] %s18
      %24 = dma.hbm_to_vmem [thread:$0]  %s1, 8192, %s19, [#allocation5], 128, 128, 8
    $region9: #{tpu_custom_call.1} parent=1 // pred_fallthru
      _
    // Predicated region
    $region10: #{tpu_custom_call.1} parent=1 // pred_check
      _
    $region11: #{tpu_custom_call.1} parent=1 // pred_check_branch
      %26 = sbr.rel (0) target = $region13
    $region12: #{tpu_custom_call.1} parent=1 // pred_region
      _
    $region13: #{tpu_custom_call.1} parent=1 // pred_fallthru
      _
    // Predicated region
    $region14: #{tpu_custom_call.1} parent=1 // pred_check
      _
    $region15: #{tpu_custom_call.1} parent=1 // pred_check_branch
      %28 = sbr.rel (0) target = $region17
    $region16: #{tpu_custom_call.1} parent=1 // pred_region
      _
    $region17: #{tpu_custom_call.1} parent=1 // pred_fallthru
      _
    // Predicated region
    $region18: #{tpu_custom_call.1} parent=1 // pred_check
      _
    $region19: #{tpu_custom_call.1} parent=1 // pred_check_branch
      %30 = sbr.rel (0) target = $region21
    $region20: #{tpu_custom_call.1} parent=1 // pred_region
      %31 = dma.done [#allocation5], 8192
    $region21: #{tpu_custom_call.1} parent=1 // pred_fallthru
      _
    %v32 = vld [vmem:[%s2] sm:$0xff]
    %v33 = vld [vmem:[%s2 + $0x8] sm:$0xff]
    %v34 = vld [vmem:[%s2 + $0x10] sm:$0xff]
    %v35 = vld [vmem:[%s2 + $0x18] sm:$0xff]
    %v36 = vld [vmem:[%s2 + $0x20] sm:$0xff]
    %v37 = vld [vmem:[%s2 + $0x28] sm:$0xff]
    %v38 = vld [vmem:[%s2 + $0x30] sm:$0xff]
    %v39 = vld [vmem:[%s2 + $0x38] sm:$0xff]
    %v40 = vld [vmem:[%s2 + $0x40] sm:$0xff]
    %v41 = vld [vmem:[%s2 + $0x48] sm:$0xff]
    %v42 = vld [vmem:[%s2 + $0x50] sm:$0xff]
    %v43 = vld [vmem:[%s2 + $0x58] sm:$0xff]
    %v44 = vld [vmem:[%s2 + $0x60] sm:$0xff]
    %v45 = vld [vmem:[%s2 + $0x68] sm:$0xff]
    %v46 = vld [vmem:[%s2 + $0x70] sm:$0xff]
    %v47 = vld [vmem:[%s2 + $0x78] sm:$0xff]
    %v48 = vld [vmem:[%s0] sm:$0x1]
    %50 = vset.pattern.permute.xlu0 0
    %51 = vperm.xlu0 %50, %v32
    %v52 = vpop.permute.xlu0 %51
    %55 = vset.pattern.permute.xlu0 0
    %56 = vperm.xlu0 %55, %v33
    %v57 = vpop.permute.xlu0 %56
    %60 = vset.pattern.permute.xlu0 0
    %61 = vperm.xlu0 %60, %v34
    %v62 = vpop.permute.xlu0 %61
    %65 = vset.pattern.permute.xlu0 0
    %66 = vperm.xlu0 %65, %v35
    %v67 = vpop.permute.xlu0 %66
    %70 = vset.pattern.permute.xlu0 0
    %71 = vperm.xlu0 %70, %v36
    %v72 = vpop.permute.xlu0 %71
    %75 = vset.pattern.permute.xlu0 0
    %76 = vperm.xlu0 %75, %v37
    %v77 = vpop.permute.xlu0 %76
    %80 = vset.pattern.permute.xlu0 0
    %81 = vperm.xlu0 %80, %v38
    %v82 = vpop.permute.xlu0 %81
    %85 = vset.pattern.permute.xlu0 0
    %86 = vperm.xlu0 %85, %v39
    %v87 = vpop.permute.xlu0 %86
    %90 = vset.pattern.permute.xlu0 0
    %91 = vperm.xlu0 %90, %v40
    %v92 = vpop.permute.xlu0 %91
    %95 = vset.pattern.permute.xlu0 0
    %96 = vperm.xlu0 %95, %v41
    %v97 = vpop.permute.xlu0 %96
    %100 = vset.pattern.permute.xlu0 0
    %101 = vperm.xlu0 %100, %v42
    %v102 = vpop.permute.xlu0 %101
    %105 = vset.pattern.permute.xlu0 0
    %106 = vperm.xlu0 %105, %v43
    %v107 = vpop.permute.xlu0 %106
    %110 = vset.pattern.permute.xlu0 0
    %111 = vperm.xlu0 %110, %v44
    %v112 = vpop.permute.xlu0 %111
    %115 = vset.pattern.permute.xlu0 0
    %116 = vperm.xlu0 %115, %v45
    %v117 = vpop.permute.xlu0 %116
    %120 = vset.pattern.permute.xlu0 0
    %121 = vperm.xlu0 %120, %v46
    %v122 = vpop.permute.xlu0 %121
    %125 = vset.pattern.permute.xlu0 0
    %126 = vperm.xlu0 %125, %v47
    %v127 = vpop.permute.xlu0 %126
    %v130 = vlaneseq
    %v131 = vshrl.u32 %v130, 7
    %v132 = vsub.s32 0, %v131
    %v133 = vrot.slane %v48, %v132
    %v135 = vmul.f32 %v52, %v133
    %v136 = vmul.f32 %v57, %v133
    %v137 = vmul.f32 %v62, %v133
    %v138 = vmul.f32 %v67, %v133
    %v139 = vmul.f32 %v72, %v133
    %v140 = vmul.f32 %v77, %v133
    %v141 = vmul.f32 %v82, %v133
    %v142 = vmul.f32 %v87, %v133
    %v143 = vmul.f32 %v92, %v133
    %v144 = vmul.f32 %v97, %v133
    %v145 = vmul.f32 %v102, %v133
    %v146 = vmul.f32 %v107, %v133
    %v147 = vmul.f32 %v112, %v133
    %v148 = vmul.f32 %v117, %v133
    %v149 = vmul.f32 %v122, %v133
    %v150 = vmul.f32 %v127, %v133
    %vm151 = vcmask 64512
    %152 = vst.msk [vmem:[#allocation2] sm:$0xff] %vm151, %v135
    %153 = vst.msk [vmem:[#allocation2 + $0x8] sm:$0xff] %vm151, %v136
    %154 = vst.msk [vmem:[#allocation2 + $0x10] sm:$0xff] %vm151, %v137
    %155 = vst.msk [vmem:[#allocation2 + $0x18] sm:$0xff] %vm151, %v138
    %156 = vst.msk [vmem:[#allocation2 + $0x20] sm:$0xff] %vm151, %v139
    %157 = vst.msk [vmem:[#allocation2 + $0x28] sm:$0xff] %vm151, %v140
    %158 = vst.msk [vmem:[#allocation2 + $0x30] sm:$0xff] %vm151, %v141
    %159 = vst.msk [vmem:[#allocation2 + $0x38] sm:$0xff] %vm151, %v142
    %160 = vst.msk [vmem:[#allocation2 + $0x40] sm:$0xff] %vm151, %v143
    %161 = vst.msk [vmem:[#allocation2 + $0x48] sm:$0xff] %vm151, %v144
    %162 = vst.msk [vmem:[#allocation2 + $0x50] sm:$0xff] %vm151, %v145
    %163 = vst.msk [vmem:[#allocation2 + $0x58] sm:$0xff] %vm151, %v146
    %164 = vst.msk [vmem:[#allocation2 + $0x60] sm:$0xff] %vm151, %v147
    %165 = vst.msk [vmem:[#allocation2 + $0x68] sm:$0xff] %vm151, %v148
    %166 = vst.msk [vmem:[#allocation2 + $0x70] sm:$0xff] %vm151, %v149
    %167 = vst.msk [vmem:[#allocation2 + $0x78] sm:$0xff] %vm151, %v150
    %v168 = vld [vmem:[%s2] sm:$0xff]
    %v169 = vld [vmem:[%s2 + $0x8] sm:$0xff]
    %v170 = vld [vmem:[%s2 + $0x10] sm:$0xff]
    %v171 = vld [vmem:[%s2 + $0x18] sm:$0xff]
    %v172 = vld [vmem:[%s2 + $0x20] sm:$0xff]
    %v173 = vld [vmem:[%s2 + $0x28] sm:$0xff]
    %v174 = vld [vmem:[%s2 + $0x30] sm:$0xff]
    %v175 = vld [vmem:[%s2 + $0x38] sm:$0xff]
    %v176 = vld [vmem:[%s2 + $0x40] sm:$0xff]
    %v177 = vld [vmem:[%s2 + $0x48] sm:$0xff]
    %v178 = vld [vmem:[%s2 + $0x50] sm:$0xff]
    %v179 = vld [vmem:[%s2 + $0x58] sm:$0xff]
    %v180 = vld [vmem:[%s2 + $0x60] sm:$0xff]
    %v181 = vld [vmem:[%s2 + $0x68] sm:$0xff]
    %v182 = vld [vmem:[%s2 + $0x70] sm:$0xff]
    %v183 = vld [vmem:[%s2 + $0x78] sm:$0xff]
    %v184 = vld [vmem:[#allocation2] sm:$0xff]
    %v185 = vld [vmem:[#allocation2 + $0x8] sm:$0xff]
    %v186 = vld [vmem:[#allocation2 + $0x10] sm:$0xff]
    %v187 = vld [vmem:[#allocation2 + $0x18] sm:$0xff]
    %v188 = vld [vmem:[#allocation2 + $0x20] sm:$0xff]
    %v189 = vld [vmem:[#allocation2 + $0x28] sm:$0xff]
    %v190 = vld [vmem:[#allocation2 + $0x30] sm:$0xff]
    %v191 = vld [vmem:[#allocation2 + $0x38] sm:$0xff]
    %v192 = vld [vmem:[#allocation2 + $0x40] sm:$0xff]
    %v193 = vld [vmem:[#allocation2 + $0x48] sm:$0xff]
    %v194 = vld [vmem:[#allocation2 + $0x50] sm:$0xff]
    %v195 = vld [vmem:[#allocation2 + $0x58] sm:$0xff]
    %v196 = vld [vmem:[#allocation2 + $0x60] sm:$0xff]
    %v197 = vld [vmem:[#allocation2 + $0x68] sm:$0xff]
    %v198 = vld [vmem:[#allocation2 + $0x70] sm:$0xff]
    %v199 = vld [vmem:[#allocation2 + $0x78] sm:$0xff]
    %v200 = vsel %vm151, %v184, 0.0
    %201 = vadd.xlane.f32.xlu0 %v200
    %v202 = vpop.xlane.xlu0 %201
    %v203 = vsel %vm151, %v185, 0.0
    %204 = vadd.xlane.f32.xlu0 %v203
    %v205 = vpop.xlane.xlu0 %204
    %v206 = vsel %vm151, %v186, 0.0
    %207 = vadd.xlane.f32.xlu0 %v206
    %v208 = vpop.xlane.xlu0 %207
    %v209 = vsel %vm151, %v187, 0.0
    %210 = vadd.xlane.f32.xlu0 %v209
    %v211 = vpop.xlane.xlu0 %210
    %v212 = vsel %vm151, %v188, 0.0
    %213 = vadd.xlane.f32.xlu0 %v212
    %v214 = vpop.xlane.xlu0 %213
    %v215 = vsel %vm151, %v189, 0.0
    %216 = vadd.xlane.f32.xlu0 %v215
    %v217 = vpop.xlane.xlu0 %216
    %v218 = vsel %vm151, %v190, 0.0
    %219 = vadd.xlane.f32.xlu0 %v218
    %v220 = vpop.xlane.xlu0 %219
    %v221 = vsel %vm151, %v191, 0.0
    %222 = vadd.xlane.f32.xlu0 %v221
    %v223 = vpop.xlane.xlu0 %222
    %v224 = vsel %vm151, %v192, 0.0
    %225 = vadd.xlane.f32.xlu0 %v224
    %v226 = vpop.xlane.xlu0 %225
    %v227 = vsel %vm151, %v193, 0.0
    %228 = vadd.xlane.f32.xlu0 %v227
    %v229 = vpop.xlane.xlu0 %228
    %v230 = vsel %vm151, %v194, 0.0
    %231 = vadd.xlane.f32.xlu0 %v230
    %v232 = vpop.xlane.xlu0 %231
    %v233 = vsel %vm151, %v195, 0.0
    %234 = vadd.xlane.f32.xlu0 %v233
    %v235 = vpop.xlane.xlu0 %234
    %v236 = vsel %vm151, %v196, 0.0
    %237 = vadd.xlane.f32.xlu0 %v236
    %v238 = vpop.xlane.xlu0 %237
    %v239 = vsel %vm151, %v197, 0.0
    %240 = vadd.xlane.f32.xlu0 %v239
    %v241 = vpop.xlane.xlu0 %240
    %v242 = vsel %vm151, %v198, 0.0
    %243 = vadd.xlane.f32.xlu0 %v242
    %v244 = vpop.xlane.xlu0 %243
    %v245 = vsel %vm151, %v199, 0.0
    %246 = vadd.xlane.f32.xlu0 %v245
    %v247 = vpop.xlane.xlu0 %246
    %v248 = vmul.f32 %v202, 0.125
    %v249 = vmul.f32 %v205, 0.125
    %v250 = vmul.f32 %v208, 0.125
    %v251 = vmul.f32 %v211, 0.125
    %v252 = vmul.f32 %v214, 0.125
    %v253 = vmul.f32 %v217, 0.125
    %v254 = vmul.f32 %v220, 0.125
    %v255 = vmul.f32 %v223, 0.125
    %v256 = vmul.f32 %v226, 0.125
    %v257 = vmul.f32 %v229, 0.125
    %v258 = vmul.f32 %v232, 0.125
    %v259 = vmul.f32 %v235, 0.125
    %v260 = vmul.f32 %v238, 0.125
    %v261 = vmul.f32 %v241, 0.125
    %v262 = vmul.f32 %v244, 0.125
    %v263 = vmul.f32 %v247, 0.125
    %v264 = vsub.f32 %v184, %v248
    %v265 = vsub.f32 %v185, %v249
    %v266 = vsub.f32 %v186, %v250
    %v267 = vsub.f32 %v187, %v251
    %v268 = vsub.f32 %v188, %v252
    %v269 = vsub.f32 %v189, %v253
    %v270 = vsub.f32 %v190, %v254
    %v271 = vsub.f32 %v191, %v255
    %v272 = vsub.f32 %v192, %v256
    %v273 = vsub.f32 %v193, %v257
    %v274 = vsub.f32 %v194, %v258
    %v275 = vsub.f32 %v195, %v259
    %v276 = vsub.f32 %v196, %v260
    %v277 = vsub.f32 %v197, %v261
    %v278 = vsub.f32 %v198, %v262
    %v279 = vsub.f32 %v199, %v263
    %v280 = vmul.f32 %v264, %v264
    %v281 = vmul.f32 %v265, %v265
    %v282 = vmul.f32 %v266, %v266
    %v283 = vmul.f32 %v267, %v267
    %v284 = vmul.f32 %v268, %v268
    %v285 = vmul.f32 %v269, %v269
    %v286 = vmul.f32 %v270, %v270
    %v287 = vmul.f32 %v271, %v271
    %v288 = vmul.f32 %v272, %v272
    %v289 = vmul.f32 %v273, %v273
    %v290 = vmul.f32 %v274, %v274
    %v291 = vmul.f32 %v275, %v275
    %v292 = vmul.f32 %v276, %v276
    %v293 = vmul.f32 %v277, %v277
    %v294 = vmul.f32 %v278, %v278
    %v295 = vmul.f32 %v279, %v279
    %v296 = vsel %vm151, %v280, 0.0
    %297 = vadd.xlane.f32.xlu0 %v296
    %v298 = vpop.xlane.xlu0 %297
    %v299 = vsel %vm151, %v281, 0.0
    %300 = vadd.xlane.f32.xlu0 %v299
    %v301 = vpop.xlane.xlu0 %300
    %v302 = vsel %vm151, %v282, 0.0
    %303 = vadd.xlane.f32.xlu0 %v302
    %v304 = vpop.xlane.xlu0 %303
    %v305 = vsel %vm151, %v283, 0.0
    %306 = vadd.xlane.f32.xlu0 %v305
    %v307 = vpop.xlane.xlu0 %306
    %v308 = vsel %vm151, %v284, 0.0
    %309 = vadd.xlane.f32.xlu0 %v308
    %v310 = vpop.xlane.xlu0 %309
    %v311 = vsel %vm151, %v285, 0.0
    %312 = vadd.xlane.f32.xlu0 %v311
    %v313 = vpop.xlane.xlu0 %312
    %v314 = vsel %vm151, %v286, 0.0
    %315 = vadd.xlane.f32.xlu0 %v314
    %v316 = vpop.xlane.xlu0 %315
    %v317 = vsel %vm151, %v287, 0.0
    %318 = vadd.xlane.f32.xlu0 %v317
    %v319 = vpop.xlane.xlu0 %318
    %v320 = vsel %vm151, %v288, 0.0
    %321 = vadd.xlane.f32.xlu0 %v320
    %v322 = vpop.xlane.xlu0 %321
    %v323 = vsel %vm151, %v289, 0.0
    %324 = vadd.xlane.f32.xlu0 %v323
    %v325 = vpop.xlane.xlu0 %324
    %v326 = vsel %vm151, %v290, 0.0
    %327 = vadd.xlane.f32.xlu0 %v326
    %v328 = vpop.xlane.xlu0 %327
    %v329 = vsel %vm151, %v291, 0.0
    %330 = vadd.xlane.f32.xlu0 %v329
    %v331 = vpop.xlane.xlu0 %330
    %v332 = vsel %vm151, %v292, 0.0
    %333 = vadd.xlane.f32.xlu0 %v332
    %v334 = vpop.xlane.xlu0 %333
    %v335 = vsel %vm151, %v293, 0.0
    %336 = vadd.xlane.f32.xlu0 %v335
    %v337 = vpop.xlane.xlu0 %336
    %v338 = vsel %vm151, %v294, 0.0
    %339 = vadd.xlane.f32.xlu0 %v338
    %v340 = vpop.xlane.xlu0 %339
    %v341 = vsel %vm151, %v295, 0.0
    %342 = vadd.xlane.f32.xlu0 %v341
    %v343 = vpop.xlane.xlu0 %342
    %v344 = vmul.f32 %v298, 0.125
    %v345 = vmul.f32 %v301, 0.125
    %v346 = vmul.f32 %v304, 0.125
    %v347 = vmul.f32 %v307, 0.125
    %v348 = vmul.f32 %v310, 0.125
    %v349 = vmul.f32 %v313, 0.125
    %v350 = vmul.f32 %v316, 0.125
    %v351 = vmul.f32 %v319, 0.125
    %v352 = vmul.f32 %v322, 0.125
    %v353 = vmul.f32 %v325, 0.125
    %v354 = vmul.f32 %v328, 0.125
    %v355 = vmul.f32 %v331, 0.125
    %v356 = vmul.f32 %v334, 0.125
    %v357 = vmul.f32 %v337, 0.125
    %v358 = vmul.f32 %v340, 0.125
    %v359 = vmul.f32 %v343, 0.125
    %v360 = vadd.f32 %v344, 1e-05
    %v361 = vadd.f32 %v345, 1e-05
    %v362 = vadd.f32 %v346, 1e-05
    %v363 = vadd.f32 %v347, 1e-05
    %v364 = vadd.f32 %v348, 1e-05
    %v365 = vadd.f32 %v349, 1e-05
    %v366 = vadd.f32 %v350, 1e-05
    %v367 = vadd.f32 %v351, 1e-05
    %v368 = vadd.f32 %v352, 1e-05
    %v369 = vadd.f32 %v353, 1e-05
    %v370 = vadd.f32 %v354, 1e-05
    %v371 = vadd.f32 %v355, 1e-05
    %v372 = vadd.f32 %v356, 1e-05
    %v373 = vadd.f32 %v357, 1e-05
    %v374 = vadd.f32 %v358, 1e-05
    %v375 = vadd.f32 %v359, 1e-05
    %v376 = vrsqrt.pop %v360
    %v377 = vrsqrt.pop %v361
    %v378 = vrsqrt.pop %v362
    %v379 = vrsqrt.pop %v363
    %v380 = vrsqrt.pop %v364
    %v381 = vrsqrt.pop %v365
    %v382 = vrsqrt.pop %v366
    %v383 = vrsqrt.pop %v367
    %v384 = vrsqrt.pop %v368
    %v385 = vrsqrt.pop %v369
    %v386 = vrsqrt.pop %v370
    %v387 = vrsqrt.pop %v371
    %v388 = vrsqrt.pop %v372
    %v389 = vrsqrt.pop %v373
    %v390 = vrsqrt.pop %v374
    %v391 = vrsqrt.pop %v375
    %v392 = vmul.f32 %v168, %v376
    %v393 = vmul.f32 %v169, %v377
    %v394 = vmul.f32 %v170, %v378
    %v395 = vmul.f32 %v171, %v379
    %v396 = vmul.f32 %v172, %v380
    %v397 = vmul.f32 %v173, %v381
    %v398 = vmul.f32 %v174, %v382
    %v399 = vmul.f32 %v175, %v383
    %v400 = vmul.f32 %v176, %v384
    %v401 = vmul.f32 %v177, %v385
    %v402 = vmul.f32 %v178, %v386
    %v403 = vmul.f32 %v179, %v387
    %v404 = vmul.f32 %v180, %v388
    %v405 = vmul.f32 %v181, %v389
    %v406 = vmul.f32 %v182, %v390
    %v407 = vmul.f32 %v183, %v391
    %409 = vset.pattern.permute.xlu0 1
    %410 = vperm.xlu0 %409, %v392
    %v411 = vpop.permute.xlu0 %410
    %414 = vset.pattern.permute.xlu0 1
    %415 = vperm.xlu0 %414, %v393
    %v416 = vpop.permute.xlu0 %415
    %419 = vset.pattern.permute.xlu0 1
    %420 = vperm.xlu0 %419, %v394
    %v421 = vpop.permute.xlu0 %420
    %424 = vset.pattern.permute.xlu0 1
    %425 = vperm.xlu0 %424, %v395
    %v426 = vpop.permute.xlu0 %425
    %429 = vset.pattern.permute.xlu0 1
    %430 = vperm.xlu0 %429, %v396
    %v431 = vpop.permute.xlu0 %430
    %434 = vset.pattern.permute.xlu0 1
    %435 = vperm.xlu0 %434, %v397
    %v436 = vpop.permute.xlu0 %435
    %439 = vset.pattern.permute.xlu0 1
    %440 = vperm.xlu0 %439, %v398
    %v441 = vpop.permute.xlu0 %440
    %444 = vset.pattern.permute.xlu0 1
    %445 = vperm.xlu0 %444, %v399
    %v446 = vpop.permute.xlu0 %445
    %449 = vset.pattern.permute.xlu0 1
    %450 = vperm.xlu0 %449, %v400
    %v451 = vpop.permute.xlu0 %450
    %454 = vset.pattern.permute.xlu0 1
    %455 = vperm.xlu0 %454, %v401
    %v456 = vpop.permute.xlu0 %455
    %459 = vset.pattern.permute.xlu0 1
    %460 = vperm.xlu0 %459, %v402
    %v461 = vpop.permute.xlu0 %460
    %464 = vset.pattern.permute.xlu0 1
    %465 = vperm.xlu0 %464, %v403
    %v466 = vpop.permute.xlu0 %465
    %469 = vset.pattern.permute.xlu0 1
    %470 = vperm.xlu0 %469, %v404
    %v471 = vpop.permute.xlu0 %470
    %474 = vset.pattern.permute.xlu0 1
    %475 = vperm.xlu0 %474, %v405
    %v476 = vpop.permute.xlu0 %475
    %479 = vset.pattern.permute.xlu0 1
    %480 = vperm.xlu0 %479, %v406
    %v481 = vpop.permute.xlu0 %480
    %484 = vset.pattern.permute.xlu0 1
    %485 = vperm.xlu0 %484, %v407
    %v486 = vpop.permute.xlu0 %485
    %v488 = vmul.f32 %v264, %v411
    %v489 = vmul.f32 %v265, %v416
    %v490 = vmul.f32 %v266, %v421
    %v491 = vmul.f32 %v267, %v426
    %v492 = vmul.f32 %v268, %v431
    %v493 = vmul.f32 %v269, %v436
    %v494 = vmul.f32 %v270, %v441
    %v495 = vmul.f32 %v271, %v446
    %v496 = vmul.f32 %v272, %v451
    %v497 = vmul.f32 %v273, %v456
    %v498 = vmul.f32 %v274, %v461
    %v499 = vmul.f32 %v275, %v466
    %v500 = vmul.f32 %v276, %v471
    %v501 = vmul.f32 %v277, %v476
    %v502 = vmul.f32 %v278, %v481
    %v503 = vmul.f32 %v279, %v486
    %505 = vset.pattern.permute.xlu0 6
    %506 = vperm.xlu0 %505, %v168
    %v507 = vpop.permute.xlu0 %506
    %510 = vset.pattern.permute.xlu0 6
    %511 = vperm.xlu0 %510, %v169
    %v512 = vpop.permute.xlu0 %511
    %515 = vset.pattern.permute.xlu0 6
    %516 = vperm.xlu0 %515, %v170
    %v517 = vpop.permute.xlu0 %516
    %520 = vset.pattern.permute.xlu0 6
    %521 = vperm.xlu0 %520, %v171
    %v522 = vpop.permute.xlu0 %521
    %525 = vset.pattern.permute.xlu0 6
    %526 = vperm.xlu0 %525, %v172
    %v527 = vpop.permute.xlu0 %526
    %530 = vset.pattern.permute.xlu0 6
    %531 = vperm.xlu0 %530, %v173
    %v532 = vpop.permute.xlu0 %531
    %535 = vset.pattern.permute.xlu0 6
    %536 = vperm.xlu0 %535, %v174
    %v537 = vpop.permute.xlu0 %536
    %540 = vset.pattern.permute.xlu0 6
    %541 = vperm.xlu0 %540, %v175
    %v542 = vpop.permute.xlu0 %541
    %545 = vset.pattern.permute.xlu0 6
    %546 = vperm.xlu0 %545, %v176
    %v547 = vpop.permute.xlu0 %546
    %550 = vset.pattern.permute.xlu0 6
    %551 = vperm.xlu0 %550, %v177
    %v552 = vpop.permute.xlu0 %551
    %555 = vset.pattern.permute.xlu0 6
    %556 = vperm.xlu0 %555, %v178
    %v557 = vpop.permute.xlu0 %556
    %560 = vset.pattern.permute.xlu0 6
    %561 = vperm.xlu0 %560, %v179
    %v562 = vpop.permute.xlu0 %561
    %565 = vset.pattern.permute.xlu0 6
    %566 = vperm.xlu0 %565, %v180
    %v567 = vpop.permute.xlu0 %566
    %570 = vset.pattern.permute.xlu0 6
    %571 = vperm.xlu0 %570, %v181
    %v572 = vpop.permute.xlu0 %571
    %575 = vset.pattern.permute.xlu0 6
    %576 = vperm.xlu0 %575, %v182
    %v577 = vpop.permute.xlu0 %576
    %580 = vset.pattern.permute.xlu0 6
    %581 = vperm.xlu0 %580, %v183
    %v582 = vpop.permute.xlu0 %581
    %v584 = vadd.f32 %v488, %v507
    %v585 = vadd.f32 %v489, %v512
    %v586 = vadd.f32 %v490, %v517
    %v587 = vadd.f32 %v491, %v522
    %v588 = vadd.f32 %v492, %v527
    %v589 = vadd.f32 %v493, %v532
    %v590 = vadd.f32 %v494, %v537
    %v591 = vadd.f32 %v495, %v542
    %v592 = vadd.f32 %v496, %v547
    %v593 = vadd.f32 %v497, %v552
    %v594 = vadd.f32 %v498, %v557
    %v595 = vadd.f32 %v499, %v562
    %v596 = vadd.f32 %v500, %v567
    %v597 = vadd.f32 %v501, %v572
    %v598 = vadd.f32 %v502, %v577
    %v599 = vadd.f32 %v503, %v582
    %v600 = vmax.f32 %v584, 0.0
    %v601 = vmax.f32 %v585, 0.0
    %v602 = vmax.f32 %v586, 0.0
    %v603 = vmax.f32 %v587, 0.0
    %v604 = vmax.f32 %v588, 0.0
    %v605 = vmax.f32 %v589, 0.0
    %v606 = vmax.f32 %v590, 0.0
    %v607 = vmax.f32 %v591, 0.0
    %v608 = vmax.f32 %v592, 0.0
    %v609 = vmax.f32 %v593, 0.0
    %v610 = vmax.f32 %v594, 0.0
    %v611 = vmax.f32 %v595, 0.0
    %v612 = vmax.f32 %v596, 0.0
    %v613 = vmax.f32 %v597, 0.0
    %v614 = vmax.f32 %v598, 0.0
    %v615 = vmax.f32 %v599, 0.0
    %616 = vst.msk [vmem:[#allocation2] sm:$0xff] %vm151, %v600
    %617 = vst.msk [vmem:[#allocation2 + $0x8] sm:$0xff] %vm151, %v601
    %618 = vst.msk [vmem:[#allocation2 + $0x10] sm:$0xff] %vm151, %v602
    %619 = vst.msk [vmem:[#allocation2 + $0x18] sm:$0xff] %vm151, %v603
    %620 = vst.msk [vmem:[#allocation2 + $0x20] sm:$0xff] %vm151, %v604
    %621 = vst.msk [vmem:[#allocation2 + $0x28] sm:$0xff] %vm151, %v605
    %622 = vst.msk [vmem:[#allocation2 + $0x30] sm:$0xff] %vm151, %v606
    %623 = vst.msk [vmem:[#allocation2 + $0x38] sm:$0xff] %vm151, %v607
    %624 = vst.msk [vmem:[#allocation2 + $0x40] sm:$0xff] %vm151, %v608
    %625 = vst.msk [vmem:[#allocation2 + $0x48] sm:$0xff] %vm151, %v609
    %626 = vst.msk [vmem:[#allocation2 + $0x50] sm:$0xff] %vm151, %v610
    %627 = vst.msk [vmem:[#allocation2 + $0x58] sm:$0xff] %vm151, %v611
    %628 = vst.msk [vmem:[#allocation2 + $0x60] sm:$0xff] %vm151, %v612
    %629 = vst.msk [vmem:[#allocation2 + $0x68] sm:$0xff] %vm151, %v613
    %630 = vst.msk [vmem:[#allocation2 + $0x70] sm:$0xff] %vm151, %v614
    %631 = vst.msk [vmem:[#allocation2 + $0x78] sm:$0xff] %vm151, %v615
    %v632 = vld [vmem:[#allocation4] sm:$0xff]
    %v633 = vld [vmem:[#allocation4 + $0x8] sm:$0xff]
    %v634 = vld [vmem:[#allocation4 + $0x10] sm:$0xff]
    %v635 = vld [vmem:[#allocation4 + $0x18] sm:$0xff]
    %v636 = vld [vmem:[#allocation4 + $0x20] sm:$0xff]
    %v637 = vld [vmem:[#allocation4 + $0x28] sm:$0xff]
    %v638 = vld [vmem:[#allocation4 + $0x30] sm:$0xff]
    %v639 = vld [vmem:[#allocation4 + $0x38] sm:$0xff]
    %v640 = vld [vmem:[#allocation4 + $0x40] sm:$0xff]
    %v641 = vld [vmem:[#allocation4 + $0x48] sm:$0xff]
    %v642 = vld [vmem:[#allocation4 + $0x50] sm:$0xff]
    %v643 = vld [vmem:[#allocation4 + $0x58] sm:$0xff]
    %v644 = vld [vmem:[#allocation4 + $0x60] sm:$0xff]
    %v645 = vld [vmem:[#allocation4 + $0x68] sm:$0xff]
    %v646 = vld [vmem:[#allocation4 + $0x70] sm:$0xff]
    %v647 = vld [vmem:[#allocation4 + $0x78] sm:$0xff]
    %v648 = vld [vmem:[#allocation2] sm:$0xff]
    %v649 = vld [vmem:[#allocation2 + $0x8] sm:$0xff]
    %v650 = vld [vmem:[#allocation2 + $0x10] sm:$0xff]
    %v651 = vld [vmem:[#allocation2 + $0x18] sm:$0xff]
    %v652 = vld [vmem:[#allocation2 + $0x20] sm:$0xff]
    %v653 = vld [vmem:[#allocation2 + $0x28] sm:$0xff]
    %v654 = vld [vmem:[#allocation2 + $0x30] sm:$0xff]
    %v655 = vld [vmem:[#allocation2 + $0x38] sm:$0xff]
    %v656 = vld [vmem:[#allocation2 + $0x40] sm:$0xff]
    %v657 = vld [vmem:[#allocation2 + $0x48] sm:$0xff]
    %v658 = vld [vmem:[#allocation2 + $0x50] sm:$0xff]
    %v659 = vld [vmem:[#allocation2 + $0x58] sm:$0xff]
    %v660 = vld [vmem:[#allocation2 + $0x60] sm:$0xff]
    %v661 = vld [vmem:[#allocation2 + $0x68] sm:$0xff]
    %v662 = vld [vmem:[#allocation2 + $0x70] sm:$0xff]
    %v663 = vld [vmem:[#allocation2 + $0x78] sm:$0xff]
    %664 = vmatprep.subr.mxu0 0.0
    %665 = vmatpush1.msra.mxu0 %v648
    %666 = vmatprep.subr.mxu0 0.0
    %667 = vmatpush1.msra.mxu0 %v649
    %668 = vmatprep.subr.mxu0 0.0
    %669 = vmatpush1.msra.mxu0 %v650
    %670 = vmatprep.subr.mxu0 0.0
    %671 = vmatpush1.msra.mxu0 %v651
    %672 = vmatprep.subr.mxu0 0.0
    %673 = vmatpush1.msra.mxu0 %v652
    %674 = vmatprep.subr.mxu0 0.0
    %675 = vmatpush1.msra.mxu0 %v653
    %676 = vmatprep.subr.mxu0 0.0
    %677 = vmatpush1.msra.mxu0 %v654
    %678 = vmatprep.subr.mxu0 0.0
    %679 = vmatpush1.msra.mxu0 %v655
    %680 = vmatprep.subr.mxu0 0.0
    %681 = vmatpush1.msra.mxu0 %v656
    %682 = vmatprep.subr.mxu0 0.0
    %683 = vmatpush1.msra.mxu0 %v657
    %684 = vmatprep.subr.mxu0 0.0
    %685 = vmatpush1.msra.mxu0 %v658
    %686 = vmatprep.subr.mxu0 0.0
    %687 = vmatpush1.msra.mxu0 %v659
    %688 = vmatprep.subr.mxu0 0.0
    %689 = vmatpush1.msra.mxu0 %v660
    %690 = vmatprep.subr.mxu0 0.0
    %691 = vmatpush1.msra.mxu0 %v661
    %692 = vmatprep.subr.mxu0 0.0
    %693 = vmatpush1.msra.mxu0 %v662
    %694 = vmatprep.subr.mxu0 0.0
    %695 = vmatpush1.msra.mxu0 %v663
    %696 = vmatprep.subr.mxu0 0.0
    %697 = vmatpush1.msra.mxu0 0.0
    %698 = vmatprep.subr.mxu0 0.0
    %699 = vmatpush1.msra.mxu0 0.0
    %700 = vmatprep.subr.mxu0 0.0
    %701 = vmatpush1.msra.mxu0 0.0
    %702 = vmatprep.subr.mxu0 0.0
    %703 = vmatpush1.msra.mxu0 0.0
    %704 = vmatprep.subr.mxu0 0.0
    %705 = vmatpush1.msra.mxu0 0.0
    %706 = vmatprep.subr.mxu0 0.0
    %707 = vmatpush1.msra.mxu0 0.0
    %708 = vmatprep.subr.mxu0 0.0
    %709 = vmatpush1.msra.mxu0 0.0
    %710 = vmatprep.subr.mxu0 0.0
    %711 = vmatpush1.msra.mxu0 0.0
    %712 = vmatprep.subr.mxu0 0.0
    %713 = vmatpush1.msra.mxu0 0.0
    %714 = vmatprep.subr.mxu0 0.0
    %715 = vmatpush1.msra.mxu0 0.0
    %716 = vmatprep.subr.mxu0 0.0
    %717 = vmatpush1.msra.mxu0 0.0
    %718 = vmatprep.subr.mxu0 0.0
    %719 = vmatpush1.msra.mxu0 0.0
    %720 = vmatprep.subr.mxu0 0.0
    %721 = vmatpush1.msra.mxu0 0.0
    %722 = vmatprep.subr.mxu0 0.0
    %723 = vmatpush1.msra.mxu0 0.0
    %724 = vmatprep.subr.mxu0 0.0
    %725 = vmatpush1.msra.mxu0 0.0
    %726 = vmatprep.subr.mxu0 0.0
    %727 = vmatpush1.msra.mxu0 0.0
    %728 = vmatprep.mubr.f32.mxu0 0.0
    %729 = vmatmul.mubr.f32.gmra.mrb[0].mxu0 %v632
    %v730 = vpop.f32.mrb[0].mxu0
    %v731 = vadd.f32 0.0, %v730
    %v732 = vpop.f32.mrb[0].mxu0
    %733 = vmatprep.mubr.f32.mxu0 0.0
    %734 = vmatmul.mubr.f32.gmra.mrb[0].mxu0 %v633
    %v735 = vpop.f32.mrb[0].mxu0
    %v736 = vadd.f32 0.0, %v735
    %v737 = vpop.f32.mrb[0].mxu0
    %738 = vmatprep.mubr.f32.mxu0 0.0
    %739 = vmatmul.mubr.f32.gmra.mrb[0].mxu0 %v634
    %v740 = vpop.f32.mrb[0].mxu0
    %v741 = vadd.f32 0.0, %v740
    %v742 = vpop.f32.mrb[0].mxu0
    %743 = vmatprep.mubr.f32.mxu0 0.0
    %744 = vmatmul.mubr.f32.gmra.mrb[0].mxu0 %v635
    %v745 = vpop.f32.mrb[0].mxu0
    %v746 = vadd.f32 0.0, %v745
    %v747 = vpop.f32.mrb[0].mxu0
    %748 = vmatprep.mubr.f32.mxu0 0.0
    %749 = vmatmul.mubr.f32.gmra.mrb[0].mxu0 %v636
    %v750 = vpop.f32.mrb[0].mxu0
    %v751 = vadd.f32 0.0, %v750
    %v752 = vpop.f32.mrb[0].mxu0
    %753 = vmatprep.mubr.f32.mxu0 0.0
    %754 = vmatmul.mubr.f32.gmra.mrb[0].mxu0 %v637
    %v755 = vpop.f32.mrb[0].mxu0
    %v756 = vadd.f32 0.0, %v755
    %v757 = vpop.f32.mrb[0].mxu0
    %758 = vmatprep.mubr.f32.mxu0 0.0
    %759 = vmatmul.mubr.f32.gmra.mrb[0].mxu0 %v638
    %v760 = vpop.f32.mrb[0].mxu0
    %v761 = vadd.f32 0.0, %v760
    %v762 = vpop.f32.mrb[0].mxu0
    %763 = vmatprep.mubr.f32.mxu0 0.0
    %764 = vmatmul.mubr.f32.gmra.mrb[0].mxu0 %v639
    %v765 = vpop.f32.mrb[0].mxu0
    %v766 = vadd.f32 0.0, %v765
    %v767 = vpop.f32.mrb[0].mxu0
    %768 = vmatprep.mubr.f32.mxu0 0.0
    %769 = vmatmul.mubr.f32.gmra.mrb[0].mxu0 %v640
    %v770 = vpop.f32.mrb[0].mxu0
    %v771 = vadd.f32 0.0, %v770
    %v772 = vpop.f32.mrb[0].mxu0
    %773 = vmatprep.mubr.f32.mxu0 0.0
    %774 = vmatmul.mubr.f32.gmra.mrb[0].mxu0 %v641
    %v775 = vpop.f32.mrb[0].mxu0
    %v776 = vadd.f32 0.0, %v775
    %v777 = vpop.f32.mrb[0].mxu0
    %778 = vmatprep.mubr.f32.mxu0 0.0
    %779 = vmatmul.mubr.f32.gmra.mrb[0].mxu0 %v642
    %v780 = vpop.f32.mrb[0].mxu0
    %v781 = vadd.f32 0.0, %v780
    %v782 = vpop.f32.mrb[0].mxu0
    %783 = vmatprep.mubr.f32.mxu0 0.0
    %784 = vmatmul.mubr.f32.gmra.mrb[0].mxu0 %v643
    %v785 = vpop.f32.mrb[0].mxu0
    %v786 = vadd.f32 0.0, %v785
    %v787 = vpop.f32.mrb[0].mxu0
    %788 = vmatprep.mubr.f32.mxu0 0.0
    %789 = vmatmul.mubr.f32.gmra.mrb[0].mxu0 %v644
    %v790 = vpop.f32.mrb[0].mxu0
    %v791 = vadd.f32 0.0, %v790
    %v792 = vpop.f32.mrb[0].mxu0
    %793 = vmatprep.mubr.f32.mxu0 0.0
    %794 = vmatmul.mubr.f32.gmra.mrb[0].mxu0 %v645
    %v795 = vpop.f32.mrb[0].mxu0
    %v796 = vadd.f32 0.0, %v795
    %v797 = vpop.f32.mrb[0].mxu0
    %798 = vmatprep.mubr.f32.mxu0 0.0
    %799 = vmatmul.mubr.f32.gmra.mrb[0].mxu0 %v646
    %v800 = vpop.f32.mrb[0].mxu0
    %v801 = vadd.f32 0.0, %v800
    %v802 = vpop.f32.mrb[0].mxu0
    %803 = vmatprep.mubr.f32.mxu0 0.0
    %804 = vmatmul.mubr.f32.gmra.mrb[0].mxu0 %v647
    %v805 = vpop.f32.mrb[0].mxu0
    %v806 = vadd.f32 0.0, %v805
    %v807 = vpop.f32.mrb[0].mxu0
    %808 = vdwg.mxu0
    %809 = vst.msk [vmem:[#allocation3] sm:$0xff] %vm151, %v731
    %810 = vst.msk [vmem:[#allocation3 + $0x8] sm:$0xff] %vm151, %v736
    %811 = vst.msk [vmem:[#allocation3 + $0x10] sm:$0xff] %vm151, %v741
    %812 = vst.msk [vmem:[#allocation3 + $0x18] sm:$0xff] %vm151, %v746
    %813 = vst.msk [vmem:[#allocation3 + $0x20] sm:$0xff] %vm151, %v751
    %814 = vst.msk [vmem:[#allocation3 + $0x28] sm:$0xff] %vm151, %v756
    %815 = vst.msk [vmem:[#allocation3 + $0x30] sm:$0xff] %vm151, %v761
    %816 = vst.msk [vmem:[#allocation3 + $0x38] sm:$0xff] %vm151, %v766
    %817 = vst.msk [vmem:[#allocation3 + $0x40] sm:$0xff] %vm151, %v771
    %818 = vst.msk [vmem:[#allocation3 + $0x48] sm:$0xff] %vm151, %v776
    %819 = vst.msk [vmem:[#allocation3 + $0x50] sm:$0xff] %vm151, %v781
    %820 = vst.msk [vmem:[#allocation3 + $0x58] sm:$0xff] %vm151, %v786
    %821 = vst.msk [vmem:[#allocation3 + $0x60] sm:$0xff] %vm151, %v791
    %822 = vst.msk [vmem:[#allocation3 + $0x68] sm:$0xff] %vm151, %v796
    %823 = vst.msk [vmem:[#allocation3 + $0x70] sm:$0xff] %vm151, %v801
    %824 = vst.msk [vmem:[#allocation3 + $0x78] sm:$0xff] %vm151, %v806
    %v825 = vld [vmem:[%s2] sm:$0xff]
    %v826 = vld [vmem:[%s2 + $0x8] sm:$0xff]
    %v827 = vld [vmem:[%s2 + $0x10] sm:$0xff]
    %v828 = vld [vmem:[%s2 + $0x18] sm:$0xff]
    %v829 = vld [vmem:[%s2 + $0x20] sm:$0xff]
    %v830 = vld [vmem:[%s2 + $0x28] sm:$0xff]
    %v831 = vld [vmem:[%s2 + $0x30] sm:$0xff]
    %v832 = vld [vmem:[%s2 + $0x38] sm:$0xff]
    %v833 = vld [vmem:[%s2 + $0x40] sm:$0xff]
    %v834 = vld [vmem:[%s2 + $0x48] sm:$0xff]
    %v835 = vld [vmem:[%s2 + $0x50] sm:$0xff]
    %v836 = vld [vmem:[%s2 + $0x58] sm:$0xff]
    %v837 = vld [vmem:[%s2 + $0x60] sm:$0xff]
    %v838 = vld [vmem:[%s2 + $0x68] sm:$0xff]
    %v839 = vld [vmem:[%s2 + $0x70] sm:$0xff]
    %v840 = vld [vmem:[%s2 + $0x78] sm:$0xff]
    %v841 = vld [vmem:[#allocation3] sm:$0xff]
    %v842 = vld [vmem:[#allocation3 + $0x8] sm:$0xff]
    %v843 = vld [vmem:[#allocation3 + $0x10] sm:$0xff]
    %v844 = vld [vmem:[#allocation3 + $0x18] sm:$0xff]
    %v845 = vld [vmem:[#allocation3 + $0x20] sm:$0xff]
    %v846 = vld [vmem:[#allocation3 + $0x28] sm:$0xff]
    %v847 = vld [vmem:[#allocation3 + $0x30] sm:$0xff]
    %v848 = vld [vmem:[#allocation3 + $0x38] sm:$0xff]
    %v849 = vld [vmem:[#allocation3 + $0x40] sm:$0xff]
    %v850 = vld [vmem:[#allocation3 + $0x48] sm:$0xff]
    %v851 = vld [vmem:[#allocation3 + $0x50] sm:$0xff]
    %v852 = vld [vmem:[#allocation3 + $0x58] sm:$0xff]
    %v853 = vld [vmem:[#allocation3 + $0x60] sm:$0xff]
    %v854 = vld [vmem:[#allocation3 + $0x68] sm:$0xff]
    %v855 = vld [vmem:[#allocation3 + $0x70] sm:$0xff]
    %v856 = vld [vmem:[#allocation3 + $0x78] sm:$0xff]
    %v857 = vsel %vm151, %v841, 0.0
    %858 = vadd.xlane.f32.xlu0 %v857
    %v859 = vpop.xlane.xlu0 %858
    %v860 = vsel %vm151, %v842, 0.0
    %861 = vadd.xlane.f32.xlu0 %v860
    %v862 = vpop.xlane.xlu0 %861
    %v863 = vsel %vm151, %v843, 0.0
    %864 = vadd.xlane.f32.xlu0 %v863
    %v865 = vpop.xlane.xlu0 %864
    %v866 = vsel %vm151, %v844, 0.0
    %867 = vadd.xlane.f32.xlu0 %v866
    %v868 = vpop.xlane.xlu0 %867
    %v869 = vsel %vm151, %v845, 0.0
    %870 = vadd.xlane.f32.xlu0 %v869
    %v871 = vpop.xlane.xlu0 %870
    %v872 = vsel %vm151, %v846, 0.0
    %873 = vadd.xlane.f32.xlu0 %v872
    %v874 = vpop.xlane.xlu0 %873
    %v875 = vsel %vm151, %v847, 0.0
    %876 = vadd.xlane.f32.xlu0 %v875
    %v877 = vpop.xlane.xlu0 %876
    %v878 = vsel %vm151, %v848, 0.0
    %879 = vadd.xlane.f32.xlu0 %v878
    %v880 = vpop.xlane.xlu0 %879
    %v881 = vsel %vm151, %v849, 0.0
    %882 = vadd.xlane.f32.xlu0 %v881
    %v883 = vpop.xlane.xlu0 %882
    %v884 = vsel %vm151, %v850, 0.0
    %885 = vadd.xlane.f32.xlu0 %v884
    %v886 = vpop.xlane.xlu0 %885
    %v887 = vsel %vm151, %v851, 0.0
    %888 = vadd.xlane.f32.xlu0 %v887
    %v889 = vpop.xlane.xlu0 %888
    %v890 = vsel %vm151, %v852, 0.0
    %891 = vadd.xlane.f32.xlu0 %v890
    %v892 = vpop.xlane.xlu0 %891
    %v893 = vsel %vm151, %v853, 0.0
    %894 = vadd.xlane.f32.xlu0 %v893
    %v895 = vpop.xlane.xlu0 %894
    %v896 = vsel %vm151, %v854, 0.0
    %897 = vadd.xlane.f32.xlu0 %v896
    %v898 = vpop.xlane.xlu0 %897
    %v899 = vsel %vm151, %v855, 0.0
    %900 = vadd.xlane.f32.xlu0 %v899
    %v901 = vpop.xlane.xlu0 %900
    %v902 = vsel %vm151, %v856, 0.0
    %903 = vadd.xlane.f32.xlu0 %v902
    %v904 = vpop.xlane.xlu0 %903
    %v905 = vmul.f32 %v859, 0.125
    %v906 = vmul.f32 %v862, 0.125
    %v907 = vmul.f32 %v865, 0.125
    %v908 = vmul.f32 %v868, 0.125
    %v909 = vmul.f32 %v871, 0.125
    %v910 = vmul.f32 %v874, 0.125
    %v911 = vmul.f32 %v877, 0.125
    %v912 = vmul.f32 %v880, 0.125
    %v913 = vmul.f32 %v883, 0.125
    %v914 = vmul.f32 %v886, 0.125
    %v915 = vmul.f32 %v889, 0.125
    %v916 = vmul.f32 %v892, 0.125
    %v917 = vmul.f32 %v895, 0.125
    %v918 = vmul.f32 %v898, 0.125
    %v919 = vmul.f32 %v901, 0.125
    %v920 = vmul.f32 %v904, 0.125
    %v921 = vsub.f32 %v841, %v905
    %v922 = vsub.f32 %v842, %v906
    %v923 = vsub.f32 %v843, %v907
    %v924 = vsub.f32 %v844, %v908
    %v925 = vsub.f32 %v845, %v909
    %v926 = vsub.f32 %v846, %v910
    %v927 = vsub.f32 %v847, %v911
    %v928 = vsub.f32 %v848, %v912
    %v929 = vsub.f32 %v849, %v913
    %v930 = vsub.f32 %v850, %v914
    %v931 = vsub.f32 %v851, %v915
    %v932 = vsub.f32 %v852, %v916
    %v933 = vsub.f32 %v853, %v917
    %v934 = vsub.f32 %v854, %v918
    %v935 = vsub.f32 %v855, %v919
    %v936 = vsub.f32 %v856, %v920
    %v937 = vmul.f32 %v921, %v921
    %v938 = vmul.f32 %v922, %v922
    %v939 = vmul.f32 %v923, %v923
    %v940 = vmul.f32 %v924, %v924
    %v941 = vmul.f32 %v925, %v925
    %v942 = vmul.f32 %v926, %v926
    %v943 = vmul.f32 %v927, %v927
    %v944 = vmul.f32 %v928, %v928
    %v945 = vmul.f32 %v929, %v929
    %v946 = vmul.f32 %v930, %v930
    %v947 = vmul.f32 %v931, %v931
    %v948 = vmul.f32 %v932, %v932
    %v949 = vmul.f32 %v933, %v933
    %v950 = vmul.f32 %v934, %v934
    %v951 = vmul.f32 %v935, %v935
    %v952 = vmul.f32 %v936, %v936
    %v953 = vsel %vm151, %v937, 0.0
    %954 = vadd.xlane.f32.xlu0 %v953
    %v955 = vpop.xlane.xlu0 %954
    %v956 = vsel %vm151, %v938, 0.0
    %957 = vadd.xlane.f32.xlu0 %v956
    %v958 = vpop.xlane.xlu0 %957
    %v959 = vsel %vm151, %v939, 0.0
    %960 = vadd.xlane.f32.xlu0 %v959
    %v961 = vpop.xlane.xlu0 %960
    %v962 = vsel %vm151, %v940, 0.0
    %963 = vadd.xlane.f32.xlu0 %v962
    %v964 = vpop.xlane.xlu0 %963
    %v965 = vsel %vm151, %v941, 0.0
    %966 = vadd.xlane.f32.xlu0 %v965
    %v967 = vpop.xlane.xlu0 %966
    %v968 = vsel %vm151, %v942, 0.0
    %969 = vadd.xlane.f32.xlu0 %v968
    %v970 = vpop.xlane.xlu0 %969
    %v971 = vsel %vm151, %v943, 0.0
    %972 = vadd.xlane.f32.xlu0 %v971
    %v973 = vpop.xlane.xlu0 %972
    %v974 = vsel %vm151, %v944, 0.0
    %975 = vadd.xlane.f32.xlu0 %v974
    %v976 = vpop.xlane.xlu0 %975
    %v977 = vsel %vm151, %v945, 0.0
    %978 = vadd.xlane.f32.xlu0 %v977
    %v979 = vpop.xlane.xlu0 %978
    %v980 = vsel %vm151, %v946, 0.0
    %981 = vadd.xlane.f32.xlu0 %v980
    %v982 = vpop.xlane.xlu0 %981
    %v983 = vsel %vm151, %v947, 0.0
    %984 = vadd.xlane.f32.xlu0 %v983
    %v985 = vpop.xlane.xlu0 %984
    %v986 = vsel %vm151, %v948, 0.0
    %987 = vadd.xlane.f32.xlu0 %v986
    %v988 = vpop.xlane.xlu0 %987
    %v989 = vsel %vm151, %v949, 0.0
    %990 = vadd.xlane.f32.xlu0 %v989
    %v991 = vpop.xlane.xlu0 %990
    %v992 = vsel %vm151, %v950, 0.0
    %993 = vadd.xlane.f32.xlu0 %v992
    %v994 = vpop.xlane.xlu0 %993
    %v995 = vsel %vm151, %v951, 0.0
    %996 = vadd.xlane.f32.xlu0 %v995
    %v997 = vpop.xlane.xlu0 %996
    %v998 = vsel %vm151, %v952, 0.0
    %999 = vadd.xlane.f32.xlu0 %v998
    %v1000 = vpop.xlane.xlu0 %999
    %v1001 = vmul.f32 %v955, 0.125
    %v1002 = vmul.f32 %v958, 0.125
    %v1003 = vmul.f32 %v961, 0.125
    %v1004 = vmul.f32 %v964, 0.125
    %v1005 = vmul.f32 %v967, 0.125
    %v1006 = vmul.f32 %v970, 0.125
    %v1007 = vmul.f32 %v973, 0.125
    %v1008 = vmul.f32 %v976, 0.125
    %v1009 = vmul.f32 %v979, 0.125
    %v1010 = vmul.f32 %v982, 0.125
    %v1011 = vmul.f32 %v985, 0.125
    %v1012 = vmul.f32 %v988, 0.125
    %v1013 = vmul.f32 %v991, 0.125
    %v1014 = vmul.f32 %v994, 0.125
    %v1015 = vmul.f32 %v997, 0.125
    %v1016 = vmul.f32 %v1000, 0.125
    %v1017 = vadd.f32 %v1001, 1e-05
    %v1018 = vadd.f32 %v1002, 1e-05
    %v1019 = vadd.f32 %v1003, 1e-05
    %v1020 = vadd.f32 %v1004, 1e-05
    %v1021 = vadd.f32 %v1005, 1e-05
    %v1022 = vadd.f32 %v1006, 1e-05
    %v1023 = vadd.f32 %v1007, 1e-05
    %v1024 = vadd.f32 %v1008, 1e-05
    %v1025 = vadd.f32 %v1009, 1e-05
    %v1026 = vadd.f32 %v1010, 1e-05
    %v1027 = vadd.f32 %v1011, 1e-05
    %v1028 = vadd.f32 %v1012, 1e-05
    %v1029 = vadd.f32 %v1013, 1e-05
    %v1030 = vadd.f32 %v1014, 1e-05
    %v1031 = vadd.f32 %v1015, 1e-05
    %v1032 = vadd.f32 %v1016, 1e-05
    %v1033 = vrsqrt.pop %v1017
    %v1034 = vrsqrt.pop %v1018
    %v1035 = vrsqrt.pop %v1019
    %v1036 = vrsqrt.pop %v1020
    %v1037 = vrsqrt.pop %v1021
    %v1038 = vrsqrt.pop %v1022
    %v1039 = vrsqrt.pop %v1023
    %v1040 = vrsqrt.pop %v1024
    %v1041 = vrsqrt.pop %v1025
    %v1042 = vrsqrt.pop %v1026
    %v1043 = vrsqrt.pop %v1027
    %v1044 = vrsqrt.pop %v1028
    %v1045 = vrsqrt.pop %v1029
    %v1046 = vrsqrt.pop %v1030
    %v1047 = vrsqrt.pop %v1031
    %v1048 = vrsqrt.pop %v1032
    %v1049 = vmul.f32 %v825, %v1033
    %v1050 = vmul.f32 %v826, %v1034
    %v1051 = vmul.f32 %v827, %v1035
    %v1052 = vmul.f32 %v828, %v1036
    %v1053 = vmul.f32 %v829, %v1037
    %v1054 = vmul.f32 %v830, %v1038
    %v1055 = vmul.f32 %v831, %v1039
    %v1056 = vmul.f32 %v832, %v1040
    %v1057 = vmul.f32 %v833, %v1041
    %v1058 = vmul.f32 %v834, %v1042
    %v1059 = vmul.f32 %v835, %v1043
    %v1060 = vmul.f32 %v836, %v1044
    %v1061 = vmul.f32 %v837, %v1045
    %v1062 = vmul.f32 %v838, %v1046
    %v1063 = vmul.f32 %v839, %v1047
    %v1064 = vmul.f32 %v840, %v1048
    %1066 = vset.pattern.permute.xlu0 2
    %1067 = vperm.xlu0 %1066, %v1049
    %v1068 = vpop.permute.xlu0 %1067
    %1071 = vset.pattern.permute.xlu0 2
    %1072 = vperm.xlu0 %1071, %v1050
    %v1073 = vpop.permute.xlu0 %1072
    %1076 = vset.pattern.permute.xlu0 2
    %1077 = vperm.xlu0 %1076, %v1051
    %v1078 = vpop.permute.xlu0 %1077
    %1081 = vset.pattern.permute.xlu0 2
    %1082 = vperm.xlu0 %1081, %v1052
    %v1083 = vpop.permute.xlu0 %1082
    %1086 = vset.pattern.permute.xlu0 2
    %1087 = vperm.xlu0 %1086, %v1053
    %v1088 = vpop.permute.xlu0 %1087
    %1091 = vset.pattern.permute.xlu0 2
    %1092 = vperm.xlu0 %1091, %v1054
    %v1093 = vpop.permute.xlu0 %1092
    %1096 = vset.pattern.permute.xlu0 2
    %1097 = vperm.xlu0 %1096, %v1055
    %v1098 = vpop.permute.xlu0 %1097
    %1101 = vset.pattern.permute.xlu0 2
    %1102 = vperm.xlu0 %1101, %v1056
    %v1103 = vpop.permute.xlu0 %1102
    %1106 = vset.pattern.permute.xlu0 2
    %1107 = vperm.xlu0 %1106, %v1057
    %v1108 = vpop.permute.xlu0 %1107
    %1111 = vset.pattern.permute.xlu0 2
    %1112 = vperm.xlu0 %1111, %v1058
    %v1113 = vpop.permute.xlu0 %1112
    %1116 = vset.pattern.permute.xlu0 2
    %1117 = vperm.xlu0 %1116, %v1059
    %v1118 = vpop.permute.xlu0 %1117
    %1121 = vset.pattern.permute.xlu0 2
    %1122 = vperm.xlu0 %1121, %v1060
    %v1123 = vpop.permute.xlu0 %1122
    %1126 = vset.pattern.permute.xlu0 2
    %1127 = vperm.xlu0 %1126, %v1061
    %v1128 = vpop.permute.xlu0 %1127
    %1131 = vset.pattern.permute.xlu0 2
    %1132 = vperm.xlu0 %1131, %v1062
    %v1133 = vpop.permute.xlu0 %1132
    %1136 = vset.pattern.permute.xlu0 2
    %1137 = vperm.xlu0 %1136, %v1063
    %v1138 = vpop.permute.xlu0 %1137
    %1141 = vset.pattern.permute.xlu0 2
    %1142 = vperm.xlu0 %1141, %v1064
    %v1143 = vpop.permute.xlu0 %1142
    %v1145 = vmul.f32 %v921, %v1068
    %v1146 = vmul.f32 %v922, %v1073
    %v1147 = vmul.f32 %v923, %v1078
    %v1148 = vmul.f32 %v924, %v1083
    %v1149 = vmul.f32 %v925, %v1088
    %v1150 = vmul.f32 %v926, %v1093
    %v1151 = vmul.f32 %v927, %v1098
    %v1152 = vmul.f32 %v928, %v1103
    %v1153 = vmul.f32 %v929, %v1108
    %v1154 = vmul.f32 %v930, %v1113
    %v1155 = vmul.f32 %v931, %v1118
    %v1156 = vmul.f32 %v932, %v1123
    %v1157 = vmul.f32 %v933, %v1128
    %v1158 = vmul.f32 %v934, %v1133
    %v1159 = vmul.f32 %v935, %v1138
    %v1160 = vmul.f32 %v936, %v1143
    %1162 = vset.pattern.permute.xlu0 7
    %1163 = vperm.xlu0 %1162, %v825
    %v1164 = vpop.permute.xlu0 %1163
    %1167 = vset.pattern.permute.xlu0 7
    %1168 = vperm.xlu0 %1167, %v826
    %v1169 = vpop.permute.xlu0 %1168
    %1172 = vset.pattern.permute.xlu0 7
    %1173 = vperm.xlu0 %1172, %v827
    %v1174 = vpop.permute.xlu0 %1173
    %1177 = vset.pattern.permute.xlu0 7
    %1178 = vperm.xlu0 %1177, %v828
    %v1179 = vpop.permute.xlu0 %1178
    %1182 = vset.pattern.permute.xlu0 7
    %1183 = vperm.xlu0 %1182, %v829
    %v1184 = vpop.permute.xlu0 %1183
    %1187 = vset.pattern.permute.xlu0 7
    %1188 = vperm.xlu0 %1187, %v830
    %v1189 = vpop.permute.xlu0 %1188
    %1192 = vset.pattern.permute.xlu0 7
    %1193 = vperm.xlu0 %1192, %v831
    %v1194 = vpop.permute.xlu0 %1193
    %1197 = vset.pattern.permute.xlu0 7
    %1198 = vperm.xlu0 %1197, %v832
    %v1199 = vpop.permute.xlu0 %1198
    %1202 = vset.pattern.permute.xlu0 7
    %1203 = vperm.xlu0 %1202, %v833
    %v1204 = vpop.permute.xlu0 %1203
    %1207 = vset.pattern.permute.xlu0 7
    %1208 = vperm.xlu0 %1207, %v834
    %v1209 = vpop.permute.xlu0 %1208
    %1212 = vset.pattern.permute.xlu0 7
    %1213 = vperm.xlu0 %1212, %v835
    %v1214 = vpop.permute.xlu0 %1213
    %1217 = vset.pattern.permute.xlu0 7
    %1218 = vperm.xlu0 %1217, %v836
    %v1219 = vpop.permute.xlu0 %1218
    %1222 = vset.pattern.permute.xlu0 7
    %1223 = vperm.xlu0 %1222, %v837
    %v1224 = vpop.permute.xlu0 %1223
    %1227 = vset.pattern.permute.xlu0 7
    %1228 = vperm.xlu0 %1227, %v838
    %v1229 = vpop.permute.xlu0 %1228
    %1232 = vset.pattern.permute.xlu0 7
    %1233 = vperm.xlu0 %1232, %v839
    %v1234 = vpop.permute.xlu0 %1233
    %1237 = vset.pattern.permute.xlu0 7
    %1238 = vperm.xlu0 %1237, %v840
    %v1239 = vpop.permute.xlu0 %1238
    %v1241 = vadd.f32 %v1145, %v1164
    %v1242 = vadd.f32 %v1146, %v1169
    %v1243 = vadd.f32 %v1147, %v1174
    %v1244 = vadd.f32 %v1148, %v1179
    %v1245 = vadd.f32 %v1149, %v1184
    %v1246 = vadd.f32 %v1150, %v1189
    %v1247 = vadd.f32 %v1151, %v1194
    %v1248 = vadd.f32 %v1152, %v1199
    %v1249 = vadd.f32 %v1153, %v1204
    %v1250 = vadd.f32 %v1154, %v1209
    %v1251 = vadd.f32 %v1155, %v1214
    %v1252 = vadd.f32 %v1156, %v1219
    %v1253 = vadd.f32 %v1157, %v1224
    %v1254 = vadd.f32 %v1158, %v1229
    %v1255 = vadd.f32 %v1159, %v1234
    %v1256 = vadd.f32 %v1160, %v1239
    %v1257 = vmax.f32 %v1241, 0.0
    %v1258 = vmax.f32 %v1242, 0.0
    %v1259 = vmax.f32 %v1243, 0.0
    %v1260 = vmax.f32 %v1244, 0.0
    %v1261 = vmax.f32 %v1245, 0.0
    %v1262 = vmax.f32 %v1246, 0.0
    %v1263 = vmax.f32 %v1247, 0.0
    %v1264 = vmax.f32 %v1248, 0.0
    %v1265 = vmax.f32 %v1249, 0.0
    %v1266 = vmax.f32 %v1250, 0.0
    %v1267 = vmax.f32 %v1251, 0.0
    %v1268 = vmax.f32 %v1252, 0.0
    %v1269 = vmax.f32 %v1253, 0.0
    %v1270 = vmax.f32 %v1254, 0.0
    %v1271 = vmax.f32 %v1255, 0.0
    %v1272 = vmax.f32 %v1256, 0.0
    %1273 = vst.msk [vmem:[#allocation3] sm:$0xff] %vm151, %v1257
    %1274 = vst.msk [vmem:[#allocation3 + $0x8] sm:$0xff] %vm151, %v1258
    %1275 = vst.msk [vmem:[#allocation3 + $0x10] sm:$0xff] %vm151, %v1259
    %1276 = vst.msk [vmem:[#allocation3 + $0x18] sm:$0xff] %vm151, %v1260
    %1277 = vst.msk [vmem:[#allocation3 + $0x20] sm:$0xff] %vm151, %v1261
    %1278 = vst.msk [vmem:[#allocation3 + $0x28] sm:$0xff] %vm151, %v1262
    %1279 = vst.msk [vmem:[#allocation3 + $0x30] sm:$0xff] %vm151, %v1263
    %1280 = vst.msk [vmem:[#allocation3 + $0x38] sm:$0xff] %vm151, %v1264
    %1281 = vst.msk [vmem:[#allocation3 + $0x40] sm:$0xff] %vm151, %v1265
    %1282 = vst.msk [vmem:[#allocation3 + $0x48] sm:$0xff] %vm151, %v1266
    %1283 = vst.msk [vmem:[#allocation3 + $0x50] sm:$0xff] %vm151, %v1267
    %1284 = vst.msk [vmem:[#allocation3 + $0x58] sm:$0xff] %vm151, %v1268
    %1285 = vst.msk [vmem:[#allocation3 + $0x60] sm:$0xff] %vm151, %v1269
    %1286 = vst.msk [vmem:[#allocation3 + $0x68] sm:$0xff] %vm151, %v1270
    %1287 = vst.msk [vmem:[#allocation3 + $0x70] sm:$0xff] %vm151, %v1271
    %1288 = vst.msk [vmem:[#allocation3 + $0x78] sm:$0xff] %vm151, %v1272
    %s1289 = scalar_lea.vmem [#allocation4], 128
    %v1290 = vld [vmem:[%s1289] sm:$0xff]
    %v1291 = vld [vmem:[%s1289 + $0x8] sm:$0xff]
    %v1292 = vld [vmem:[%s1289 + $0x10] sm:$0xff]
    %v1293 = vld [vmem:[%s1289 + $0x18] sm:$0xff]
    %v1294 = vld [vmem:[%s1289 + $0x20] sm:$0xff]
    %v1295 = vld [vmem:[%s1289 + $0x28] sm:$0xff]
    %v1296 = vld [vmem:[%s1289 + $0x30] sm:$0xff]
    %v1297 = vld [vmem:[%s1289 + $0x38] sm:$0xff]
    %v1298 = vld [vmem:[%s1289 + $0x40] sm:$0xff]
    %v1299 = vld [vmem:[%s1289 + $0x48] sm:$0xff]
    %v1300 = vld [vmem:[%s1289 + $0x50] sm:$0xff]
    %v1301 = vld [vmem:[%s1289 + $0x58] sm:$0xff]
    %v1302 = vld [vmem:[%s1289 + $0x60] sm:$0xff]
    %v1303 = vld [vmem:[%s1289 + $0x68] sm:$0xff]
    %v1304 = vld [vmem:[%s1289 + $0x70] sm:$0xff]
    %v1305 = vld [vmem:[%s1289 + $0x78] sm:$0xff]
    %v1306 = vld [vmem:[#allocation3] sm:$0xff]
    %v1307 = vld [vmem:[#allocation3 + $0x8] sm:$0xff]
    %v1308 = vld [vmem:[#allocation3 + $0x10] sm:$0xff]
    %v1309 = vld [vmem:[#allocation3 + $0x18] sm:$0xff]
    %v1310 = vld [vmem:[#allocation3 + $0x20] sm:$0xff]
    %v1311 = vld [vmem:[#allocation3 + $0x28] sm:$0xff]
    %v1312 = vld [vmem:[#allocation3 + $0x30] sm:$0xff]
    %v1313 = vld [vmem:[#allocation3 + $0x38] sm:$0xff]
    %v1314 = vld [vmem:[#allocation3 + $0x40] sm:$0xff]
    %v1315 = vld [vmem:[#allocation3 + $0x48] sm:$0xff]
    %v1316 = vld [vmem:[#allocation3 + $0x50] sm:$0xff]
    %v1317 = vld [vmem:[#allocation3 + $0x58] sm:$0xff]
    %v1318 = vld [vmem:[#allocation3 + $0x60] sm:$0xff]
    %v1319 = vld [vmem:[#allocation3 + $0x68] sm:$0xff]
    %v1320 = vld [vmem:[#allocation3 + $0x70] sm:$0xff]
    %v1321 = vld [vmem:[#allocation3 + $0x78] sm:$0xff]
    %1322 = vmatprep.subr.mxu0 0.0
    %1323 = vmatpush1.msra.mxu0 %v1306
    %1324 = vmatprep.subr.mxu0 0.0
    %1325 = vmatpush1.msra.mxu0 %v1307
    %1326 = vmatprep.subr.mxu0 0.0
    %1327 = vmatpush1.msra.mxu0 %v1308
    %1328 = vmatprep.subr.mxu0 0.0
    %1329 = vmatpush1.msra.mxu0 %v1309
    %1330 = vmatprep.subr.mxu0 0.0
    %1331 = vmatpush1.msra.mxu0 %v1310
    %1332 = vmatprep.subr.mxu0 0.0
    %1333 = vmatpush1.msra.mxu0 %v1311
    %1334 = vmatprep.subr.mxu0 0.0
    %1335 = vmatpush1.msra.mxu0 %v1312
    %1336 = vmatprep.subr.mxu0 0.0
    %1337 = vmatpush1.msra.mxu0 %v1313
    %1338 = vmatprep.subr.mxu0 0.0
    %1339 = vmatpush1.msra.mxu0 %v1314
    %1340 = vmatprep.subr.mxu0 0.0
    %1341 = vmatpush1.msra.mxu0 %v1315
    %1342 = vmatprep.subr.mxu0 0.0
    %1343 = vmatpush1.msra.mxu0 %v1316
    %1344 = vmatprep.subr.mxu0 0.0
    %1345 = vmatpush1.msra.mxu0 %v1317
    %1346 = vmatprep.subr.mxu0 0.0
    %1347 = vmatpush1.msra.mxu0 %v1318
    %1348 = vmatprep.subr.mxu0 0.0
    %1349 = vmatpush1.msra.mxu0 %v1319
    %1350 = vmatprep.subr.mxu0 0.0
    %1351 = vmatpush1.msra.mxu0 %v1320
    %1352 = vmatprep.subr.mxu0 0.0
    %1353 = vmatpush1.msra.mxu0 %v1321
    %1354 = vmatprep.subr.mxu0 0.0
    %1355 = vmatpush1.msra.mxu0 0.0
    %1356 = vmatprep.subr.mxu0 0.0
    %1357 = vmatpush1.msra.mxu0 0.0
    %1358 = vmatprep.subr.mxu0 0.0
    %1359 = vmatpush1.msra.mxu0 0.0
    %1360 = vmatprep.subr.mxu0 0.0
    %1361 = vmatpush1.msra.mxu0 0.0
    %1362 = vmatprep.subr.mxu0 0.0
    %1363 = vmatpush1.msra.mxu0 0.0
    %1364 = vmatprep.subr.mxu0 0.0
    %1365 = vmatpush1.msra.mxu0 0.0
    %1366 = vmatprep.subr.mxu0 0.0
    %1367 = vmatpush1.msra.mxu0 0.0
    %1368 = vmatprep.subr.mxu0 0.0
    %1369 = vmatpush1.msra.mxu0 0.0
    %1370 = vmatprep.subr.mxu0 0.0
    %1371 = vmatpush1.msra.mxu0 0.0
    %1372 = vmatprep.subr.mxu0 0.0
    %1373 = vmatpush1.msra.mxu0 0.0
    %1374 = vmatprep.subr.mxu0 0.0
    %1375 = vmatpush1.msra.mxu0 0.0
    %1376 = vmatprep.subr.mxu0 0.0
    %1377 = vmatpush1.msra.mxu0 0.0
    %1378 = vmatprep.subr.mxu0 0.0
    %1379 = vmatpush1.msra.mxu0 0.0
    %1380 = vmatprep.subr.mxu0 0.0
    %1381 = vmatpush1.msra.mxu0 0.0
    %1382 = vmatprep.subr.mxu0 0.0
    %1383 = vmatpush1.msra.mxu0 0.0
    %1384 = vmatprep.subr.mxu0 0.0
    %1385 = vmatpush1.msra.mxu0 0.0
    %1386 = vmatprep.mubr.f32.mxu0 0.0
    %1387 = vmatmul.mubr.f32.gmra.mrb[0].mxu0 %v1290
    %v1388 = vpop.f32.mrb[0].mxu0
    %v1389 = vadd.f32 0.0, %v1388
    %v1390 = vpop.f32.mrb[0].mxu0
    %1391 = vmatprep.mubr.f32.mxu0 0.0
    %1392 = vmatmul.mubr.f32.gmra.mrb[0].mxu0 %v1291
    %v1393 = vpop.f32.mrb[0].mxu0
    %v1394 = vadd.f32 0.0, %v1393
    %v1395 = vpop.f32.mrb[0].mxu0
    %1396 = vmatprep.mubr.f32.mxu0 0.0
    %1397 = vmatmul.mubr.f32.gmra.mrb[0].mxu0 %v1292
    %v1398 = vpop.f32.mrb[0].mxu0
    %v1399 = vadd.f32 0.0, %v1398
    %v1400 = vpop.f32.mrb[0].mxu0
    %1401 = vmatprep.mubr.f32.mxu0 0.0
    %1402 = vmatmul.mubr.f32.gmra.mrb[0].mxu0 %v1293
    %v1403 = vpop.f32.mrb[0].mxu0
    %v1404 = vadd.f32 0.0, %v1403
    %v1405 = vpop.f32.mrb[0].mxu0
    %1406 = vmatprep.mubr.f32.mxu0 0.0
    %1407 = vmatmul.mubr.f32.gmra.mrb[0].mxu0 %v1294
    %v1408 = vpop.f32.mrb[0].mxu0
    %v1409 = vadd.f32 0.0, %v1408
    %v1410 = vpop.f32.mrb[0].mxu0
    %1411 = vmatprep.mubr.f32.mxu0 0.0
    %1412 = vmatmul.mubr.f32.gmra.mrb[0].mxu0 %v1295
    %v1413 = vpop.f32.mrb[0].mxu0
    %v1414 = vadd.f32 0.0, %v1413
    %v1415 = vpop.f32.mrb[0].mxu0
    %1416 = vmatprep.mubr.f32.mxu0 0.0
    %1417 = vmatmul.mubr.f32.gmra.mrb[0].mxu0 %v1296
    %v1418 = vpop.f32.mrb[0].mxu0
    %v1419 = vadd.f32 0.0, %v1418
    %v1420 = vpop.f32.mrb[0].mxu0
    %1421 = vmatprep.mubr.f32.mxu0 0.0
    %1422 = vmatmul.mubr.f32.gmra.mrb[0].mxu0 %v1297
    %v1423 = vpop.f32.mrb[0].mxu0
    %v1424 = vadd.f32 0.0, %v1423
    %v1425 = vpop.f32.mrb[0].mxu0
    %1426 = vmatprep.mubr.f32.mxu0 0.0
    %1427 = vmatmul.mubr.f32.gmra.mrb[0].mxu0 %v1298
    %v1428 = vpop.f32.mrb[0].mxu0
    %v1429 = vadd.f32 0.0, %v1428
    %v1430 = vpop.f32.mrb[0].mxu0
    %1431 = vmatprep.mubr.f32.mxu0 0.0
    %1432 = vmatmul.mubr.f32.gmra.mrb[0].mxu0 %v1299
    %v1433 = vpop.f32.mrb[0].mxu0
    %v1434 = vadd.f32 0.0, %v1433
    %v1435 = vpop.f32.mrb[0].mxu0
    %1436 = vmatprep.mubr.f32.mxu0 0.0
    %1437 = vmatmul.mubr.f32.gmra.mrb[0].mxu0 %v1300
    %v1438 = vpop.f32.mrb[0].mxu0
    %v1439 = vadd.f32 0.0, %v1438
    %v1440 = vpop.f32.mrb[0].mxu0
    %1441 = vmatprep.mubr.f32.mxu0 0.0
    %1442 = vmatmul.mubr.f32.gmra.mrb[0].mxu0 %v1301
    %v1443 = vpop.f32.mrb[0].mxu0
    %v1444 = vadd.f32 0.0, %v1443
    %v1445 = vpop.f32.mrb[0].mxu0
    %1446 = vmatprep.mubr.f32.mxu0 0.0
    %1447 = vmatmul.mubr.f32.gmra.mrb[0].mxu0 %v1302
    %v1448 = vpop.f32.mrb[0].mxu0
    %v1449 = vadd.f32 0.0, %v1448
    %v1450 = vpop.f32.mrb[0].mxu0
    %1451 = vmatprep.mubr.f32.mxu0 0.0
    %1452 = vmatmul.mubr.f32.gmra.mrb[0].mxu0 %v1303
    %v1453 = vpop.f32.mrb[0].mxu0
    %v1454 = vadd.f32 0.0, %v1453
    %v1455 = vpop.f32.mrb[0].mxu0
    %1456 = vmatprep.mubr.f32.mxu0 0.0
    %1457 = vmatmul.mubr.f32.gmra.mrb[0].mxu0 %v1304
    %v1458 = vpop.f32.mrb[0].mxu0
    %v1459 = vadd.f32 0.0, %v1458
    %v1460 = vpop.f32.mrb[0].mxu0
    %1461 = vmatprep.mubr.f32.mxu0 0.0
    %1462 = vmatmul.mubr.f32.gmra.mrb[0].mxu0 %v1305
    %v1463 = vpop.f32.mrb[0].mxu0
    %v1464 = vadd.f32 0.0, %v1463
    %v1465 = vpop.f32.mrb[0].mxu0
    %1466 = vdwg.mxu0
    %1467 = vst.msk [vmem:[#allocation2] sm:$0xff] %vm151, %v1389
    %1468 = vst.msk [vmem:[#allocation2 + $0x8] sm:$0xff] %vm151, %v1394
    %1469 = vst.msk [vmem:[#allocation2 + $0x10] sm:$0xff] %vm151, %v1399
    %1470 = vst.msk [vmem:[#allocation2 + $0x18] sm:$0xff] %vm151, %v1404
    %1471 = vst.msk [vmem:[#allocation2 + $0x20] sm:$0xff] %vm151, %v1409
    %1472 = vst.msk [vmem:[#allocation2 + $0x28] sm:$0xff] %vm151, %v1414
    %1473 = vst.msk [vmem:[#allocation2 + $0x30] sm:$0xff] %vm151, %v1419
    %1474 = vst.msk [vmem:[#allocation2 + $0x38] sm:$0xff] %vm151, %v1424
    %1475 = vst.msk [vmem:[#allocation2 + $0x40] sm:$0xff] %vm151, %v1429
    %1476 = vst.msk [vmem:[#allocation2 + $0x48] sm:$0xff] %vm151, %v1434
    %1477 = vst.msk [vmem:[#allocation2 + $0x50] sm:$0xff] %vm151, %v1439
    %1478 = vst.msk [vmem:[#allocation2 + $0x58] sm:$0xff] %vm151, %v1444
    %1479 = vst.msk [vmem:[#allocation2 + $0x60] sm:$0xff] %vm151, %v1449
    %1480 = vst.msk [vmem:[#allocation2 + $0x68] sm:$0xff] %vm151, %v1454
    %1481 = vst.msk [vmem:[#allocation2 + $0x70] sm:$0xff] %vm151, %v1459
    %1482 = vst.msk [vmem:[#allocation2 + $0x78] sm:$0xff] %vm151, %v1464
    %v1483 = vld [vmem:[%s2] sm:$0xff]
    %v1484 = vld [vmem:[%s2 + $0x8] sm:$0xff]
    %v1485 = vld [vmem:[%s2 + $0x10] sm:$0xff]
    %v1486 = vld [vmem:[%s2 + $0x18] sm:$0xff]
    %v1487 = vld [vmem:[%s2 + $0x20] sm:$0xff]
    %v1488 = vld [vmem:[%s2 + $0x28] sm:$0xff]
    %v1489 = vld [vmem:[%s2 + $0x30] sm:$0xff]
    %v1490 = vld [vmem:[%s2 + $0x38] sm:$0xff]
    %v1491 = vld [vmem:[%s2 + $0x40] sm:$0xff]
    %v1492 = vld [vmem:[%s2 + $0x48] sm:$0xff]
    %v1493 = vld [vmem:[%s2 + $0x50] sm:$0xff]
    %v1494 = vld [vmem:[%s2 + $0x58] sm:$0xff]
    %v1495 = vld [vmem:[%s2 + $0x60] sm:$0xff]
    %v1496 = vld [vmem:[%s2 + $0x68] sm:$0xff]
    %v1497 = vld [vmem:[%s2 + $0x70] sm:$0xff]
    %v1498 = vld [vmem:[%s2 + $0x78] sm:$0xff]
    %v1499 = vld [vmem:[#allocation2] sm:$0xff]
    %v1500 = vld [vmem:[#allocation2 + $0x8] sm:$0xff]
    %v1501 = vld [vmem:[#allocation2 + $0x10] sm:$0xff]
    %v1502 = vld [vmem:[#allocation2 + $0x18] sm:$0xff]
    %v1503 = vld [vmem:[#allocation2 + $0x20] sm:$0xff]
    %v1504 = vld [vmem:[#allocation2 + $0x28] sm:$0xff]
    %v1505 = vld [vmem:[#allocation2 + $0x30] sm:$0xff]
    %v1506 = vld [vmem:[#allocation2 + $0x38] sm:$0xff]
    %v1507 = vld [vmem:[#allocation2 + $0x40] sm:$0xff]
    %v1508 = vld [vmem:[#allocation2 + $0x48] sm:$0xff]
    %v1509 = vld [vmem:[#allocation2 + $0x50] sm:$0xff]
    %v1510 = vld [vmem:[#allocation2 + $0x58] sm:$0xff]
    %v1511 = vld [vmem:[#allocation2 + $0x60] sm:$0xff]
    %v1512 = vld [vmem:[#allocation2 + $0x68] sm:$0xff]
    %v1513 = vld [vmem:[#allocation2 + $0x70] sm:$0xff]
    %v1514 = vld [vmem:[#allocation2 + $0x78] sm:$0xff]
    %v1515 = vsel %vm151, %v1499, 0.0
    %1516 = vadd.xlane.f32.xlu0 %v1515
    %v1517 = vpop.xlane.xlu0 %1516
    %v1518 = vsel %vm151, %v1500, 0.0
    %1519 = vadd.xlane.f32.xlu0 %v1518
    %v1520 = vpop.xlane.xlu0 %1519
    %v1521 = vsel %vm151, %v1501, 0.0
    %1522 = vadd.xlane.f32.xlu0 %v1521
    %v1523 = vpop.xlane.xlu0 %1522
    %v1524 = vsel %vm151, %v1502, 0.0
    %1525 = vadd.xlane.f32.xlu0 %v1524
    %v1526 = vpop.xlane.xlu0 %1525
    %v1527 = vsel %vm151, %v1503, 0.0
    %1528 = vadd.xlane.f32.xlu0 %v1527
    %v1529 = vpop.xlane.xlu0 %1528
    %v1530 = vsel %vm151, %v1504, 0.0
    %1531 = vadd.xlane.f32.xlu0 %v1530
    %v1532 = vpop.xlane.xlu0 %1531
    %v1533 = vsel %vm151, %v1505, 0.0
    %1534 = vadd.xlane.f32.xlu0 %v1533
    %v1535 = vpop.xlane.xlu0 %1534
    %v1536 = vsel %vm151, %v1506, 0.0
    %1537 = vadd.xlane.f32.xlu0 %v1536
    %v1538 = vpop.xlane.xlu0 %1537
    %v1539 = vsel %vm151, %v1507, 0.0
    %1540 = vadd.xlane.f32.xlu0 %v1539
    %v1541 = vpop.xlane.xlu0 %1540
    %v1542 = vsel %vm151, %v1508, 0.0
    %1543 = vadd.xlane.f32.xlu0 %v1542
    %v1544 = vpop.xlane.xlu0 %1543
    %v1545 = vsel %vm151, %v1509, 0.0
    %1546 = vadd.xlane.f32.xlu0 %v1545
    %v1547 = vpop.xlane.xlu0 %1546
    %v1548 = vsel %vm151, %v1510, 0.0
    %1549 = vadd.xlane.f32.xlu0 %v1548
    %v1550 = vpop.xlane.xlu0 %1549
    %v1551 = vsel %vm151, %v1511, 0.0
    %1552 = vadd.xlane.f32.xlu0 %v1551
    %v1553 = vpop.xlane.xlu0 %1552
    %v1554 = vsel %vm151, %v1512, 0.0
    %1555 = vadd.xlane.f32.xlu0 %v1554
    %v1556 = vpop.xlane.xlu0 %1555
    %v1557 = vsel %vm151, %v1513, 0.0
    %1558 = vadd.xlane.f32.xlu0 %v1557
    %v1559 = vpop.xlane.xlu0 %1558
    %v1560 = vsel %vm151, %v1514, 0.0
    %1561 = vadd.xlane.f32.xlu0 %v1560
    %v1562 = vpop.xlane.xlu0 %1561
    %v1563 = vmul.f32 %v1517, 0.125
    %v1564 = vmul.f32 %v1520, 0.125
    %v1565 = vmul.f32 %v1523, 0.125
    %v1566 = vmul.f32 %v1526, 0.125
    %v1567 = vmul.f32 %v1529, 0.125
    %v1568 = vmul.f32 %v1532, 0.125
    %v1569 = vmul.f32 %v1535, 0.125
    %v1570 = vmul.f32 %v1538, 0.125
    %v1571 = vmul.f32 %v1541, 0.125
    %v1572 = vmul.f32 %v1544, 0.125
    %v1573 = vmul.f32 %v1547, 0.125
    %v1574 = vmul.f32 %v1550, 0.125
    %v1575 = vmul.f32 %v1553, 0.125
    %v1576 = vmul.f32 %v1556, 0.125
    %v1577 = vmul.f32 %v1559, 0.125
    %v1578 = vmul.f32 %v1562, 0.125
    %v1579 = vsub.f32 %v1499, %v1563
    %v1580 = vsub.f32 %v1500, %v1564
    %v1581 = vsub.f32 %v1501, %v1565
    %v1582 = vsub.f32 %v1502, %v1566
    %v1583 = vsub.f32 %v1503, %v1567
    %v1584 = vsub.f32 %v1504, %v1568
    %v1585 = vsub.f32 %v1505, %v1569
    %v1586 = vsub.f32 %v1506, %v1570
    %v1587 = vsub.f32 %v1507, %v1571
    %v1588 = vsub.f32 %v1508, %v1572
    %v1589 = vsub.f32 %v1509, %v1573
    %v1590 = vsub.f32 %v1510, %v1574
    %v1591 = vsub.f32 %v1511, %v1575
    %v1592 = vsub.f32 %v1512, %v1576
    %v1593 = vsub.f32 %v1513, %v1577
    %v1594 = vsub.f32 %v1514, %v1578
    %v1595 = vmul.f32 %v1579, %v1579
    %v1596 = vmul.f32 %v1580, %v1580
    %v1597 = vmul.f32 %v1581, %v1581
    %v1598 = vmul.f32 %v1582, %v1582
    %v1599 = vmul.f32 %v1583, %v1583
    %v1600 = vmul.f32 %v1584, %v1584
    %v1601 = vmul.f32 %v1585, %v1585
    %v1602 = vmul.f32 %v1586, %v1586
    %v1603 = vmul.f32 %v1587, %v1587
    %v1604 = vmul.f32 %v1588, %v1588
    %v1605 = vmul.f32 %v1589, %v1589
    %v1606 = vmul.f32 %v1590, %v1590
    %v1607 = vmul.f32 %v1591, %v1591
    %v1608 = vmul.f32 %v1592, %v1592
    %v1609 = vmul.f32 %v1593, %v1593
    %v1610 = vmul.f32 %v1594, %v1594
    %v1611 = vsel %vm151, %v1595, 0.0
    %1612 = vadd.xlane.f32.xlu0 %v1611
    %v1613 = vpop.xlane.xlu0 %1612
    %v1614 = vsel %vm151, %v1596, 0.0
    %1615 = vadd.xlane.f32.xlu0 %v1614
    %v1616 = vpop.xlane.xlu0 %1615
    %v1617 = vsel %vm151, %v1597, 0.0
    %1618 = vadd.xlane.f32.xlu0 %v1617
    %v1619 = vpop.xlane.xlu0 %1618
    %v1620 = vsel %vm151, %v1598, 0.0
    %1621 = vadd.xlane.f32.xlu0 %v1620
    %v1622 = vpop.xlane.xlu0 %1621
    %v1623 = vsel %vm151, %v1599, 0.0
    %1624 = vadd.xlane.f32.xlu0 %v1623
    %v1625 = vpop.xlane.xlu0 %1624
    %v1626 = vsel %vm151, %v1600, 0.0
    %1627 = vadd.xlane.f32.xlu0 %v1626
    %v1628 = vpop.xlane.xlu0 %1627
    %v1629 = vsel %vm151, %v1601, 0.0
    %1630 = vadd.xlane.f32.xlu0 %v1629
    %v1631 = vpop.xlane.xlu0 %1630
    %v1632 = vsel %vm151, %v1602, 0.0
    %1633 = vadd.xlane.f32.xlu0 %v1632
    %v1634 = vpop.xlane.xlu0 %1633
    %v1635 = vsel %vm151, %v1603, 0.0
    %1636 = vadd.xlane.f32.xlu0 %v1635
    %v1637 = vpop.xlane.xlu0 %1636
    %v1638 = vsel %vm151, %v1604, 0.0
    %1639 = vadd.xlane.f32.xlu0 %v1638
    %v1640 = vpop.xlane.xlu0 %1639
    %v1641 = vsel %vm151, %v1605, 0.0
    %1642 = vadd.xlane.f32.xlu0 %v1641
    %v1643 = vpop.xlane.xlu0 %1642
    %v1644 = vsel %vm151, %v1606, 0.0
    %1645 = vadd.xlane.f32.xlu0 %v1644
    %v1646 = vpop.xlane.xlu0 %1645
    %v1647 = vsel %vm151, %v1607, 0.0
    %1648 = vadd.xlane.f32.xlu0 %v1647
    %v1649 = vpop.xlane.xlu0 %1648
    %v1650 = vsel %vm151, %v1608, 0.0
    %1651 = vadd.xlane.f32.xlu0 %v1650
    %v1652 = vpop.xlane.xlu0 %1651
    %v1653 = vsel %vm151, %v1609, 0.0
    %1654 = vadd.xlane.f32.xlu0 %v1653
    %v1655 = vpop.xlane.xlu0 %1654
    %v1656 = vsel %vm151, %v1610, 0.0
    %1657 = vadd.xlane.f32.xlu0 %v1656
    %v1658 = vpop.xlane.xlu0 %1657
    %v1659 = vmul.f32 %v1613, 0.125
    %v1660 = vmul.f32 %v1616, 0.125
    %v1661 = vmul.f32 %v1619, 0.125
    %v1662 = vmul.f32 %v1622, 0.125
    %v1663 = vmul.f32 %v1625, 0.125
    %v1664 = vmul.f32 %v1628, 0.125
    %v1665 = vmul.f32 %v1631, 0.125
    %v1666 = vmul.f32 %v1634, 0.125
    %v1667 = vmul.f32 %v1637, 0.125
    %v1668 = vmul.f32 %v1640, 0.125
    %v1669 = vmul.f32 %v1643, 0.125
    %v1670 = vmul.f32 %v1646, 0.125
    %v1671 = vmul.f32 %v1649, 0.125
    %v1672 = vmul.f32 %v1652, 0.125
    %v1673 = vmul.f32 %v1655, 0.125
    %v1674 = vmul.f32 %v1658, 0.125
    %v1675 = vadd.f32 %v1659, 1e-05
    %v1676 = vadd.f32 %v1660, 1e-05
    %v1677 = vadd.f32 %v1661, 1e-05
    %v1678 = vadd.f32 %v1662, 1e-05
    %v1679 = vadd.f32 %v1663, 1e-05
    %v1680 = vadd.f32 %v1664, 1e-05
    %v1681 = vadd.f32 %v1665, 1e-05
    %v1682 = vadd.f32 %v1666, 1e-05
    %v1683 = vadd.f32 %v1667, 1e-05
    %v1684 = vadd.f32 %v1668, 1e-05
    %v1685 = vadd.f32 %v1669, 1e-05
    %v1686 = vadd.f32 %v1670, 1e-05
    %v1687 = vadd.f32 %v1671, 1e-05
    %v1688 = vadd.f32 %v1672, 1e-05
    %v1689 = vadd.f32 %v1673, 1e-05
    %v1690 = vadd.f32 %v1674, 1e-05
    %v1691 = vrsqrt.pop %v1675
    %v1692 = vrsqrt.pop %v1676
    %v1693 = vrsqrt.pop %v1677
    %v1694 = vrsqrt.pop %v1678
    %v1695 = vrsqrt.pop %v1679
    %v1696 = vrsqrt.pop %v1680
    %v1697 = vrsqrt.pop %v1681
    %v1698 = vrsqrt.pop %v1682
    %v1699 = vrsqrt.pop %v1683
    %v1700 = vrsqrt.pop %v1684
    %v1701 = vrsqrt.pop %v1685
    %v1702 = vrsqrt.pop %v1686
    %v1703 = vrsqrt.pop %v1687
    %v1704 = vrsqrt.pop %v1688
    %v1705 = vrsqrt.pop %v1689
    %v1706 = vrsqrt.pop %v1690
    %v1707 = vmul.f32 %v1483, %v1691
    %v1708 = vmul.f32 %v1484, %v1692
    %v1709 = vmul.f32 %v1485, %v1693
    %v1710 = vmul.f32 %v1486, %v1694
    %v1711 = vmul.f32 %v1487, %v1695
    %v1712 = vmul.f32 %v1488, %v1696
    %v1713 = vmul.f32 %v1489, %v1697
    %v1714 = vmul.f32 %v1490, %v1698
    %v1715 = vmul.f32 %v1491, %v1699
    %v1716 = vmul.f32 %v1492, %v1700
    %v1717 = vmul.f32 %v1493, %v1701
    %v1718 = vmul.f32 %v1494, %v1702
    %v1719 = vmul.f32 %v1495, %v1703
    %v1720 = vmul.f32 %v1496, %v1704
    %v1721 = vmul.f32 %v1497, %v1705
    %v1722 = vmul.f32 %v1498, %v1706
    %1724 = vset.pattern.permute.xlu0 3
    %1725 = vperm.xlu0 %1724, %v1707
    %v1726 = vpop.permute.xlu0 %1725
    %1729 = vset.pattern.permute.xlu0 3
    %1730 = vperm.xlu0 %1729, %v1708
    %v1731 = vpop.permute.xlu0 %1730
    %1734 = vset.pattern.permute.xlu0 3
    %1735 = vperm.xlu0 %1734, %v1709
    %v1736 = vpop.permute.xlu0 %1735
    %1739 = vset.pattern.permute.xlu0 3
    %1740 = vperm.xlu0 %1739, %v1710
    %v1741 = vpop.permute.xlu0 %1740
    %1744 = vset.pattern.permute.xlu0 3
    %1745 = vperm.xlu0 %1744, %v1711
    %v1746 = vpop.permute.xlu0 %1745
    %1749 = vset.pattern.permute.xlu0 3
    %1750 = vperm.xlu0 %1749, %v1712
    %v1751 = vpop.permute.xlu0 %1750
    %1754 = vset.pattern.permute.xlu0 3
    %1755 = vperm.xlu0 %1754, %v1713
    %v1756 = vpop.permute.xlu0 %1755
    %1759 = vset.pattern.permute.xlu0 3
    %1760 = vperm.xlu0 %1759, %v1714
    %v1761 = vpop.permute.xlu0 %1760
    %1764 = vset.pattern.permute.xlu0 3
    %1765 = vperm.xlu0 %1764, %v1715
    %v1766 = vpop.permute.xlu0 %1765
    %1769 = vset.pattern.permute.xlu0 3
    %1770 = vperm.xlu0 %1769, %v1716
    %v1771 = vpop.permute.xlu0 %1770
    %1774 = vset.pattern.permute.xlu0 3
    %1775 = vperm.xlu0 %1774, %v1717
    %v1776 = vpop.permute.xlu0 %1775
    %1779 = vset.pattern.permute.xlu0 3
    %1780 = vperm.xlu0 %1779, %v1718
    %v1781 = vpop.permute.xlu0 %1780
    %1784 = vset.pattern.permute.xlu0 3
    %1785 = vperm.xlu0 %1784, %v1719
    %v1786 = vpop.permute.xlu0 %1785
    %1789 = vset.pattern.permute.xlu0 3
    %1790 = vperm.xlu0 %1789, %v1720
    %v1791 = vpop.permute.xlu0 %1790
    %1794 = vset.pattern.permute.xlu0 3
    %1795 = vperm.xlu0 %1794, %v1721
    %v1796 = vpop.permute.xlu0 %1795
    %1799 = vset.pattern.permute.xlu0 3
    %1800 = vperm.xlu0 %1799, %v1722
    %v1801 = vpop.permute.xlu0 %1800
    %v1803 = vmul.f32 %v1579, %v1726
    %v1804 = vmul.f32 %v1580, %v1731
    %v1805 = vmul.f32 %v1581, %v1736
    %v1806 = vmul.f32 %v1582, %v1741
    %v1807 = vmul.f32 %v1583, %v1746
    %v1808 = vmul.f32 %v1584, %v1751
    %v1809 = vmul.f32 %v1585, %v1756
    %v1810 = vmul.f32 %v1586, %v1761
    %v1811 = vmul.f32 %v1587, %v1766
    %v1812 = vmul.f32 %v1588, %v1771
    %v1813 = vmul.f32 %v1589, %v1776
    %v1814 = vmul.f32 %v1590, %v1781
    %v1815 = vmul.f32 %v1591, %v1786
    %v1816 = vmul.f32 %v1592, %v1791
    %v1817 = vmul.f32 %v1593, %v1796
    %v1818 = vmul.f32 %v1594, %v1801
    %1820 = vset.pattern.permute.xlu0 8
    %1821 = vperm.xlu0 %1820, %v1483
    %v1822 = vpop.permute.xlu0 %1821
    %1825 = vset.pattern.permute.xlu0 8
    %1826 = vperm.xlu0 %1825, %v1484
    %v1827 = vpop.permute.xlu0 %1826
    %1830 = vset.pattern.permute.xlu0 8
    %1831 = vperm.xlu0 %1830, %v1485
    %v1832 = vpop.permute.xlu0 %1831
    %1835 = vset.pattern.permute.xlu0 8
    %1836 = vperm.xlu0 %1835, %v1486
    %v1837 = vpop.permute.xlu0 %1836
    %1840 = vset.pattern.permute.xlu0 8
    %1841 = vperm.xlu0 %1840, %v1487
    %v1842 = vpop.permute.xlu0 %1841
    %1845 = vset.pattern.permute.xlu0 8
    %1846 = vperm.xlu0 %1845, %v1488
    %v1847 = vpop.permute.xlu0 %1846
    %1850 = vset.pattern.permute.xlu0 8
    %1851 = vperm.xlu0 %1850, %v1489
    %v1852 = vpop.permute.xlu0 %1851
    %1855 = vset.pattern.permute.xlu0 8
    %1856 = vperm.xlu0 %1855, %v1490
    %v1857 = vpop.permute.xlu0 %1856
    %1860 = vset.pattern.permute.xlu0 8
    %1861 = vperm.xlu0 %1860, %v1491
    %v1862 = vpop.permute.xlu0 %1861
    %1865 = vset.pattern.permute.xlu0 8
    %1866 = vperm.xlu0 %1865, %v1492
    %v1867 = vpop.permute.xlu0 %1866
    %1870 = vset.pattern.permute.xlu0 8
    %1871 = vperm.xlu0 %1870, %v1493
    %v1872 = vpop.permute.xlu0 %1871
    %1875 = vset.pattern.permute.xlu0 8
    %1876 = vperm.xlu0 %1875, %v1494
    %v1877 = vpop.permute.xlu0 %1876
    %1880 = vset.pattern.permute.xlu0 8
    %1881 = vperm.xlu0 %1880, %v1495
    %v1882 = vpop.permute.xlu0 %1881
    %1885 = vset.pattern.permute.xlu0 8
    %1886 = vperm.xlu0 %1885, %v1496
    %v1887 = vpop.permute.xlu0 %1886
    %1890 = vset.pattern.permute.xlu0 8
    %1891 = vperm.xlu0 %1890, %v1497
    %v1892 = vpop.permute.xlu0 %1891
    %1895 = vset.pattern.permute.xlu0 8
    %1896 = vperm.xlu0 %1895, %v1498
    %v1897 = vpop.permute.xlu0 %1896
    %v1899 = vadd.f32 %v1803, %v1822
    %v1900 = vadd.f32 %v1804, %v1827
    %v1901 = vadd.f32 %v1805, %v1832
    %v1902 = vadd.f32 %v1806, %v1837
    %v1903 = vadd.f32 %v1807, %v1842
    %v1904 = vadd.f32 %v1808, %v1847
    %v1905 = vadd.f32 %v1809, %v1852
    %v1906 = vadd.f32 %v1810, %v1857
    %v1907 = vadd.f32 %v1811, %v1862
    %v1908 = vadd.f32 %v1812, %v1867
    %v1909 = vadd.f32 %v1813, %v1872
    %v1910 = vadd.f32 %v1814, %v1877
    %v1911 = vadd.f32 %v1815, %v1882
    %v1912 = vadd.f32 %v1816, %v1887
    %v1913 = vadd.f32 %v1817, %v1892
    %v1914 = vadd.f32 %v1818, %v1897
    %v1915 = vmax.f32 %v1899, 0.0
    %v1916 = vmax.f32 %v1900, 0.0
    %v1917 = vmax.f32 %v1901, 0.0
    %v1918 = vmax.f32 %v1902, 0.0
    %v1919 = vmax.f32 %v1903, 0.0
    %v1920 = vmax.f32 %v1904, 0.0
    %v1921 = vmax.f32 %v1905, 0.0
    %v1922 = vmax.f32 %v1906, 0.0
    %v1923 = vmax.f32 %v1907, 0.0
    %v1924 = vmax.f32 %v1908, 0.0
    %v1925 = vmax.f32 %v1909, 0.0
    %v1926 = vmax.f32 %v1910, 0.0
    %v1927 = vmax.f32 %v1911, 0.0
    %v1928 = vmax.f32 %v1912, 0.0
    %v1929 = vmax.f32 %v1913, 0.0
    %v1930 = vmax.f32 %v1914, 0.0
    %1931 = vst.msk [vmem:[#allocation2] sm:$0xff] %vm151, %v1915
    %1932 = vst.msk [vmem:[#allocation2 + $0x8] sm:$0xff] %vm151, %v1916
    %1933 = vst.msk [vmem:[#allocation2 + $0x10] sm:$0xff] %vm151, %v1917
    %1934 = vst.msk [vmem:[#allocation2 + $0x18] sm:$0xff] %vm151, %v1918
    %1935 = vst.msk [vmem:[#allocation2 + $0x20] sm:$0xff] %vm151, %v1919
    %1936 = vst.msk [vmem:[#allocation2 + $0x28] sm:$0xff] %vm151, %v1920
    %1937 = vst.msk [vmem:[#allocation2 + $0x30] sm:$0xff] %vm151, %v1921
    %1938 = vst.msk [vmem:[#allocation2 + $0x38] sm:$0xff] %vm151, %v1922
    %1939 = vst.msk [vmem:[#allocation2 + $0x40] sm:$0xff] %vm151, %v1923
    %1940 = vst.msk [vmem:[#allocation2 + $0x48] sm:$0xff] %vm151, %v1924
    %1941 = vst.msk [vmem:[#allocation2 + $0x50] sm:$0xff] %vm151, %v1925
    %1942 = vst.msk [vmem:[#allocation2 + $0x58] sm:$0xff] %vm151, %v1926
    %1943 = vst.msk [vmem:[#allocation2 + $0x60] sm:$0xff] %vm151, %v1927
    %1944 = vst.msk [vmem:[#allocation2 + $0x68] sm:$0xff] %vm151, %v1928
    %1945 = vst.msk [vmem:[#allocation2 + $0x70] sm:$0xff] %vm151, %v1929
    %1946 = vst.msk [vmem:[#allocation2 + $0x78] sm:$0xff] %vm151, %v1930
    %s1947 = scalar_lea.vmem [#allocation4], 256
    %v1948 = vld [vmem:[%s1947] sm:$0xff]
    %v1949 = vld [vmem:[%s1947 + $0x8] sm:$0xff]
    %v1950 = vld [vmem:[%s1947 + $0x10] sm:$0xff]
    %v1951 = vld [vmem:[%s1947 + $0x18] sm:$0xff]
    %v1952 = vld [vmem:[%s1947 + $0x20] sm:$0xff]
    %v1953 = vld [vmem:[%s1947 + $0x28] sm:$0xff]
    %v1954 = vld [vmem:[%s1947 + $0x30] sm:$0xff]
    %v1955 = vld [vmem:[%s1947 + $0x38] sm:$0xff]
    %v1956 = vld [vmem:[%s1947 + $0x40] sm:$0xff]
    %v1957 = vld [vmem:[%s1947 + $0x48] sm:$0xff]
    %v1958 = vld [vmem:[%s1947 + $0x50] sm:$0xff]
    %v1959 = vld [vmem:[%s1947 + $0x58] sm:$0xff]
    %v1960 = vld [vmem:[%s1947 + $0x60] sm:$0xff]
    %v1961 = vld [vmem:[%s1947 + $0x68] sm:$0xff]
    %v1962 = vld [vmem:[%s1947 + $0x70] sm:$0xff]
    %v1963 = vld [vmem:[%s1947 + $0x78] sm:$0xff]
    %v1964 = vld [vmem:[#allocation2] sm:$0xff]
    %v1965 = vld [vmem:[#allocation2 + $0x8] sm:$0xff]
    %v1966 = vld [vmem:[#allocation2 + $0x10] sm:$0xff]
    %v1967 = vld [vmem:[#allocation2 + $0x18] sm:$0xff]
    %v1968 = vld [vmem:[#allocation2 + $0x20] sm:$0xff]
    %v1969 = vld [vmem:[#allocation2 + $0x28] sm:$0xff]
    %v1970 = vld [vmem:[#allocation2 + $0x30] sm:$0xff]
    %v1971 = vld [vmem:[#allocation2 + $0x38] sm:$0xff]
    %v1972 = vld [vmem:[#allocation2 + $0x40] sm:$0xff]
    %v1973 = vld [vmem:[#allocation2 + $0x48] sm:$0xff]
    %v1974 = vld [vmem:[#allocation2 + $0x50] sm:$0xff]
    %v1975 = vld [vmem:[#allocation2 + $0x58] sm:$0xff]
    %v1976 = vld [vmem:[#allocation2 + $0x60] sm:$0xff]
    %v1977 = vld [vmem:[#allocation2 + $0x68] sm:$0xff]
    %v1978 = vld [vmem:[#allocation2 + $0x70] sm:$0xff]
    %v1979 = vld [vmem:[#allocation2 + $0x78] sm:$0xff]
    %1980 = vmatprep.subr.mxu0 0.0
    %1981 = vmatpush1.msra.mxu0 %v1964
    %1982 = vmatprep.subr.mxu0 0.0
    %1983 = vmatpush1.msra.mxu0 %v1965
    %1984 = vmatprep.subr.mxu0 0.0
    %1985 = vmatpush1.msra.mxu0 %v1966
    %1986 = vmatprep.subr.mxu0 0.0
    %1987 = vmatpush1.msra.mxu0 %v1967
    %1988 = vmatprep.subr.mxu0 0.0
    %1989 = vmatpush1.msra.mxu0 %v1968
    %1990 = vmatprep.subr.mxu0 0.0
    %1991 = vmatpush1.msra.mxu0 %v1969
    %1992 = vmatprep.subr.mxu0 0.0
    %1993 = vmatpush1.msra.mxu0 %v1970
    %1994 = vmatprep.subr.mxu0 0.0
    %1995 = vmatpush1.msra.mxu0 %v1971
    %1996 = vmatprep.subr.mxu0 0.0
    %1997 = vmatpush1.msra.mxu0 %v1972
    %1998 = vmatprep.subr.mxu0 0.0
    %1999 = vmatpush1.msra.mxu0 %v1973
    %2000 = vmatprep.subr.mxu0 0.0
    %2001 = vmatpush1.msra.mxu0 %v1974
    %2002 = vmatprep.subr.mxu0 0.0
    %2003 = vmatpush1.msra.mxu0 %v1975
    %2004 = vmatprep.subr.mxu0 0.0
    %2005 = vmatpush1.msra.mxu0 %v1976
    %2006 = vmatprep.subr.mxu0 0.0
    %2007 = vmatpush1.msra.mxu0 %v1977
    %2008 = vmatprep.subr.mxu0 0.0
    %2009 = vmatpush1.msra.mxu0 %v1978
    %2010 = vmatprep.subr.mxu0 0.0
    %2011 = vmatpush1.msra.mxu0 %v1979
    %2012 = vmatprep.subr.mxu0 0.0
    %2013 = vmatpush1.msra.mxu0 0.0
    %2014 = vmatprep.subr.mxu0 0.0
    %2015 = vmatpush1.msra.mxu0 0.0
    %2016 = vmatprep.subr.mxu0 0.0
    %2017 = vmatpush1.msra.mxu0 0.0
    %2018 = vmatprep.subr.mxu0 0.0
    %2019 = vmatpush1.msra.mxu0 0.0
    %2020 = vmatprep.subr.mxu0 0.0
    %2021 = vmatpush1.msra.mxu0 0.0
    %2022 = vmatprep.subr.mxu0 0.0
    %2023 = vmatpush1.msra.mxu0 0.0
    %2024 = vmatprep.subr.mxu0 0.0
    %2025 = vmatpush1.msra.mxu0 0.0
    %2026 = vmatprep.subr.mxu0 0.0
    %2027 = vmatpush1.msra.mxu0 0.0
    %2028 = vmatprep.subr.mxu0 0.0
    %2029 = vmatpush1.msra.mxu0 0.0
    %2030 = vmatprep.subr.mxu0 0.0
    %2031 = vmatpush1.msra.mxu0 0.0
    %2032 = vmatprep.subr.mxu0 0.0
    %2033 = vmatpush1.msra.mxu0 0.0
    %2034 = vmatprep.subr.mxu0 0.0
    %2035 = vmatpush1.msra.mxu0 0.0
    %2036 = vmatprep.subr.mxu0 0.0
    %2037 = vmatpush1.msra.mxu0 0.0
    %2038 = vmatprep.subr.mxu0 0.0
    %2039 = vmatpush1.msra.mxu0 0.0
    %2040 = vmatprep.subr.mxu0 0.0
    %2041 = vmatpush1.msra.mxu0 0.0
    %2042 = vmatprep.subr.mxu0 0.0
    %2043 = vmatpush1.msra.mxu0 0.0
    %2044 = vmatprep.mubr.f32.mxu0 0.0
    %2045 = vmatmul.mubr.f32.gmra.mrb[0].mxu0 %v1948
    %v2046 = vpop.f32.mrb[0].mxu0
    %v2047 = vadd.f32 0.0, %v2046
    %v2048 = vpop.f32.mrb[0].mxu0
    %2049 = vmatprep.mubr.f32.mxu0 0.0
    %2050 = vmatmul.mubr.f32.gmra.mrb[0].mxu0 %v1949
    %v2051 = vpop.f32.mrb[0].mxu0
    %v2052 = vadd.f32 0.0, %v2051
    %v2053 = vpop.f32.mrb[0].mxu0
    %2054 = vmatprep.mubr.f32.mxu0 0.0
    %2055 = vmatmul.mubr.f32.gmra.mrb[0].mxu0 %v1950
    %v2056 = vpop.f32.mrb[0].mxu0
    %v2057 = vadd.f32 0.0, %v2056
    %v2058 = vpop.f32.mrb[0].mxu0
    %2059 = vmatprep.mubr.f32.mxu0 0.0
    %2060 = vmatmul.mubr.f32.gmra.mrb[0].mxu0 %v1951
    %v2061 = vpop.f32.mrb[0].mxu0
    %v2062 = vadd.f32 0.0, %v2061
    %v2063 = vpop.f32.mrb[0].mxu0
    %2064 = vmatprep.mubr.f32.mxu0 0.0
    %2065 = vmatmul.mubr.f32.gmra.mrb[0].mxu0 %v1952
    %v2066 = vpop.f32.mrb[0].mxu0
    %v2067 = vadd.f32 0.0, %v2066
    %v2068 = vpop.f32.mrb[0].mxu0
    %2069 = vmatprep.mubr.f32.mxu0 0.0
    %2070 = vmatmul.mubr.f32.gmra.mrb[0].mxu0 %v1953
    %v2071 = vpop.f32.mrb[0].mxu0
    %v2072 = vadd.f32 0.0, %v2071
    %v2073 = vpop.f32.mrb[0].mxu0
    %2074 = vmatprep.mubr.f32.mxu0 0.0
    %2075 = vmatmul.mubr.f32.gmra.mrb[0].mxu0 %v1954
    %v2076 = vpop.f32.mrb[0].mxu0
    %v2077 = vadd.f32 0.0, %v2076
    %v2078 = vpop.f32.mrb[0].mxu0
    %2079 = vmatprep.mubr.f32.mxu0 0.0
    %2080 = vmatmul.mubr.f32.gmra.mrb[0].mxu0 %v1955
    %v2081 = vpop.f32.mrb[0].mxu0
    %v2082 = vadd.f32 0.0, %v2081
    %v2083 = vpop.f32.mrb[0].mxu0
    %2084 = vmatprep.mubr.f32.mxu0 0.0
    %2085 = vmatmul.mubr.f32.gmra.mrb[0].mxu0 %v1956
    %v2086 = vpop.f32.mrb[0].mxu0
    %v2087 = vadd.f32 0.0, %v2086
    %v2088 = vpop.f32.mrb[0].mxu0
    %2089 = vmatprep.mubr.f32.mxu0 0.0
    %2090 = vmatmul.mubr.f32.gmra.mrb[0].mxu0 %v1957
    %v2091 = vpop.f32.mrb[0].mxu0
    %v2092 = vadd.f32 0.0, %v2091
    %v2093 = vpop.f32.mrb[0].mxu0
    %2094 = vmatprep.mubr.f32.mxu0 0.0
    %2095 = vmatmul.mubr.f32.gmra.mrb[0].mxu0 %v1958
    %v2096 = vpop.f32.mrb[0].mxu0
    %v2097 = vadd.f32 0.0, %v2096
    %v2098 = vpop.f32.mrb[0].mxu0
    %2099 = vmatprep.mubr.f32.mxu0 0.0
    %2100 = vmatmul.mubr.f32.gmra.mrb[0].mxu0 %v1959
    %v2101 = vpop.f32.mrb[0].mxu0
    %v2102 = vadd.f32 0.0, %v2101
    %v2103 = vpop.f32.mrb[0].mxu0
    %2104 = vmatprep.mubr.f32.mxu0 0.0
    %2105 = vmatmul.mubr.f32.gmra.mrb[0].mxu0 %v1960
    %v2106 = vpop.f32.mrb[0].mxu0
    %v2107 = vadd.f32 0.0, %v2106
    %v2108 = vpop.f32.mrb[0].mxu0
    %2109 = vmatprep.mubr.f32.mxu0 0.0
    %2110 = vmatmul.mubr.f32.gmra.mrb[0].mxu0 %v1961
    %v2111 = vpop.f32.mrb[0].mxu0
    %v2112 = vadd.f32 0.0, %v2111
    %v2113 = vpop.f32.mrb[0].mxu0
    %2114 = vmatprep.mubr.f32.mxu0 0.0
    %2115 = vmatmul.mubr.f32.gmra.mrb[0].mxu0 %v1962
    %v2116 = vpop.f32.mrb[0].mxu0
    %v2117 = vadd.f32 0.0, %v2116
    %v2118 = vpop.f32.mrb[0].mxu0
    %2119 = vmatprep.mubr.f32.mxu0 0.0
    %2120 = vmatmul.mubr.f32.gmra.mrb[0].mxu0 %v1963
    %v2121 = vpop.f32.mrb[0].mxu0
    %v2122 = vadd.f32 0.0, %v2121
    %v2123 = vpop.f32.mrb[0].mxu0
    %2124 = vdwg.mxu0
    %2125 = vst.msk [vmem:[#allocation3] sm:$0xff] %vm151, %v2047
    %2126 = vst.msk [vmem:[#allocation3 + $0x8] sm:$0xff] %vm151, %v2052
    %2127 = vst.msk [vmem:[#allocation3 + $0x10] sm:$0xff] %vm151, %v2057
    %2128 = vst.msk [vmem:[#allocation3 + $0x18] sm:$0xff] %vm151, %v2062
    %2129 = vst.msk [vmem:[#allocation3 + $0x20] sm:$0xff] %vm151, %v2067
    %2130 = vst.msk [vmem:[#allocation3 + $0x28] sm:$0xff] %vm151, %v2072
    %2131 = vst.msk [vmem:[#allocation3 + $0x30] sm:$0xff] %vm151, %v2077
    %2132 = vst.msk [vmem:[#allocation3 + $0x38] sm:$0xff] %vm151, %v2082
    %2133 = vst.msk [vmem:[#allocation3 + $0x40] sm:$0xff] %vm151, %v2087
    %2134 = vst.msk [vmem:[#allocation3 + $0x48] sm:$0xff] %vm151, %v2092
    %2135 = vst.msk [vmem:[#allocation3 + $0x50] sm:$0xff] %vm151, %v2097
    %2136 = vst.msk [vmem:[#allocation3 + $0x58] sm:$0xff] %vm151, %v2102
    %2137 = vst.msk [vmem:[#allocation3 + $0x60] sm:$0xff] %vm151, %v2107
    %2138 = vst.msk [vmem:[#allocation3 + $0x68] sm:$0xff] %vm151, %v2112
    %2139 = vst.msk [vmem:[#allocation3 + $0x70] sm:$0xff] %vm151, %v2117
    %2140 = vst.msk [vmem:[#allocation3 + $0x78] sm:$0xff] %vm151, %v2122
    %v2141 = vld [vmem:[%s2] sm:$0xff]
    %v2142 = vld [vmem:[%s2 + $0x8] sm:$0xff]
    %v2143 = vld [vmem:[%s2 + $0x10] sm:$0xff]
    %v2144 = vld [vmem:[%s2 + $0x18] sm:$0xff]
    %v2145 = vld [vmem:[%s2 + $0x20] sm:$0xff]
    %v2146 = vld [vmem:[%s2 + $0x28] sm:$0xff]
    %v2147 = vld [vmem:[%s2 + $0x30] sm:$0xff]
    %v2148 = vld [vmem:[%s2 + $0x38] sm:$0xff]
    %v2149 = vld [vmem:[%s2 + $0x40] sm:$0xff]
    %v2150 = vld [vmem:[%s2 + $0x48] sm:$0xff]
    %v2151 = vld [vmem:[%s2 + $0x50] sm:$0xff]
    %v2152 = vld [vmem:[%s2 + $0x58] sm:$0xff]
    %v2153 = vld [vmem:[%s2 + $0x60] sm:$0xff]
    %v2154 = vld [vmem:[%s2 + $0x68] sm:$0xff]
    %v2155 = vld [vmem:[%s2 + $0x70] sm:$0xff]
    %v2156 = vld [vmem:[%s2 + $0x78] sm:$0xff]
    %v2157 = vld [vmem:[#allocation3] sm:$0xff]
    %v2158 = vld [vmem:[#allocation3 + $0x8] sm:$0xff]
    %v2159 = vld [vmem:[#allocation3 + $0x10] sm:$0xff]
    %v2160 = vld [vmem:[#allocation3 + $0x18] sm:$0xff]
    %v2161 = vld [vmem:[#allocation3 + $0x20] sm:$0xff]
    %v2162 = vld [vmem:[#allocation3 + $0x28] sm:$0xff]
    %v2163 = vld [vmem:[#allocation3 + $0x30] sm:$0xff]
    %v2164 = vld [vmem:[#allocation3 + $0x38] sm:$0xff]
    %v2165 = vld [vmem:[#allocation3 + $0x40] sm:$0xff]
    %v2166 = vld [vmem:[#allocation3 + $0x48] sm:$0xff]
    %v2167 = vld [vmem:[#allocation3 + $0x50] sm:$0xff]
    %v2168 = vld [vmem:[#allocation3 + $0x58] sm:$0xff]
    %v2169 = vld [vmem:[#allocation3 + $0x60] sm:$0xff]
    %v2170 = vld [vmem:[#allocation3 + $0x68] sm:$0xff]
    %v2171 = vld [vmem:[#allocation3 + $0x70] sm:$0xff]
    %v2172 = vld [vmem:[#allocation3 + $0x78] sm:$0xff]
    %v2173 = vsel %vm151, %v2157, 0.0
    %2174 = vadd.xlane.f32.xlu0 %v2173
    %v2175 = vpop.xlane.xlu0 %2174
    %v2176 = vsel %vm151, %v2158, 0.0
    %2177 = vadd.xlane.f32.xlu0 %v2176
    %v2178 = vpop.xlane.xlu0 %2177
    %v2179 = vsel %vm151, %v2159, 0.0
    %2180 = vadd.xlane.f32.xlu0 %v2179
    %v2181 = vpop.xlane.xlu0 %2180
    %v2182 = vsel %vm151, %v2160, 0.0
    %2183 = vadd.xlane.f32.xlu0 %v2182
    %v2184 = vpop.xlane.xlu0 %2183
    %v2185 = vsel %vm151, %v2161, 0.0
    %2186 = vadd.xlane.f32.xlu0 %v2185
    %v2187 = vpop.xlane.xlu0 %2186
    %v2188 = vsel %vm151, %v2162, 0.0
    %2189 = vadd.xlane.f32.xlu0 %v2188
    %v2190 = vpop.xlane.xlu0 %2189
    %v2191 = vsel %vm151, %v2163, 0.0
    %2192 = vadd.xlane.f32.xlu0 %v2191
    %v2193 = vpop.xlane.xlu0 %2192
    %v2194 = vsel %vm151, %v2164, 0.0
    %2195 = vadd.xlane.f32.xlu0 %v2194
    %v2196 = vpop.xlane.xlu0 %2195
    %v2197 = vsel %vm151, %v2165, 0.0
    %2198 = vadd.xlane.f32.xlu0 %v2197
    %v2199 = vpop.xlane.xlu0 %2198
    %v2200 = vsel %vm151, %v2166, 0.0
    %2201 = vadd.xlane.f32.xlu0 %v2200
    %v2202 = vpop.xlane.xlu0 %2201
    %v2203 = vsel %vm151, %v2167, 0.0
    %2204 = vadd.xlane.f32.xlu0 %v2203
    %v2205 = vpop.xlane.xlu0 %2204
    %v2206 = vsel %vm151, %v2168, 0.0
    %2207 = vadd.xlane.f32.xlu0 %v2206
    %v2208 = vpop.xlane.xlu0 %2207
    %v2209 = vsel %vm151, %v2169, 0.0
    %2210 = vadd.xlane.f32.xlu0 %v2209
    %v2211 = vpop.xlane.xlu0 %2210
    %v2212 = vsel %vm151, %v2170, 0.0
    %2213 = vadd.xlane.f32.xlu0 %v2212
    %v2214 = vpop.xlane.xlu0 %2213
    %v2215 = vsel %vm151, %v2171, 0.0
    %2216 = vadd.xlane.f32.xlu0 %v2215
    %v2217 = vpop.xlane.xlu0 %2216
    %v2218 = vsel %vm151, %v2172, 0.0
    %2219 = vadd.xlane.f32.xlu0 %v2218
    %v2220 = vpop.xlane.xlu0 %2219
    %v2221 = vmul.f32 %v2175, 0.125
    %v2222 = vmul.f32 %v2178, 0.125
    %v2223 = vmul.f32 %v2181, 0.125
    %v2224 = vmul.f32 %v2184, 0.125
    %v2225 = vmul.f32 %v2187, 0.125
    %v2226 = vmul.f32 %v2190, 0.125
    %v2227 = vmul.f32 %v2193, 0.125
    %v2228 = vmul.f32 %v2196, 0.125
    %v2229 = vmul.f32 %v2199, 0.125
    %v2230 = vmul.f32 %v2202, 0.125
    %v2231 = vmul.f32 %v2205, 0.125
    %v2232 = vmul.f32 %v2208, 0.125
    %v2233 = vmul.f32 %v2211, 0.125
    %v2234 = vmul.f32 %v2214, 0.125
    %v2235 = vmul.f32 %v2217, 0.125
    %v2236 = vmul.f32 %v2220, 0.125
    %v2237 = vsub.f32 %v2157, %v2221
    %v2238 = vsub.f32 %v2158, %v2222
    %v2239 = vsub.f32 %v2159, %v2223
    %v2240 = vsub.f32 %v2160, %v2224
    %v2241 = vsub.f32 %v2161, %v2225
    %v2242 = vsub.f32 %v2162, %v2226
    %v2243 = vsub.f32 %v2163, %v2227
    %v2244 = vsub.f32 %v2164, %v2228
    %v2245 = vsub.f32 %v2165, %v2229
    %v2246 = vsub.f32 %v2166, %v2230
    %v2247 = vsub.f32 %v2167, %v2231
    %v2248 = vsub.f32 %v2168, %v2232
    %v2249 = vsub.f32 %v2169, %v2233
    %v2250 = vsub.f32 %v2170, %v2234
    %v2251 = vsub.f32 %v2171, %v2235
    %v2252 = vsub.f32 %v2172, %v2236
    %v2253 = vmul.f32 %v2237, %v2237
    %v2254 = vmul.f32 %v2238, %v2238
    %v2255 = vmul.f32 %v2239, %v2239
    %v2256 = vmul.f32 %v2240, %v2240
    %v2257 = vmul.f32 %v2241, %v2241
    %v2258 = vmul.f32 %v2242, %v2242
    %v2259 = vmul.f32 %v2243, %v2243
    %v2260 = vmul.f32 %v2244, %v2244
    %v2261 = vmul.f32 %v2245, %v2245
    %v2262 = vmul.f32 %v2246, %v2246
    %v2263 = vmul.f32 %v2247, %v2247
    %v2264 = vmul.f32 %v2248, %v2248
    %v2265 = vmul.f32 %v2249, %v2249
    %v2266 = vmul.f32 %v2250, %v2250
    %v2267 = vmul.f32 %v2251, %v2251
    %v2268 = vmul.f32 %v2252, %v2252
    %v2269 = vsel %vm151, %v2253, 0.0
    %2270 = vadd.xlane.f32.xlu0 %v2269
    %v2271 = vpop.xlane.xlu0 %2270
    %v2272 = vsel %vm151, %v2254, 0.0
    %2273 = vadd.xlane.f32.xlu0 %v2272
    %v2274 = vpop.xlane.xlu0 %2273
    %v2275 = vsel %vm151, %v2255, 0.0
    %2276 = vadd.xlane.f32.xlu0 %v2275
    %v2277 = vpop.xlane.xlu0 %2276
    %v2278 = vsel %vm151, %v2256, 0.0
    %2279 = vadd.xlane.f32.xlu0 %v2278
    %v2280 = vpop.xlane.xlu0 %2279
    %v2281 = vsel %vm151, %v2257, 0.0
    %2282 = vadd.xlane.f32.xlu0 %v2281
    %v2283 = vpop.xlane.xlu0 %2282
    %v2284 = vsel %vm151, %v2258, 0.0
    %2285 = vadd.xlane.f32.xlu0 %v2284
    %v2286 = vpop.xlane.xlu0 %2285
    %v2287 = vsel %vm151, %v2259, 0.0
    %2288 = vadd.xlane.f32.xlu0 %v2287
    %v2289 = vpop.xlane.xlu0 %2288
    %v2290 = vsel %vm151, %v2260, 0.0
    %2291 = vadd.xlane.f32.xlu0 %v2290
    %v2292 = vpop.xlane.xlu0 %2291
    %v2293 = vsel %vm151, %v2261, 0.0
    %2294 = vadd.xlane.f32.xlu0 %v2293
    %v2295 = vpop.xlane.xlu0 %2294
    %v2296 = vsel %vm151, %v2262, 0.0
    %2297 = vadd.xlane.f32.xlu0 %v2296
    %v2298 = vpop.xlane.xlu0 %2297
    %v2299 = vsel %vm151, %v2263, 0.0
    %2300 = vadd.xlane.f32.xlu0 %v2299
    %v2301 = vpop.xlane.xlu0 %2300
    %v2302 = vsel %vm151, %v2264, 0.0
    %2303 = vadd.xlane.f32.xlu0 %v2302
    %v2304 = vpop.xlane.xlu0 %2303
    %v2305 = vsel %vm151, %v2265, 0.0
    %2306 = vadd.xlane.f32.xlu0 %v2305
    %v2307 = vpop.xlane.xlu0 %2306
    %v2308 = vsel %vm151, %v2266, 0.0
    %2309 = vadd.xlane.f32.xlu0 %v2308
    %v2310 = vpop.xlane.xlu0 %2309
    %v2311 = vsel %vm151, %v2267, 0.0
    %2312 = vadd.xlane.f32.xlu0 %v2311
    %v2313 = vpop.xlane.xlu0 %2312
    %v2314 = vsel %vm151, %v2268, 0.0
    %2315 = vadd.xlane.f32.xlu0 %v2314
    %v2316 = vpop.xlane.xlu0 %2315
    %v2317 = vmul.f32 %v2271, 0.125
    %v2318 = vmul.f32 %v2274, 0.125
    %v2319 = vmul.f32 %v2277, 0.125
    %v2320 = vmul.f32 %v2280, 0.125
    %v2321 = vmul.f32 %v2283, 0.125
    %v2322 = vmul.f32 %v2286, 0.125
    %v2323 = vmul.f32 %v2289, 0.125
    %v2324 = vmul.f32 %v2292, 0.125
    %v2325 = vmul.f32 %v2295, 0.125
    %v2326 = vmul.f32 %v2298, 0.125
    %v2327 = vmul.f32 %v2301, 0.125
    %v2328 = vmul.f32 %v2304, 0.125
    %v2329 = vmul.f32 %v2307, 0.125
    %v2330 = vmul.f32 %v2310, 0.125
    %v2331 = vmul.f32 %v2313, 0.125
    %v2332 = vmul.f32 %v2316, 0.125
    %v2333 = vadd.f32 %v2317, 1e-05
    %v2334 = vadd.f32 %v2318, 1e-05
    %v2335 = vadd.f32 %v2319, 1e-05
    %v2336 = vadd.f32 %v2320, 1e-05
    %v2337 = vadd.f32 %v2321, 1e-05
    %v2338 = vadd.f32 %v2322, 1e-05
    %v2339 = vadd.f32 %v2323, 1e-05
    %v2340 = vadd.f32 %v2324, 1e-05
    %v2341 = vadd.f32 %v2325, 1e-05
    %v2342 = vadd.f32 %v2326, 1e-05
    %v2343 = vadd.f32 %v2327, 1e-05
    %v2344 = vadd.f32 %v2328, 1e-05
    %v2345 = vadd.f32 %v2329, 1e-05
    %v2346 = vadd.f32 %v2330, 1e-05
    %v2347 = vadd.f32 %v2331, 1e-05
    %v2348 = vadd.f32 %v2332, 1e-05
    %v2349 = vrsqrt.pop %v2333
    %v2350 = vrsqrt.pop %v2334
    %v2351 = vrsqrt.pop %v2335
    %v2352 = vrsqrt.pop %v2336
    %v2353 = vrsqrt.pop %v2337
    %v2354 = vrsqrt.pop %v2338
    %v2355 = vrsqrt.pop %v2339
    %v2356 = vrsqrt.pop %v2340
    %v2357 = vrsqrt.pop %v2341
    %v2358 = vrsqrt.pop %v2342
    %v2359 = vrsqrt.pop %v2343
    %v2360 = vrsqrt.pop %v2344
    %v2361 = vrsqrt.pop %v2345
    %v2362 = vrsqrt.pop %v2346
    %v2363 = vrsqrt.pop %v2347
    %v2364 = vrsqrt.pop %v2348
    %v2365 = vmul.f32 %v2141, %v2349
    %v2366 = vmul.f32 %v2142, %v2350
    %v2367 = vmul.f32 %v2143, %v2351
    %v2368 = vmul.f32 %v2144, %v2352
    %v2369 = vmul.f32 %v2145, %v2353
    %v2370 = vmul.f32 %v2146, %v2354
    %v2371 = vmul.f32 %v2147, %v2355
    %v2372 = vmul.f32 %v2148, %v2356
    %v2373 = vmul.f32 %v2149, %v2357
    %v2374 = vmul.f32 %v2150, %v2358
    %v2375 = vmul.f32 %v2151, %v2359
    %v2376 = vmul.f32 %v2152, %v2360
    %v2377 = vmul.f32 %v2153, %v2361
    %v2378 = vmul.f32 %v2154, %v2362
    %v2379 = vmul.f32 %v2155, %v2363
    %v2380 = vmul.f32 %v2156, %v2364
    %2382 = vset.pattern.permute.xlu0 4
    %2383 = vperm.xlu0 %2382, %v2365
    %v2384 = vpop.permute.xlu0 %2383
    %2387 = vset.pattern.permute.xlu0 4
    %2388 = vperm.xlu0 %2387, %v2366
    %v2389 = vpop.permute.xlu0 %2388
    %2392 = vset.pattern.permute.xlu0 4
    %2393 = vperm.xlu0 %2392, %v2367
    %v2394 = vpop.permute.xlu0 %2393
    %2397 = vset.pattern.permute.xlu0 4
    %2398 = vperm.xlu0 %2397, %v2368
    %v2399 = vpop.permute.xlu0 %2398
    %2402 = vset.pattern.permute.xlu0 4
    %2403 = vperm.xlu0 %2402, %v2369
    %v2404 = vpop.permute.xlu0 %2403
    %2407 = vset.pattern.permute.xlu0 4
    %2408 = vperm.xlu0 %2407, %v2370
    %v2409 = vpop.permute.xlu0 %2408
    %2412 = vset.pattern.permute.xlu0 4
    %2413 = vperm.xlu0 %2412, %v2371
    %v2414 = vpop.permute.xlu0 %2413
    %2417 = vset.pattern.permute.xlu0 4
    %2418 = vperm.xlu0 %2417, %v2372
    %v2419 = vpop.permute.xlu0 %2418
    %2422 = vset.pattern.permute.xlu0 4
    %2423 = vperm.xlu0 %2422, %v2373
    %v2424 = vpop.permute.xlu0 %2423
    %2427 = vset.pattern.permute.xlu0 4
    %2428 = vperm.xlu0 %2427, %v2374
    %v2429 = vpop.permute.xlu0 %2428
    %2432 = vset.pattern.permute.xlu0 4
    %2433 = vperm.xlu0 %2432, %v2375
    %v2434 = vpop.permute.xlu0 %2433
    %2437 = vset.pattern.permute.xlu0 4
    %2438 = vperm.xlu0 %2437, %v2376
    %v2439 = vpop.permute.xlu0 %2438
    %2442 = vset.pattern.permute.xlu0 4
    %2443 = vperm.xlu0 %2442, %v2377
    %v2444 = vpop.permute.xlu0 %2443
    %2447 = vset.pattern.permute.xlu0 4
    %2448 = vperm.xlu0 %2447, %v2378
    %v2449 = vpop.permute.xlu0 %2448
    %2452 = vset.pattern.permute.xlu0 4
    %2453 = vperm.xlu0 %2452, %v2379
    %v2454 = vpop.permute.xlu0 %2453
    %2457 = vset.pattern.permute.xlu0 4
    %2458 = vperm.xlu0 %2457, %v2380
    %v2459 = vpop.permute.xlu0 %2458
    %v2461 = vmul.f32 %v2237, %v2384
    %v2462 = vmul.f32 %v2238, %v2389
    %v2463 = vmul.f32 %v2239, %v2394
    %v2464 = vmul.f32 %v2240, %v2399
    %v2465 = vmul.f32 %v2241, %v2404
    %v2466 = vmul.f32 %v2242, %v2409
    %v2467 = vmul.f32 %v2243, %v2414
    %v2468 = vmul.f32 %v2244, %v2419
    %v2469 = vmul.f32 %v2245, %v2424
    %v2470 = vmul.f32 %v2246, %v2429
    %v2471 = vmul.f32 %v2247, %v2434
    %v2472 = vmul.f32 %v2248, %v2439
    %v2473 = vmul.f32 %v2249, %v2444
    %v2474 = vmul.f32 %v2250, %v2449
    %v2475 = vmul.f32 %v2251, %v2454
    %v2476 = vmul.f32 %v2252, %v2459
    %2478 = vset.pattern.permute.xlu0 9
    %2479 = vperm.xlu0 %2478, %v2141
    %v2480 = vpop.permute.xlu0 %2479
    %2483 = vset.pattern.permute.xlu0 9
    %2484 = vperm.xlu0 %2483, %v2142
    %v2485 = vpop.permute.xlu0 %2484
    %2488 = vset.pattern.permute.xlu0 9
    %2489 = vperm.xlu0 %2488, %v2143
    %v2490 = vpop.permute.xlu0 %2489
    %2493 = vset.pattern.permute.xlu0 9
    %2494 = vperm.xlu0 %2493, %v2144
    %v2495 = vpop.permute.xlu0 %2494
    %2498 = vset.pattern.permute.xlu0 9
    %2499 = vperm.xlu0 %2498, %v2145
    %v2500 = vpop.permute.xlu0 %2499
    %2503 = vset.pattern.permute.xlu0 9
    %2504 = vperm.xlu0 %2503, %v2146
    %v2505 = vpop.permute.xlu0 %2504
    %2508 = vset.pattern.permute.xlu0 9
    %2509 = vperm.xlu0 %2508, %v2147
    %v2510 = vpop.permute.xlu0 %2509
    %2513 = vset.pattern.permute.xlu0 9
    %2514 = vperm.xlu0 %2513, %v2148
    %v2515 = vpop.permute.xlu0 %2514
    %2518 = vset.pattern.permute.xlu0 9
    %2519 = vperm.xlu0 %2518, %v2149
    %v2520 = vpop.permute.xlu0 %2519
    %2523 = vset.pattern.permute.xlu0 9
    %2524 = vperm.xlu0 %2523, %v2150
    %v2525 = vpop.permute.xlu0 %2524
    %2528 = vset.pattern.permute.xlu0 9
    %2529 = vperm.xlu0 %2528, %v2151
    %v2530 = vpop.permute.xlu0 %2529
    %2533 = vset.pattern.permute.xlu0 9
    %2534 = vperm.xlu0 %2533, %v2152
    %v2535 = vpop.permute.xlu0 %2534
    %2538 = vset.pattern.permute.xlu0 9
    %2539 = vperm.xlu0 %2538, %v2153
    %v2540 = vpop.permute.xlu0 %2539
    %2543 = vset.pattern.permute.xlu0 9
    %2544 = vperm.xlu0 %2543, %v2154
    %v2545 = vpop.permute.xlu0 %2544
    %2548 = vset.pattern.permute.xlu0 9
    %2549 = vperm.xlu0 %2548, %v2155
    %v2550 = vpop.permute.xlu0 %2549
    %2553 = vset.pattern.permute.xlu0 9
    %2554 = vperm.xlu0 %2553, %v2156
    %v2555 = vpop.permute.xlu0 %2554
    %v2557 = vadd.f32 %v2461, %v2480
    %v2558 = vadd.f32 %v2462, %v2485
    %v2559 = vadd.f32 %v2463, %v2490
    %v2560 = vadd.f32 %v2464, %v2495
    %v2561 = vadd.f32 %v2465, %v2500
    %v2562 = vadd.f32 %v2466, %v2505
    %v2563 = vadd.f32 %v2467, %v2510
    %v2564 = vadd.f32 %v2468, %v2515
    %v2565 = vadd.f32 %v2469, %v2520
    %v2566 = vadd.f32 %v2470, %v2525
    %v2567 = vadd.f32 %v2471, %v2530
    %v2568 = vadd.f32 %v2472, %v2535
    %v2569 = vadd.f32 %v2473, %v2540
    %v2570 = vadd.f32 %v2474, %v2545
    %v2571 = vadd.f32 %v2475, %v2550
    %v2572 = vadd.f32 %v2476, %v2555
    %v2573 = vmax.f32 %v2557, 0.0
    %v2574 = vmax.f32 %v2558, 0.0
    %v2575 = vmax.f32 %v2559, 0.0
    %v2576 = vmax.f32 %v2560, 0.0
    %v2577 = vmax.f32 %v2561, 0.0
    %v2578 = vmax.f32 %v2562, 0.0
    %v2579 = vmax.f32 %v2563, 0.0
    %v2580 = vmax.f32 %v2564, 0.0
    %v2581 = vmax.f32 %v2565, 0.0
    %v2582 = vmax.f32 %v2566, 0.0
    %v2583 = vmax.f32 %v2567, 0.0
    %v2584 = vmax.f32 %v2568, 0.0
    %v2585 = vmax.f32 %v2569, 0.0
    %v2586 = vmax.f32 %v2570, 0.0
    %v2587 = vmax.f32 %v2571, 0.0
    %v2588 = vmax.f32 %v2572, 0.0
    %2589 = vst.msk [vmem:[#allocation3] sm:$0xff] %vm151, %v2573
    %2590 = vst.msk [vmem:[#allocation3 + $0x8] sm:$0xff] %vm151, %v2574
    %2591 = vst.msk [vmem:[#allocation3 + $0x10] sm:$0xff] %vm151, %v2575
    %2592 = vst.msk [vmem:[#allocation3 + $0x18] sm:$0xff] %vm151, %v2576
    %2593 = vst.msk [vmem:[#allocation3 + $0x20] sm:$0xff] %vm151, %v2577
    %2594 = vst.msk [vmem:[#allocation3 + $0x28] sm:$0xff] %vm151, %v2578
    %2595 = vst.msk [vmem:[#allocation3 + $0x30] sm:$0xff] %vm151, %v2579
    %2596 = vst.msk [vmem:[#allocation3 + $0x38] sm:$0xff] %vm151, %v2580
    %2597 = vst.msk [vmem:[#allocation3 + $0x40] sm:$0xff] %vm151, %v2581
    %2598 = vst.msk [vmem:[#allocation3 + $0x48] sm:$0xff] %vm151, %v2582
    %2599 = vst.msk [vmem:[#allocation3 + $0x50] sm:$0xff] %vm151, %v2583
    %2600 = vst.msk [vmem:[#allocation3 + $0x58] sm:$0xff] %vm151, %v2584
    %2601 = vst.msk [vmem:[#allocation3 + $0x60] sm:$0xff] %vm151, %v2585
    %2602 = vst.msk [vmem:[#allocation3 + $0x68] sm:$0xff] %vm151, %v2586
    %2603 = vst.msk [vmem:[#allocation3 + $0x70] sm:$0xff] %vm151, %v2587
    %2604 = vst.msk [vmem:[#allocation3 + $0x78] sm:$0xff] %vm151, %v2588
    %s2605 = scalar_lea.vmem [#allocation4], 384
    %v2606 = vld [vmem:[%s2605] sm:$0xff]
    %v2607 = vld [vmem:[%s2605 + $0x8] sm:$0xff]
    %v2608 = vld [vmem:[%s2605 + $0x10] sm:$0xff]
    %v2609 = vld [vmem:[%s2605 + $0x18] sm:$0xff]
    %v2610 = vld [vmem:[%s2605 + $0x20] sm:$0xff]
    %v2611 = vld [vmem:[%s2605 + $0x28] sm:$0xff]
    %v2612 = vld [vmem:[%s2605 + $0x30] sm:$0xff]
    %v2613 = vld [vmem:[%s2605 + $0x38] sm:$0xff]
    %v2614 = vld [vmem:[%s2605 + $0x40] sm:$0xff]
    %v2615 = vld [vmem:[%s2605 + $0x48] sm:$0xff]
    %v2616 = vld [vmem:[%s2605 + $0x50] sm:$0xff]
    %v2617 = vld [vmem:[%s2605 + $0x58] sm:$0xff]
    %v2618 = vld [vmem:[%s2605 + $0x60] sm:$0xff]
    %v2619 = vld [vmem:[%s2605 + $0x68] sm:$0xff]
    %v2620 = vld [vmem:[%s2605 + $0x70] sm:$0xff]
    %v2621 = vld [vmem:[%s2605 + $0x78] sm:$0xff]
    %v2622 = vld [vmem:[#allocation3] sm:$0xff]
    %v2623 = vld [vmem:[#allocation3 + $0x8] sm:$0xff]
    %v2624 = vld [vmem:[#allocation3 + $0x10] sm:$0xff]
    %v2625 = vld [vmem:[#allocation3 + $0x18] sm:$0xff]
    %v2626 = vld [vmem:[#allocation3 + $0x20] sm:$0xff]
    %v2627 = vld [vmem:[#allocation3 + $0x28] sm:$0xff]
    %v2628 = vld [vmem:[#allocation3 + $0x30] sm:$0xff]
    %v2629 = vld [vmem:[#allocation3 + $0x38] sm:$0xff]
    %v2630 = vld [vmem:[#allocation3 + $0x40] sm:$0xff]
    %v2631 = vld [vmem:[#allocation3 + $0x48] sm:$0xff]
    %v2632 = vld [vmem:[#allocation3 + $0x50] sm:$0xff]
    %v2633 = vld [vmem:[#allocation3 + $0x58] sm:$0xff]
    %v2634 = vld [vmem:[#allocation3 + $0x60] sm:$0xff]
    %v2635 = vld [vmem:[#allocation3 + $0x68] sm:$0xff]
    %v2636 = vld [vmem:[#allocation3 + $0x70] sm:$0xff]
    %v2637 = vld [vmem:[#allocation3 + $0x78] sm:$0xff]
    %2638 = vmatprep.subr.mxu0 0.0
    %2639 = vmatpush1.msra.mxu0 %v2622
    %2640 = vmatprep.subr.mxu0 0.0
    %2641 = vmatpush1.msra.mxu0 %v2623
    %2642 = vmatprep.subr.mxu0 0.0
    %2643 = vmatpush1.msra.mxu0 %v2624
    %2644 = vmatprep.subr.mxu0 0.0
    %2645 = vmatpush1.msra.mxu0 %v2625
    %2646 = vmatprep.subr.mxu0 0.0
    %2647 = vmatpush1.msra.mxu0 %v2626
    %2648 = vmatprep.subr.mxu0 0.0
    %2649 = vmatpush1.msra.mxu0 %v2627
    %2650 = vmatprep.subr.mxu0 0.0
    %2651 = vmatpush1.msra.mxu0 %v2628
    %2652 = vmatprep.subr.mxu0 0.0
    %2653 = vmatpush1.msra.mxu0 %v2629
    %2654 = vmatprep.subr.mxu0 0.0
    %2655 = vmatpush1.msra.mxu0 %v2630
    %2656 = vmatprep.subr.mxu0 0.0
    %2657 = vmatpush1.msra.mxu0 %v2631
    %2658 = vmatprep.subr.mxu0 0.0
    %2659 = vmatpush1.msra.mxu0 %v2632
    %2660 = vmatprep.subr.mxu0 0.0
    %2661 = vmatpush1.msra.mxu0 %v2633
    %2662 = vmatprep.subr.mxu0 0.0
    %2663 = vmatpush1.msra.mxu0 %v2634
    %2664 = vmatprep.subr.mxu0 0.0
    %2665 = vmatpush1.msra.mxu0 %v2635
    %2666 = vmatprep.subr.mxu0 0.0
    %2667 = vmatpush1.msra.mxu0 %v2636
    %2668 = vmatprep.subr.mxu0 0.0
    %2669 = vmatpush1.msra.mxu0 %v2637
    %2670 = vmatprep.subr.mxu0 0.0
    %2671 = vmatpush1.msra.mxu0 0.0
    %2672 = vmatprep.subr.mxu0 0.0
    %2673 = vmatpush1.msra.mxu0 0.0
    %2674 = vmatprep.subr.mxu0 0.0
    %2675 = vmatpush1.msra.mxu0 0.0
    %2676 = vmatprep.subr.mxu0 0.0
    %2677 = vmatpush1.msra.mxu0 0.0
    %2678 = vmatprep.subr.mxu0 0.0
    %2679 = vmatpush1.msra.mxu0 0.0
    %2680 = vmatprep.subr.mxu0 0.0
    %2681 = vmatpush1.msra.mxu0 0.0
    %2682 = vmatprep.subr.mxu0 0.0
    %2683 = vmatpush1.msra.mxu0 0.0
    %2684 = vmatprep.subr.mxu0 0.0
    %2685 = vmatpush1.msra.mxu0 0.0
    %2686 = vmatprep.subr.mxu0 0.0
    %2687 = vmatpush1.msra.mxu0 0.0
    %2688 = vmatprep.subr.mxu0 0.0
    %2689 = vmatpush1.msra.mxu0 0.0
    %2690 = vmatprep.subr.mxu0 0.0
    %2691 = vmatpush1.msra.mxu0 0.0
    %2692 = vmatprep.subr.mxu0 0.0
    %2693 = vmatpush1.msra.mxu0 0.0
    %2694 = vmatprep.subr.mxu0 0.0
    %2695 = vmatpush1.msra.mxu0 0.0
    %2696 = vmatprep.subr.mxu0 0.0
    %2697 = vmatpush1.msra.mxu0 0.0
    %2698 = vmatprep.subr.mxu0 0.0
    %2699 = vmatpush1.msra.mxu0 0.0
    %2700 = vmatprep.subr.mxu0 0.0
    %2701 = vmatpush1.msra.mxu0 0.0
    %2702 = vmatprep.mubr.f32.mxu0 0.0
    %2703 = vmatmul.mubr.f32.gmra.mrb[0].mxu0 %v2606
    %v2704 = vpop.f32.mrb[0].mxu0
    %v2705 = vadd.f32 0.0, %v2704
    %v2706 = vpop.f32.mrb[0].mxu0
    %2707 = vmatprep.mubr.f32.mxu0 0.0
    %2708 = vmatmul.mubr.f32.gmra.mrb[0].mxu0 %v2607
    %v2709 = vpop.f32.mrb[0].mxu0
    %v2710 = vadd.f32 0.0, %v2709
    %v2711 = vpop.f32.mrb[0].mxu0
    %2712 = vmatprep.mubr.f32.mxu0 0.0
    %2713 = vmatmul.mubr.f32.gmra.mrb[0].mxu0 %v2608
    %v2714 = vpop.f32.mrb[0].mxu0
    %v2715 = vadd.f32 0.0, %v2714
    %v2716 = vpop.f32.mrb[0].mxu0
    %2717 = vmatprep.mubr.f32.mxu0 0.0
    %2718 = vmatmul.mubr.f32.gmra.mrb[0].mxu0 %v2609
    %v2719 = vpop.f32.mrb[0].mxu0
    %v2720 = vadd.f32 0.0, %v2719
    %v2721 = vpop.f32.mrb[0].mxu0
    %2722 = vmatprep.mubr.f32.mxu0 0.0
    %2723 = vmatmul.mubr.f32.gmra.mrb[0].mxu0 %v2610
    %v2724 = vpop.f32.mrb[0].mxu0
    %v2725 = vadd.f32 0.0, %v2724
    %v2726 = vpop.f32.mrb[0].mxu0
    %2727 = vmatprep.mubr.f32.mxu0 0.0
    %2728 = vmatmul.mubr.f32.gmra.mrb[0].mxu0 %v2611
    %v2729 = vpop.f32.mrb[0].mxu0
    %v2730 = vadd.f32 0.0, %v2729
    %v2731 = vpop.f32.mrb[0].mxu0
    %2732 = vmatprep.mubr.f32.mxu0 0.0
    %2733 = vmatmul.mubr.f32.gmra.mrb[0].mxu0 %v2612
    %v2734 = vpop.f32.mrb[0].mxu0
    %v2735 = vadd.f32 0.0, %v2734
    %v2736 = vpop.f32.mrb[0].mxu0
    %2737 = vmatprep.mubr.f32.mxu0 0.0
    %2738 = vmatmul.mubr.f32.gmra.mrb[0].mxu0 %v2613
    %v2739 = vpop.f32.mrb[0].mxu0
    %v2740 = vadd.f32 0.0, %v2739
    %v2741 = vpop.f32.mrb[0].mxu0
    %2742 = vmatprep.mubr.f32.mxu0 0.0
    %2743 = vmatmul.mubr.f32.gmra.mrb[0].mxu0 %v2614
    %v2744 = vpop.f32.mrb[0].mxu0
    %v2745 = vadd.f32 0.0, %v2744
    %v2746 = vpop.f32.mrb[0].mxu0
    %2747 = vmatprep.mubr.f32.mxu0 0.0
    %2748 = vmatmul.mubr.f32.gmra.mrb[0].mxu0 %v2615
    %v2749 = vpop.f32.mrb[0].mxu0
    %v2750 = vadd.f32 0.0, %v2749
    %v2751 = vpop.f32.mrb[0].mxu0
    %2752 = vmatprep.mubr.f32.mxu0 0.0
    %2753 = vmatmul.mubr.f32.gmra.mrb[0].mxu0 %v2616
    %v2754 = vpop.f32.mrb[0].mxu0
    %v2755 = vadd.f32 0.0, %v2754
    %v2756 = vpop.f32.mrb[0].mxu0
    %2757 = vmatprep.mubr.f32.mxu0 0.0
    %2758 = vmatmul.mubr.f32.gmra.mrb[0].mxu0 %v2617
    %v2759 = vpop.f32.mrb[0].mxu0
    %v2760 = vadd.f32 0.0, %v2759
    %v2761 = vpop.f32.mrb[0].mxu0
    %2762 = vmatprep.mubr.f32.mxu0 0.0
    %2763 = vmatmul.mubr.f32.gmra.mrb[0].mxu0 %v2618
    %v2764 = vpop.f32.mrb[0].mxu0
    %v2765 = vadd.f32 0.0, %v2764
    %v2766 = vpop.f32.mrb[0].mxu0
    %2767 = vmatprep.mubr.f32.mxu0 0.0
    %2768 = vmatmul.mubr.f32.gmra.mrb[0].mxu0 %v2619
    %v2769 = vpop.f32.mrb[0].mxu0
    %v2770 = vadd.f32 0.0, %v2769
    %v2771 = vpop.f32.mrb[0].mxu0
    %2772 = vmatprep.mubr.f32.mxu0 0.0
    %2773 = vmatmul.mubr.f32.gmra.mrb[0].mxu0 %v2620
    %v2774 = vpop.f32.mrb[0].mxu0
    %v2775 = vadd.f32 0.0, %v2774
    %v2776 = vpop.f32.mrb[0].mxu0
    %2777 = vmatprep.mubr.f32.mxu0 0.0
    %2778 = vmatmul.mubr.f32.gmra.mrb[0].mxu0 %v2621
    %v2779 = vpop.f32.mrb[0].mxu0
    %v2780 = vadd.f32 0.0, %v2779
    %v2781 = vpop.f32.mrb[0].mxu0
    %2782 = vdwg.mxu0
    %2783 = vst.msk [vmem:[#allocation2] sm:$0xff] %vm151, %v2705
    %2784 = vst.msk [vmem:[#allocation2 + $0x8] sm:$0xff] %vm151, %v2710
    %2785 = vst.msk [vmem:[#allocation2 + $0x10] sm:$0xff] %vm151, %v2715
    %2786 = vst.msk [vmem:[#allocation2 + $0x18] sm:$0xff] %vm151, %v2720
    %2787 = vst.msk [vmem:[#allocation2 + $0x20] sm:$0xff] %vm151, %v2725
    %2788 = vst.msk [vmem:[#allocation2 + $0x28] sm:$0xff] %vm151, %v2730
    %2789 = vst.msk [vmem:[#allocation2 + $0x30] sm:$0xff] %vm151, %v2735
    %2790 = vst.msk [vmem:[#allocation2 + $0x38] sm:$0xff] %vm151, %v2740
    %2791 = vst.msk [vmem:[#allocation2 + $0x40] sm:$0xff] %vm151, %v2745
    %2792 = vst.msk [vmem:[#allocation2 + $0x48] sm:$0xff] %vm151, %v2750
    %2793 = vst.msk [vmem:[#allocation2 + $0x50] sm:$0xff] %vm151, %v2755
    %2794 = vst.msk [vmem:[#allocation2 + $0x58] sm:$0xff] %vm151, %v2760
    %2795 = vst.msk [vmem:[#allocation2 + $0x60] sm:$0xff] %vm151, %v2765
    %2796 = vst.msk [vmem:[#allocation2 + $0x68] sm:$0xff] %vm151, %v2770
    %2797 = vst.msk [vmem:[#allocation2 + $0x70] sm:$0xff] %vm151, %v2775
    %2798 = vst.msk [vmem:[#allocation2 + $0x78] sm:$0xff] %vm151, %v2780
    %v2799 = vld [vmem:[%s2] sm:$0xff]
    %v2800 = vld [vmem:[%s2 + $0x8] sm:$0xff]
    %v2801 = vld [vmem:[%s2 + $0x10] sm:$0xff]
    %v2802 = vld [vmem:[%s2 + $0x18] sm:$0xff]
    %v2803 = vld [vmem:[%s2 + $0x20] sm:$0xff]
    %v2804 = vld [vmem:[%s2 + $0x28] sm:$0xff]
    %v2805 = vld [vmem:[%s2 + $0x30] sm:$0xff]
    %v2806 = vld [vmem:[%s2 + $0x38] sm:$0xff]
    %v2807 = vld [vmem:[%s2 + $0x40] sm:$0xff]
    %v2808 = vld [vmem:[%s2 + $0x48] sm:$0xff]
    %v2809 = vld [vmem:[%s2 + $0x50] sm:$0xff]
    %v2810 = vld [vmem:[%s2 + $0x58] sm:$0xff]
    %v2811 = vld [vmem:[%s2 + $0x60] sm:$0xff]
    %v2812 = vld [vmem:[%s2 + $0x68] sm:$0xff]
    %v2813 = vld [vmem:[%s2 + $0x70] sm:$0xff]
    %v2814 = vld [vmem:[%s2 + $0x78] sm:$0xff]
    %v2815 = vld [vmem:[#allocation2] sm:$0xff]
    %v2816 = vld [vmem:[#allocation2 + $0x8] sm:$0xff]
    %v2817 = vld [vmem:[#allocation2 + $0x10] sm:$0xff]
    %v2818 = vld [vmem:[#allocation2 + $0x18] sm:$0xff]
    %v2819 = vld [vmem:[#allocation2 + $0x20] sm:$0xff]
    %v2820 = vld [vmem:[#allocation2 + $0x28] sm:$0xff]
    %v2821 = vld [vmem:[#allocation2 + $0x30] sm:$0xff]
    %v2822 = vld [vmem:[#allocation2 + $0x38] sm:$0xff]
    %v2823 = vld [vmem:[#allocation2 + $0x40] sm:$0xff]
    %v2824 = vld [vmem:[#allocation2 + $0x48] sm:$0xff]
    %v2825 = vld [vmem:[#allocation2 + $0x50] sm:$0xff]
    %v2826 = vld [vmem:[#allocation2 + $0x58] sm:$0xff]
    %v2827 = vld [vmem:[#allocation2 + $0x60] sm:$0xff]
    %v2828 = vld [vmem:[#allocation2 + $0x68] sm:$0xff]
    %v2829 = vld [vmem:[#allocation2 + $0x70] sm:$0xff]
    %v2830 = vld [vmem:[#allocation2 + $0x78] sm:$0xff]
    %v2831 = vsel %vm151, %v2815, 0.0
    %2832 = vadd.xlane.f32.xlu0 %v2831
    %v2833 = vpop.xlane.xlu0 %2832
    %v2834 = vsel %vm151, %v2816, 0.0
    %2835 = vadd.xlane.f32.xlu0 %v2834
    %v2836 = vpop.xlane.xlu0 %2835
    %v2837 = vsel %vm151, %v2817, 0.0
    %2838 = vadd.xlane.f32.xlu0 %v2837
    %v2839 = vpop.xlane.xlu0 %2838
    %v2840 = vsel %vm151, %v2818, 0.0
    %2841 = vadd.xlane.f32.xlu0 %v2840
    %v2842 = vpop.xlane.xlu0 %2841
    %v2843 = vsel %vm151, %v2819, 0.0
    %2844 = vadd.xlane.f32.xlu0 %v2843
    %v2845 = vpop.xlane.xlu0 %2844
    %v2846 = vsel %vm151, %v2820, 0.0
    %2847 = vadd.xlane.f32.xlu0 %v2846
    %v2848 = vpop.xlane.xlu0 %2847
    %v2849 = vsel %vm151, %v2821, 0.0
    %2850 = vadd.xlane.f32.xlu0 %v2849
    %v2851 = vpop.xlane.xlu0 %2850
    %v2852 = vsel %vm151, %v2822, 0.0
    %2853 = vadd.xlane.f32.xlu0 %v2852
    %v2854 = vpop.xlane.xlu0 %2853
    %v2855 = vsel %vm151, %v2823, 0.0
    %2856 = vadd.xlane.f32.xlu0 %v2855
    %v2857 = vpop.xlane.xlu0 %2856
    %v2858 = vsel %vm151, %v2824, 0.0
    %2859 = vadd.xlane.f32.xlu0 %v2858
    %v2860 = vpop.xlane.xlu0 %2859
    %v2861 = vsel %vm151, %v2825, 0.0
    %2862 = vadd.xlane.f32.xlu0 %v2861
    %v2863 = vpop.xlane.xlu0 %2862
    %v2864 = vsel %vm151, %v2826, 0.0
    %2865 = vadd.xlane.f32.xlu0 %v2864
    %v2866 = vpop.xlane.xlu0 %2865
    %v2867 = vsel %vm151, %v2827, 0.0
    %2868 = vadd.xlane.f32.xlu0 %v2867
    %v2869 = vpop.xlane.xlu0 %2868
    %v2870 = vsel %vm151, %v2828, 0.0
    %2871 = vadd.xlane.f32.xlu0 %v2870
    %v2872 = vpop.xlane.xlu0 %2871
    %v2873 = vsel %vm151, %v2829, 0.0
    %2874 = vadd.xlane.f32.xlu0 %v2873
    %v2875 = vpop.xlane.xlu0 %2874
    %v2876 = vsel %vm151, %v2830, 0.0
    %2877 = vadd.xlane.f32.xlu0 %v2876
    %v2878 = vpop.xlane.xlu0 %2877
    %v2879 = vmul.f32 %v2833, 0.125
    %v2880 = vmul.f32 %v2836, 0.125
    %v2881 = vmul.f32 %v2839, 0.125
    %v2882 = vmul.f32 %v2842, 0.125
    %v2883 = vmul.f32 %v2845, 0.125
    %v2884 = vmul.f32 %v2848, 0.125
    %v2885 = vmul.f32 %v2851, 0.125
    %v2886 = vmul.f32 %v2854, 0.125
    %v2887 = vmul.f32 %v2857, 0.125
    %v2888 = vmul.f32 %v2860, 0.125
    %v2889 = vmul.f32 %v2863, 0.125
    %v2890 = vmul.f32 %v2866, 0.125
    %v2891 = vmul.f32 %v2869, 0.125
    %v2892 = vmul.f32 %v2872, 0.125
    %v2893 = vmul.f32 %v2875, 0.125
    %v2894 = vmul.f32 %v2878, 0.125
    %v2895 = vsub.f32 %v2815, %v2879
    %v2896 = vsub.f32 %v2816, %v2880
    %v2897 = vsub.f32 %v2817, %v2881
    %v2898 = vsub.f32 %v2818, %v2882
    %v2899 = vsub.f32 %v2819, %v2883
    %v2900 = vsub.f32 %v2820, %v2884
    %v2901 = vsub.f32 %v2821, %v2885
    %v2902 = vsub.f32 %v2822, %v2886
    %v2903 = vsub.f32 %v2823, %v2887
    %v2904 = vsub.f32 %v2824, %v2888
    %v2905 = vsub.f32 %v2825, %v2889
    %v2906 = vsub.f32 %v2826, %v2890
    %v2907 = vsub.f32 %v2827, %v2891
    %v2908 = vsub.f32 %v2828, %v2892
    %v2909 = vsub.f32 %v2829, %v2893
    %v2910 = vsub.f32 %v2830, %v2894
    %v2911 = vmul.f32 %v2895, %v2895
    %v2912 = vmul.f32 %v2896, %v2896
    %v2913 = vmul.f32 %v2897, %v2897
    %v2914 = vmul.f32 %v2898, %v2898
    %v2915 = vmul.f32 %v2899, %v2899
    %v2916 = vmul.f32 %v2900, %v2900
    %v2917 = vmul.f32 %v2901, %v2901
    %v2918 = vmul.f32 %v2902, %v2902
    %v2919 = vmul.f32 %v2903, %v2903
    %v2920 = vmul.f32 %v2904, %v2904
    %v2921 = vmul.f32 %v2905, %v2905
    %v2922 = vmul.f32 %v2906, %v2906
    %v2923 = vmul.f32 %v2907, %v2907
    %v2924 = vmul.f32 %v2908, %v2908
    %v2925 = vmul.f32 %v2909, %v2909
    %v2926 = vmul.f32 %v2910, %v2910
    %v2927 = vsel %vm151, %v2911, 0.0
    %2928 = vadd.xlane.f32.xlu0 %v2927
    %v2929 = vpop.xlane.xlu0 %2928
    %v2930 = vsel %vm151, %v2912, 0.0
    %2931 = vadd.xlane.f32.xlu0 %v2930
    %v2932 = vpop.xlane.xlu0 %2931
    %v2933 = vsel %vm151, %v2913, 0.0
    %2934 = vadd.xlane.f32.xlu0 %v2933
    %v2935 = vpop.xlane.xlu0 %2934
    %v2936 = vsel %vm151, %v2914, 0.0
    %2937 = vadd.xlane.f32.xlu0 %v2936
    %v2938 = vpop.xlane.xlu0 %2937
    %v2939 = vsel %vm151, %v2915, 0.0
    %2940 = vadd.xlane.f32.xlu0 %v2939
    %v2941 = vpop.xlane.xlu0 %2940
    %v2942 = vsel %vm151, %v2916, 0.0
    %2943 = vadd.xlane.f32.xlu0 %v2942
    %v2944 = vpop.xlane.xlu0 %2943
    %v2945 = vsel %vm151, %v2917, 0.0
    %2946 = vadd.xlane.f32.xlu0 %v2945
    %v2947 = vpop.xlane.xlu0 %2946
    %v2948 = vsel %vm151, %v2918, 0.0
    %2949 = vadd.xlane.f32.xlu0 %v2948
    %v2950 = vpop.xlane.xlu0 %2949
    %v2951 = vsel %vm151, %v2919, 0.0
    %2952 = vadd.xlane.f32.xlu0 %v2951
    %v2953 = vpop.xlane.xlu0 %2952
    %v2954 = vsel %vm151, %v2920, 0.0
    %2955 = vadd.xlane.f32.xlu0 %v2954
    %v2956 = vpop.xlane.xlu0 %2955
    %v2957 = vsel %vm151, %v2921, 0.0
    %2958 = vadd.xlane.f32.xlu0 %v2957
    %v2959 = vpop.xlane.xlu0 %2958
    %v2960 = vsel %vm151, %v2922, 0.0
    %2961 = vadd.xlane.f32.xlu0 %v2960
    %v2962 = vpop.xlane.xlu0 %2961
    %v2963 = vsel %vm151, %v2923, 0.0
    %2964 = vadd.xlane.f32.xlu0 %v2963
    %v2965 = vpop.xlane.xlu0 %2964
    %v2966 = vsel %vm151, %v2924, 0.0
    %2967 = vadd.xlane.f32.xlu0 %v2966
    %v2968 = vpop.xlane.xlu0 %2967
    %v2969 = vsel %vm151, %v2925, 0.0
    %2970 = vadd.xlane.f32.xlu0 %v2969
    %v2971 = vpop.xlane.xlu0 %2970
    %v2972 = vsel %vm151, %v2926, 0.0
    %2973 = vadd.xlane.f32.xlu0 %v2972
    %v2974 = vpop.xlane.xlu0 %2973
    %v2975 = vmul.f32 %v2929, 0.125
    %v2976 = vmul.f32 %v2932, 0.125
    %v2977 = vmul.f32 %v2935, 0.125
    %v2978 = vmul.f32 %v2938, 0.125
    %v2979 = vmul.f32 %v2941, 0.125
    %v2980 = vmul.f32 %v2944, 0.125
    %v2981 = vmul.f32 %v2947, 0.125
    %v2982 = vmul.f32 %v2950, 0.125
    %v2983 = vmul.f32 %v2953, 0.125
    %v2984 = vmul.f32 %v2956, 0.125
    %v2985 = vmul.f32 %v2959, 0.125
    %v2986 = vmul.f32 %v2962, 0.125
    %v2987 = vmul.f32 %v2965, 0.125
    %v2988 = vmul.f32 %v2968, 0.125
    %v2989 = vmul.f32 %v2971, 0.125
    %v2990 = vmul.f32 %v2974, 0.125
    %v2991 = vadd.f32 %v2975, 1e-05
    %v2992 = vadd.f32 %v2976, 1e-05
    %v2993 = vadd.f32 %v2977, 1e-05
    %v2994 = vadd.f32 %v2978, 1e-05
    %v2995 = vadd.f32 %v2979, 1e-05
    %v2996 = vadd.f32 %v2980, 1e-05
    %v2997 = vadd.f32 %v2981, 1e-05
    %v2998 = vadd.f32 %v2982, 1e-05
    %v2999 = vadd.f32 %v2983, 1e-05
    %v3000 = vadd.f32 %v2984, 1e-05
    %v3001 = vadd.f32 %v2985, 1e-05
    %v3002 = vadd.f32 %v2986, 1e-05
    %v3003 = vadd.f32 %v2987, 1e-05
    %v3004 = vadd.f32 %v2988, 1e-05
    %v3005 = vadd.f32 %v2989, 1e-05
    %v3006 = vadd.f32 %v2990, 1e-05
    %v3007 = vrsqrt.pop %v2991
    %v3008 = vrsqrt.pop %v2992
    %v3009 = vrsqrt.pop %v2993
    %v3010 = vrsqrt.pop %v2994
    %v3011 = vrsqrt.pop %v2995
    %v3012 = vrsqrt.pop %v2996
    %v3013 = vrsqrt.pop %v2997
    %v3014 = vrsqrt.pop %v2998
    %v3015 = vrsqrt.pop %v2999
    %v3016 = vrsqrt.pop %v3000
    %v3017 = vrsqrt.pop %v3001
    %v3018 = vrsqrt.pop %v3002
    %v3019 = vrsqrt.pop %v3003
    %v3020 = vrsqrt.pop %v3004
    %v3021 = vrsqrt.pop %v3005
    %v3022 = vrsqrt.pop %v3006
    %v3023 = vmul.f32 %v2799, %v3007
    %v3024 = vmul.f32 %v2800, %v3008
    %v3025 = vmul.f32 %v2801, %v3009
    %v3026 = vmul.f32 %v2802, %v3010
    %v3027 = vmul.f32 %v2803, %v3011
    %v3028 = vmul.f32 %v2804, %v3012
    %v3029 = vmul.f32 %v2805, %v3013
    %v3030 = vmul.f32 %v2806, %v3014
    %v3031 = vmul.f32 %v2807, %v3015
    %v3032 = vmul.f32 %v2808, %v3016
    %v3033 = vmul.f32 %v2809, %v3017
    %v3034 = vmul.f32 %v2810, %v3018
    %v3035 = vmul.f32 %v2811, %v3019
    %v3036 = vmul.f32 %v2812, %v3020
    %v3037 = vmul.f32 %v2813, %v3021
    %v3038 = vmul.f32 %v2814, %v3022
    %3040 = vset.pattern.permute.xlu0 5
    %3041 = vperm.xlu0 %3040, %v3023
    %v3042 = vpop.permute.xlu0 %3041
    %3045 = vset.pattern.permute.xlu0 5
    %3046 = vperm.xlu0 %3045, %v3024
    %v3047 = vpop.permute.xlu0 %3046
    %3050 = vset.pattern.permute.xlu0 5
    %3051 = vperm.xlu0 %3050, %v3025
    %v3052 = vpop.permute.xlu0 %3051
    %3055 = vset.pattern.permute.xlu0 5
    %3056 = vperm.xlu0 %3055, %v3026
    %v3057 = vpop.permute.xlu0 %3056
    %3060 = vset.pattern.permute.xlu0 5
    %3061 = vperm.xlu0 %3060, %v3027
    %v3062 = vpop.permute.xlu0 %3061
    %3065 = vset.pattern.permute.xlu0 5
    %3066 = vperm.xlu0 %3065, %v3028
    %v3067 = vpop.permute.xlu0 %3066
    %3070 = vset.pattern.permute.xlu0 5
    %3071 = vperm.xlu0 %3070, %v3029
    %v3072 = vpop.permute.xlu0 %3071
    %3075 = vset.pattern.permute.xlu0 5
    %3076 = vperm.xlu0 %3075, %v3030
    %v3077 = vpop.permute.xlu0 %3076
    %3080 = vset.pattern.permute.xlu0 5
    %3081 = vperm.xlu0 %3080, %v3031
    %v3082 = vpop.permute.xlu0 %3081
    %3085 = vset.pattern.permute.xlu0 5
    %3086 = vperm.xlu0 %3085, %v3032
    %v3087 = vpop.permute.xlu0 %3086
    %3090 = vset.pattern.permute.xlu0 5
    %3091 = vperm.xlu0 %3090, %v3033
    %v3092 = vpop.permute.xlu0 %3091
    %3095 = vset.pattern.permute.xlu0 5
    %3096 = vperm.xlu0 %3095, %v3034
    %v3097 = vpop.permute.xlu0 %3096
    %3100 = vset.pattern.permute.xlu0 5
    %3101 = vperm.xlu0 %3100, %v3035
    %v3102 = vpop.permute.xlu0 %3101
    %3105 = vset.pattern.permute.xlu0 5
    %3106 = vperm.xlu0 %3105, %v3036
    %v3107 = vpop.permute.xlu0 %3106
    %3110 = vset.pattern.permute.xlu0 5
    %3111 = vperm.xlu0 %3110, %v3037
    %v3112 = vpop.permute.xlu0 %3111
    %3115 = vset.pattern.permute.xlu0 5
    %3116 = vperm.xlu0 %3115, %v3038
    %v3117 = vpop.permute.xlu0 %3116
    %v3119 = vmul.f32 %v2895, %v3042
    %v3120 = vmul.f32 %v2896, %v3047
    %v3121 = vmul.f32 %v2897, %v3052
    %v3122 = vmul.f32 %v2898, %v3057
    %v3123 = vmul.f32 %v2899, %v3062
    %v3124 = vmul.f32 %v2900, %v3067
    %v3125 = vmul.f32 %v2901, %v3072
    %v3126 = vmul.f32 %v2902, %v3077
    %v3127 = vmul.f32 %v2903, %v3082
    %v3128 = vmul.f32 %v2904, %v3087
    %v3129 = vmul.f32 %v2905, %v3092
    %v3130 = vmul.f32 %v2906, %v3097
    %v3131 = vmul.f32 %v2907, %v3102
    %v3132 = vmul.f32 %v2908, %v3107
    %v3133 = vmul.f32 %v2909, %v3112
    %v3134 = vmul.f32 %v2910, %v3117
    %3136 = vset.pattern.permute.xlu0 10
    %3137 = vperm.xlu0 %3136, %v2799
    %v3138 = vpop.permute.xlu0 %3137
    %3141 = vset.pattern.permute.xlu0 10
    %3142 = vperm.xlu0 %3141, %v2800
    %v3143 = vpop.permute.xlu0 %3142
    %3146 = vset.pattern.permute.xlu0 10
    %3147 = vperm.xlu0 %3146, %v2801
    %v3148 = vpop.permute.xlu0 %3147
    %3151 = vset.pattern.permute.xlu0 10
    %3152 = vperm.xlu0 %3151, %v2802
    %v3153 = vpop.permute.xlu0 %3152
    %3156 = vset.pattern.permute.xlu0 10
    %3157 = vperm.xlu0 %3156, %v2803
    %v3158 = vpop.permute.xlu0 %3157
    %3161 = vset.pattern.permute.xlu0 10
    %3162 = vperm.xlu0 %3161, %v2804
    %v3163 = vpop.permute.xlu0 %3162
    %3166 = vset.pattern.permute.xlu0 10
    %3167 = vperm.xlu0 %3166, %v2805
    %v3168 = vpop.permute.xlu0 %3167
    %3171 = vset.pattern.permute.xlu0 10
    %3172 = vperm.xlu0 %3171, %v2806
    %v3173 = vpop.permute.xlu0 %3172
    %3176 = vset.pattern.permute.xlu0 10
    %3177 = vperm.xlu0 %3176, %v2807
    %v3178 = vpop.permute.xlu0 %3177
    %3181 = vset.pattern.permute.xlu0 10
    %3182 = vperm.xlu0 %3181, %v2808
    %v3183 = vpop.permute.xlu0 %3182
    %3186 = vset.pattern.permute.xlu0 10
    %3187 = vperm.xlu0 %3186, %v2809
    %v3188 = vpop.permute.xlu0 %3187
    %3191 = vset.pattern.permute.xlu0 10
    %3192 = vperm.xlu0 %3191, %v2810
    %v3193 = vpop.permute.xlu0 %3192
    %3196 = vset.pattern.permute.xlu0 10
    %3197 = vperm.xlu0 %3196, %v2811
    %v3198 = vpop.permute.xlu0 %3197
    %3201 = vset.pattern.permute.xlu0 10
    %3202 = vperm.xlu0 %3201, %v2812
    %v3203 = vpop.permute.xlu0 %3202
    %3206 = vset.pattern.permute.xlu0 10
    %3207 = vperm.xlu0 %3206, %v2813
    %v3208 = vpop.permute.xlu0 %3207
    %3211 = vset.pattern.permute.xlu0 10
    %3212 = vperm.xlu0 %3211, %v2814
    %v3213 = vpop.permute.xlu0 %3212
    %v3215 = vadd.f32 %v3119, %v3138
    %v3216 = vadd.f32 %v3120, %v3143
    %v3217 = vadd.f32 %v3121, %v3148
    %v3218 = vadd.f32 %v3122, %v3153
    %v3219 = vadd.f32 %v3123, %v3158
    %v3220 = vadd.f32 %v3124, %v3163
    %v3221 = vadd.f32 %v3125, %v3168
    %v3222 = vadd.f32 %v3126, %v3173
    %v3223 = vadd.f32 %v3127, %v3178
    %v3224 = vadd.f32 %v3128, %v3183
    %v3225 = vadd.f32 %v3129, %v3188
    %v3226 = vadd.f32 %v3130, %v3193
    %v3227 = vadd.f32 %v3131, %v3198
    %v3228 = vadd.f32 %v3132, %v3203
    %v3229 = vadd.f32 %v3133, %v3208
    %v3230 = vadd.f32 %v3134, %v3213
    %v3231 = vmax.f32 %v3215, 0.0
    %v3232 = vmax.f32 %v3216, 0.0
    %v3233 = vmax.f32 %v3217, 0.0
    %v3234 = vmax.f32 %v3218, 0.0
    %v3235 = vmax.f32 %v3219, 0.0
    %v3236 = vmax.f32 %v3220, 0.0
    %v3237 = vmax.f32 %v3221, 0.0
    %v3238 = vmax.f32 %v3222, 0.0
    %v3239 = vmax.f32 %v3223, 0.0
    %v3240 = vmax.f32 %v3224, 0.0
    %v3241 = vmax.f32 %v3225, 0.0
    %v3242 = vmax.f32 %v3226, 0.0
    %v3243 = vmax.f32 %v3227, 0.0
    %v3244 = vmax.f32 %v3228, 0.0
    %v3245 = vmax.f32 %v3229, 0.0
    %v3246 = vmax.f32 %v3230, 0.0
    %3247 = vst.msk [vmem:[#allocation2] sm:$0xff] %vm151, %v3231
    %3248 = vst.msk [vmem:[#allocation2 + $0x8] sm:$0xff] %vm151, %v3232
    %3249 = vst.msk [vmem:[#allocation2 + $0x10] sm:$0xff] %vm151, %v3233
    %3250 = vst.msk [vmem:[#allocation2 + $0x18] sm:$0xff] %vm151, %v3234
    %3251 = vst.msk [vmem:[#allocation2 + $0x20] sm:$0xff] %vm151, %v3235
    %3252 = vst.msk [vmem:[#allocation2 + $0x28] sm:$0xff] %vm151, %v3236
    %3253 = vst.msk [vmem:[#allocation2 + $0x30] sm:$0xff] %vm151, %v3237
    %3254 = vst.msk [vmem:[#allocation2 + $0x38] sm:$0xff] %vm151, %v3238
    %3255 = vst.msk [vmem:[#allocation2 + $0x40] sm:$0xff] %vm151, %v3239
    %3256 = vst.msk [vmem:[#allocation2 + $0x48] sm:$0xff] %vm151, %v3240
    %3257 = vst.msk [vmem:[#allocation2 + $0x50] sm:$0xff] %vm151, %v3241
    %3258 = vst.msk [vmem:[#allocation2 + $0x58] sm:$0xff] %vm151, %v3242
    %3259 = vst.msk [vmem:[#allocation2 + $0x60] sm:$0xff] %vm151, %v3243
    %3260 = vst.msk [vmem:[#allocation2 + $0x68] sm:$0xff] %vm151, %v3244
    %3261 = vst.msk [vmem:[#allocation2 + $0x70] sm:$0xff] %vm151, %v3245
    %3262 = vst.msk [vmem:[#allocation2 + $0x78] sm:$0xff] %vm151, %v3246
    %v3263 = vld [vmem:[%s3] sm:$0xff]
    %v3264 = vld [vmem:[#allocation2] sm:$0xff]
    %v3265 = vld [vmem:[#allocation2 + $0x8] sm:$0xff]
    %v3266 = vld [vmem:[#allocation2 + $0x10] sm:$0xff]
    %v3267 = vld [vmem:[#allocation2 + $0x18] sm:$0xff]
    %v3268 = vld [vmem:[#allocation2 + $0x20] sm:$0xff]
    %v3269 = vld [vmem:[#allocation2 + $0x28] sm:$0xff]
    %v3270 = vld [vmem:[#allocation2 + $0x30] sm:$0xff]
    %v3271 = vld [vmem:[#allocation2 + $0x38] sm:$0xff]
    %v3272 = vld [vmem:[#allocation2 + $0x40] sm:$0xff]
    %v3273 = vld [vmem:[#allocation2 + $0x48] sm:$0xff]
    %v3274 = vld [vmem:[#allocation2 + $0x50] sm:$0xff]
    %v3275 = vld [vmem:[#allocation2 + $0x58] sm:$0xff]
    %v3276 = vld [vmem:[#allocation2 + $0x60] sm:$0xff]
    %v3277 = vld [vmem:[#allocation2 + $0x68] sm:$0xff]
    %v3278 = vld [vmem:[#allocation2 + $0x70] sm:$0xff]
    %v3279 = vld [vmem:[#allocation2 + $0x78] sm:$0xff]
    %3280 = vmatprep.subr.mxu0 0.0
    %3281 = vmatpush1.msra.mxu0 %v3264
    %3282 = vmatprep.subr.mxu0 0.0
    %3283 = vmatpush1.msra.mxu0 %v3265
    %3284 = vmatprep.subr.mxu0 0.0
    %3285 = vmatpush1.msra.mxu0 %v3266
    %3286 = vmatprep.subr.mxu0 0.0
    %3287 = vmatpush1.msra.mxu0 %v3267
    %3288 = vmatprep.subr.mxu0 0.0
    %3289 = vmatpush1.msra.mxu0 %v3268
    %3290 = vmatprep.subr.mxu0 0.0
    %3291 = vmatpush1.msra.mxu0 %v3269
    %3292 = vmatprep.subr.mxu0 0.0
    %3293 = vmatpush1.msra.mxu0 %v3270
    %3294 = vmatprep.subr.mxu0 0.0
    %3295 = vmatpush1.msra.mxu0 %v3271
    %3296 = vmatprep.subr.mxu0 0.0
    %3297 = vmatpush1.msra.mxu0 %v3272
    %3298 = vmatprep.subr.mxu0 0.0
    %3299 = vmatpush1.msra.mxu0 %v3273
    %3300 = vmatprep.subr.mxu0 0.0
    %3301 = vmatpush1.msra.mxu0 %v3274
    %3302 = vmatprep.subr.mxu0 0.0
    %3303 = vmatpush1.msra.mxu0 %v3275
    %3304 = vmatprep.subr.mxu0 0.0
    %3305 = vmatpush1.msra.mxu0 %v3276
    %3306 = vmatprep.subr.mxu0 0.0
    %3307 = vmatpush1.msra.mxu0 %v3277
    %3308 = vmatprep.subr.mxu0 0.0
    %3309 = vmatpush1.msra.mxu0 %v3278
    %3310 = vmatprep.subr.mxu0 0.0
    %3311 = vmatpush1.msra.mxu0 %v3279
    %3312 = vmatprep.subr.mxu0 0.0
    %3313 = vmatpush1.msra.mxu0 0.0
    %3314 = vmatprep.subr.mxu0 0.0
    %3315 = vmatpush1.msra.mxu0 0.0
    %3316 = vmatprep.subr.mxu0 0.0
    %3317 = vmatpush1.msra.mxu0 0.0
    %3318 = vmatprep.subr.mxu0 0.0
    %3319 = vmatpush1.msra.mxu0 0.0
    %3320 = vmatprep.subr.mxu0 0.0
    %3321 = vmatpush1.msra.mxu0 0.0
    %3322 = vmatprep.subr.mxu0 0.0
    %3323 = vmatpush1.msra.mxu0 0.0
    %3324 = vmatprep.subr.mxu0 0.0
    %3325 = vmatpush1.msra.mxu0 0.0
    %3326 = vmatprep.subr.mxu0 0.0
    %3327 = vmatpush1.msra.mxu0 0.0
    %3328 = vmatprep.subr.mxu0 0.0
    %3329 = vmatpush1.msra.mxu0 0.0
    %3330 = vmatprep.subr.mxu0 0.0
    %3331 = vmatpush1.msra.mxu0 0.0
    %3332 = vmatprep.subr.mxu0 0.0
    %3333 = vmatpush1.msra.mxu0 0.0
    %3334 = vmatprep.subr.mxu0 0.0
    %3335 = vmatpush1.msra.mxu0 0.0
    %3336 = vmatprep.subr.mxu0 0.0
    %3337 = vmatpush1.msra.mxu0 0.0
    %3338 = vmatprep.subr.mxu0 0.0
    %3339 = vmatpush1.msra.mxu0 0.0
    %3340 = vmatprep.subr.mxu0 0.0
    %3341 = vmatpush1.msra.mxu0 0.0
    %3342 = vmatprep.subr.mxu0 0.0
    %3343 = vmatpush1.msra.mxu0 0.0
    %3344 = vmatprep.mubr.f32.mxu0 0.0
    %3345 = vmatmul.mubr.f32.gmra.mrb[0].mxu0 %v3263
    %v3346 = vpop.f32.mrb[0].mxu0
    %v3347 = vadd.f32 0.0, %v3346
    %v3348 = vpop.f32.mrb[0].mxu0
    %3349 = vdwg.mxu0
    %v3350 = vld [vmem:[%s2] sm:$0x1]
    %3352 = vset.pattern.permute.xlu0 11
    %3353 = vperm.xlu0 %3352, %v3350
    %v3354 = vpop.permute.xlu0 %3353
    %v3356 = vadd.f32 %v3347, %v3354
    %vm3357 = vcmask 57344
    %3358 = vst.msk [vmem:[#allocation7] sm:$0x1] %vm3357, %v3356
    // Predicated region
    $region22: #{tpu_custom_call.1} parent=1 // pred_check
      _
    $region23: #{tpu_custom_call.1} parent=1 // pred_check_branch
      %3360 = sbr.rel (0) target = $region25
    $region24: #{tpu_custom_call.1} parent=1 // pred_region
      %s3362 = ssub.s32 16, 16
      %3363 = vsyncadd [#allocation6], %s3362
      %s3365 = sshll.u32 [#allocation7], 4
      %s3366 = int_to_ptr.vmem [resolvable:$true] %s3365
      %3368 = dma.vmem_to_hbm [thread:$0]  %s3366, 16, %s4, [#allocation6]
    $region25: #{tpu_custom_call.1} parent=1 // pred_fallthru
      _
    // Predicated region
    $region26: #{tpu_custom_call.1} parent=1 // pred_check
      _
    $region27: #{tpu_custom_call.1} parent=1 // pred_check_branch
      %3370 = sbr.rel (0) target = $region29
    $region28: #{tpu_custom_call.1} parent=1 // pred_region
      %3371 = dma.done [#allocation6], 16
    $region29: #{tpu_custom_call.1} parent=1 // pred_fallthru
      _
    %3372 = vsyncpa [#allocation5], 1
    %3373 = vsyncpa [#allocation6], 1

</llo_original>
